<compile_context>
chip_gen: v6e
topology: v6e:2x2x1
jax: 0.10.0
libtpu: 0.0.40
codegen_flags: <defaults>
</compile_context>

<pallas_src>
import jax
import jax.numpy as jnp
from jax.experimental import pallas as pl
from jax.experimental.pallas import tpu as pltpu


# ----------------------------- Pallas kernels ------------------------------

def _conv_pool_kernel(a_ref, w_ref, b_ref, o_ref):
    """Fused conv (im2col matmul) + bias + ReLU + 2x2/stride-2 max-pool.

    a_ref is (4, rows, K): the patch rows for the four corners (py, px) of the
    pooling window, stacked along the leading dim.  Rows of the four slices
    align with the same pooled output row, so pooling is an elementwise max of
    the four matmul results:
        relu(max_i(a_i @ W) + b) == max_i(relu(a_i @ W + b))
    (shared bias, ReLU monotone), matching PyTorch's relu-then-pool semantics.
    """
    w = w_ref[...]
    acc = jnp.dot(a_ref[0], w, preferred_element_type=jnp.float32)
    acc = jnp.maximum(acc, jnp.dot(a_ref[1], w, preferred_element_type=jnp.float32))
    acc = jnp.maximum(acc, jnp.dot(a_ref[2], w, preferred_element_type=jnp.float32))
    acc = jnp.maximum(acc, jnp.dot(a_ref[3], w, preferred_element_type=jnp.float32))
    acc = jnp.maximum(acc + b_ref[...], 0.0)
    # N = 64 (< 128 lanes) -> masked store; the corner-input DMA (not the
    # store slot) is the binding resource for this kernel, so we leave it.
    o_ref[...] = acc.astype(o_ref.dtype)


def conv_relu_pool_matmul(corners, w_mat, bias_row, *, rows_per_block,
                          out_dtype=jnp.bfloat16):
    """corners: (4, M, K) bf16 stacked corner patch matrices; w_mat (K, N)
    bf16; bias_row (1, N) f32.  Returns (M, N) pooled activations."""
    _, M, K = corners.shape
    N = w_mat.shape[1]
    assert M % rows_per_block == 0
    return pl.pallas_call(
        _conv_pool_kernel,
        out_shape=jax.ShapeDtypeStruct((M, N), out_dtype),
        grid=(M // rows_per_block,),
        in_specs=[pl.BlockSpec((4, rows_per_block, K), lambda b: (0, b, 0)),
                  pl.BlockSpec((K, N), lambda b: (0, 0)),   # resident weights
                  pl.BlockSpec((1, N), lambda b: (0, 0))],  # resident bias
        out_specs=pl.BlockSpec((rows_per_block, N), lambda b: (b, 0)),
        compiler_params=pltpu.CompilerParams(
            dimension_semantics=("parallel",)),
    )(corners, w_mat, bias_row)


def _fc_chain_kernel(x_ref, w1_ref, b1_ref, w2_ref, b2_ref, w3_ref, b3_ref,
                     o_ref):
    """Fused fc1+ReLU -> fc2+ReLU -> fc5 on a (tm, K) tile of the batch."""
    h = jnp.dot(x_ref[...], w1_ref[...], preferred_element_type=jnp.float32)
    h = jnp.maximum(h + b1_ref[...], 0.0)
    h = jnp.dot(h.astype(jnp.bfloat16), w2_ref[...],
                preferred_element_type=jnp.float32)
    h = jnp.maximum(h + b2_ref[...], 0.0)
    h = jnp.dot(h.astype(jnp.bfloat16), w3_ref[...],
                preferred_element_type=jnp.float32)
    o_ref[...] = (h + b3_ref[...]).astype(o_ref.dtype)


def _pick_m_tile(m):
    """Fixed power-of-two tiles; the caller zero-pads M up to a tile multiple,
    so ragged / prime batch sizes never yield a giant single block or a tm=8
    grid."""
    for cand in (512, 256, 128, 64, 32, 16, 8):
        if m >= cand:
            return cand
    return 8


def fc_chain(x, w1, b1, w2, b2, w3, b3):
    """x: (M, K1) bf16; weights bf16, biases f32 (1, N).  Returns (M, N3) f32."""
    M, K1 = x.shape
    N1, N2, N3 = w1.shape[1], w2.shape[1], w3.shape[1]
    tm = _pick_m_tile(M)
    m_pad = pl.cdiv(M, tm) * tm
    if m_pad != M:
        x = jnp.pad(x, ((0, m_pad - M), (0, 0)))   # zero rows -> sliced off
    out = pl.pallas_call(
        _fc_chain_kernel,
        out_shape=jax.ShapeDtypeStruct((m_pad, N3), jnp.float32),
        grid=(m_pad // tm,),
        in_specs=[pl.BlockSpec((tm, K1), lambda i: (i, 0)),
                  pl.BlockSpec((K1, N1), lambda i: (0, 0)),
                  pl.BlockSpec((1, N1), lambda i: (0, 0)),
                  pl.BlockSpec((N1, N2), lambda i: (0, 0)),
                  pl.BlockSpec((1, N2), lambda i: (0, 0)),
                  pl.BlockSpec((N2, N3), lambda i: (0, 0)),
                  pl.BlockSpec((1, N3), lambda i: (0, 0))],
        out_specs=pl.BlockSpec((tm, N3), lambda i: (i, 0)),
        compiler_params=pltpu.CompilerParams(
            dimension_semantics=("parallel",)),
    )(x, w1, b1, w2, b2, w3, b3)
    return out[:M]


# ------------------------------ model glue ---------------------------------

def _pick_imgs_per_block(batch, cap):
    """Images per conv grid step: as many as the VMEM budget (cap) allows, but
    keep >= 2 grid steps when batch > 1 so v7x's two TensorCores both get work
    from the "parallel" grid axis."""
    imgs = min(cap, batch)
    if imgs == batch and batch > 1:
        imgs = -(-batch // 2)
    return max(imgs, 1)


def _corner_patches_stacked(x_nhwc, ksize, pool, k_pad_to):
    """Build the 4 corner im2col matrices stacked into one (4, rows, K) array.
    Rows ordered (b, ph, pw); features ordered (kh, kw, c) to match the
    pre-laid-out weight matrix; K zero-padded up to k_pad_to."""
    B, H, W, C = x_nhwc.shape
    OH, OW = H - ksize + 1, W - ksize + 1
    POH, POW = OH // pool, OW // pool
    x = x_nhwc.astype(jnp.bfloat16)
    corners = []
    for py in range(pool):
        for px in range(pool):
            pieces = []
            for kh in range(ksize):
                for kw in range(ksize):
                    h0, w0 = py + kh, px + kw
                    pieces.append(jax.lax.slice(
                        x, (0, h0, w0, 0),
                        (B, h0 + pool * (POH - 1) + 1,
                         w0 + pool * (POW - 1) + 1, C),
                        (1, pool, pool, 1)))            # (B, POH, POW, C)
            pat = jnp.stack(pieces, axis=3)             # (B, POH, POW, k*k, C)
            corners.append(pat.reshape(B * POH * POW, ksize * ksize * C))
    stacked = jnp.stack(corners, axis=0)                # (4, rows, K)
    K = ksize * ksize * C
    if K < k_pad_to:
        stacked = jnp.pad(stacked, ((0, 0), (0, 0), (0, k_pad_to - K)))
    return stacked, (POH, POW)


def conv_relu_pool_nhwc(x_nhwc, w_mat, bias_row, ksize, *, imgs_cap):
    # TODO(synk): im2col expansion is still XLA glue (HBM read amplification);
    # in-kernel shifted-read accumulation over the 25 offsets would remove it.
    B = x_nhwc.shape[0]
    stacked, (POH, POW) = _corner_patches_stacked(x_nhwc, ksize, 2,
                                                  k_pad_to=w_mat.shape[0])
    rows_per_image = POH * POW
    imgs = _pick_imgs_per_block(B, imgs_cap)
    b_pad = pl.cdiv(B, imgs) * imgs
    if b_pad != B:   # ragged batch -> zero-pad rows, sliced off below
        stacked = jnp.pad(
            stacked, ((0, 0), (0, (b_pad - B) * rows_per_image), (0, 0)))
    out = conv_relu_pool_matmul(stacked, w_mat, bias_row,
                                rows_per_block=imgs * rows_per_image)
    out = out[:B * rows_per_image]
    return out.reshape(B, POH, POW, w_mat.shape[1])


def init_params(key):
    """Parameters in PyTorch layout (same shapes as Model_0)."""
    ks = jax.random.split(key, 10)

    def _w(k, shape, fan_in):
        return (jax.random.normal(k, shape, jnp.float32)
                / jnp.sqrt(fan_in)).astype(jnp.float32)

    return {
        "conv1_w": _w(ks[0], (50, 1, 5, 5), 25),
        "conv1_b": _w(ks[1], (50,), 25),
        "conv2_w": _w(ks[2], (50, 50, 5, 5), 1250),
        "conv2_b": _w(ks[3], (50,), 1250),
        "fc1_w": _w(ks[4], (128, 800), 800),   # PyTorch (out, in)
        "fc1_b": _w(ks[5], (128,), 800),
        "fc2_w": _w(ks[6], (10, 128), 128),
        "fc2_b": _w(ks[7], (10,), 128),
        "fc5_w": _w(ks[8], (10, 10), 10),
        "fc5_b": _w(ks[9], (10,), 10),
    }


def prepare_params(p):
    """One-time weight re-layout: fold the transposes, zero-pad to lane-dense
    widths (conv channels 50->64, fc cols 10->128, conv1 K 25->32), and permute
    fc1's input rows so it directly consumes the NHWC (h, w, c_padded) flatten
    order."""
    bf16, f32 = jnp.bfloat16, jnp.float32

    # conv1: (50,1,5,5) -> (32, 64): K padded 25->32 (clean sublane packing),
    # output channels zero-padded 50->64.
    w1 = jnp.transpose(p["conv1_w"], (2, 3, 1, 0)).reshape(25, 50)
    w1 = jnp.pad(w1, ((0, 7), (0, 14)))
    b1 = jnp.pad(p["conv1_b"], (0, 14)).reshape(1, 64)

    # conv2: (50,50,5,5) -> (5*5*64, 64), in+out channels zero-padded.
    w2 = jnp.transpose(p["conv2_w"], (2, 3, 1, 0))            # (5,5,50,50)
    w2 = jnp.pad(w2, ((0, 0), (0, 0), (0, 14), (0, 14)))      # (5,5,64,64)
    w2 = w2.reshape(5 * 5 * 64, 64)
    b2 = jnp.pad(p["conv2_b"], (0, 14)).reshape(1, 64)

    # fc1: PyTorch consumes f = c*16 + h*4 + w; we produce g = (h*4+w)*64 + c.
    wf1 = p["fc1_w"].T.reshape(50, 16, 128)                   # (c, hw, out)
    wf1 = jnp.transpose(wf1, (1, 0, 2))                       # (hw, c, out)
    wf1 = jnp.pad(wf1, ((0, 0), (0, 14), (0, 0))).reshape(1024, 128)
    bf1 = p["fc1_b"].reshape(1, 128)

    # fc2: (10,128) -> (128,128) lane-dense output (zero-padded cols).
    wf2 = jnp.pad(p["fc2_w"].T, ((0, 0), (0, 118)))
    bf2 = jnp.pad(p["fc2_b"], (0, 118)).reshape(1, 128)

    # fc5: (10,10) -> (128,128); zero rows kill padded fc2 cols, real logits
    # live in the first 10 output columns.
    wf5 = jnp.pad(p["fc5_w"].T, ((0, 118), (0, 118)))
    bf5 = jnp.pad(p["fc5_b"], (0, 118)).reshape(1, 128)

    return {
        "conv1_w": w1.astype(bf16), "conv1_b": b1.astype(f32),
        "conv2_w": w2.astype(bf16), "conv2_b": b2.astype(f32),
        "fc1_w": wf1.astype(bf16), "fc1_b": bf1.astype(f32),
        "fc2_w": wf2.astype(bf16), "fc2_b": bf2.astype(f32),
        "fc5_w": wf5.astype(bf16), "fc5_b": bf5.astype(f32),
    }


@jax.jit
def model_forward(x_nchw, pp):
    B = x_nchw.shape[0]
    # NCHW -> NHWC (C == 1 so this is a free relabel) + bf16 activations.
    x = jnp.transpose(x_nchw, (0, 2, 3, 1)).astype(jnp.bfloat16)

    # VMEM budget per conv grid step (double-buffered corners + weights + out):
    #   conv1 @ 32 imgs: ~3.6 MiB;  conv2 @ 16 imgs: ~7.1 MiB
    # -> fits the 16 MiB v5e scoped default (32 MiB v6e/v7x) with headroom.
    x = conv_relu_pool_nhwc(x, pp["conv1_w"], pp["conv1_b"], 5,
                            imgs_cap=32)                     # (B,12,12,64)
    x = conv_relu_pool_nhwc(x, pp["conv2_w"], pp["conv2_b"], 5,
                            imgs_cap=16)                     # (B, 4, 4,64)

    # Flatten in (h, w, c_padded) order -- contiguous reshape, free; fc1's
    # weight rows were permuted/padded at prep time to consume this order.
    x = x.reshape(B, 4 * 4 * 64)                             # (B, 1024)

    logits_padded = fc_chain(x, pp["fc1_w"], pp["fc1_b"],
                             pp["fc2_w"], pp["fc2_b"],
                             pp["fc5_w"], pp["fc5_b"])       # (B, 128)
    return logits_padded[:, :10]


if __name__ == "__main__":
    key = jax.random.PRNGKey(0)
    k_x, k_p = jax.random.split(key)

    # fc1 expects 800 = 50*4*4 features, which forces 28x28 single-channel input.
    x = jax.random.normal(k_x, (2, 1, 28, 28), jnp.float32)
    params = init_params(k_p)
    packed = prepare_params(params)   # one-time weight re-layout (not per step)

    out = model_forward(x, packed)
    out = jax.block_until_ready(out)
    assert out.shape == (2, 10), out.shape
    print("KERNEL_OK")
</pallas_src>

<mosaic_0001>
module attributes {stable_mosaic.version = 11 : i64} {
  func.func @_conv_pool_kernel(%arg0: i32, %arg1: memref<4x144x32xbf16, #tpu.memory_space<vmem>>, %arg2: memref<32x64xbf16, #tpu.memory_space<vmem>>, %arg3: memref<1x64xf32, #tpu.memory_space<vmem>>, %arg4: memref<144x64xbf16, #tpu.memory_space<vmem>>) attributes {dimension_semantics = [#tpu.dimension_semantics<parallel>], iteration_bounds = array<i64: 2>, scalar_prefetch = 0 : i64, scratch_operands = 0 : i64, tpu.core_type = #tpu.core_type<tc>, window_params = [{transform_indices = @transform_0, window_bounds = array<i64: 4, 144, 32>}, {pipeline_mode = #tpu.pipeline_mode<synchronous>, transform_indices = @transform_1, window_bounds = array<i64: 32, 64>}, {pipeline_mode = #tpu.pipeline_mode<synchronous>, transform_indices = @transform_2, window_bounds = array<i64: 1, 64>}, {transform_indices = @transform_3, window_bounds = array<i64: 144, 64>}]} {
    %c0 = arith.constant 0 : index
    %c0_0 = arith.constant 0 : index
    %0 = vector.load %arg2[%c0, %c0_0] : memref<32x64xbf16, #tpu.memory_space<vmem>>, vector<32x64xbf16>
    %c0_1 = arith.constant 0 : index
    %c0_2 = arith.constant 0 : index
    %c0_3 = arith.constant 0 : index
    %1 = vector.load %arg1[%c0_1, %c0_2, %c0_3] : memref<4x144x32xbf16, #tpu.memory_space<vmem>>, vector<1x144x32xbf16>
    %2 = vector.shape_cast %1 : vector<1x144x32xbf16> to vector<144x32xbf16>
    %cst = arith.constant dense<0.000000e+00> : vector<144x64xf32>
    %3 = tpu.matmul %2, %0, %cst {dimension_numbers = #tpu.dot_dimension_numbers<[1], [0], [0], [1], [0, 0, 1, 1], [], []>} : vector<144x32xbf16>, vector<32x64xbf16>, vector<144x64xf32> -> vector<144x64xf32>
    %c1 = arith.constant 1 : index
    %c0_4 = arith.constant 0 : index
    %c0_5 = arith.constant 0 : index
    %4 = vector.load %arg1[%c1, %c0_4, %c0_5] : memref<4x144x32xbf16, #tpu.memory_space<vmem>>, vector<1x144x32xbf16>
    %5 = vector.shape_cast %4 : vector<1x144x32xbf16> to vector<144x32xbf16>
    %cst_6 = arith.constant dense<0.000000e+00> : vector<144x64xf32>
    %6 = tpu.matmul %5, %0, %cst_6 {dimension_numbers = #tpu.dot_dimension_numbers<[1], [0], [0], [1], [0, 0, 1, 1], [], []>} : vector<144x32xbf16>, vector<32x64xbf16>, vector<144x64xf32> -> vector<144x64xf32>
    %7 = arith.maximumf %3, %6 : vector<144x64xf32>
    %c2 = arith.constant 2 : index
    %c0_7 = arith.constant 0 : index
    %c0_8 = arith.constant 0 : index
    %8 = vector.load %arg1[%c2, %c0_7, %c0_8] : memref<4x144x32xbf16, #tpu.memory_space<vmem>>, vector<1x144x32xbf16>
    %9 = vector.shape_cast %8 : vector<1x144x32xbf16> to vector<144x32xbf16>
    %cst_9 = arith.constant dense<0.000000e+00> : vector<144x64xf32>
    %10 = tpu.matmul %9, %0, %cst_9 {dimension_numbers = #tpu.dot_dimension_numbers<[1], [0], [0], [1], [0, 0, 1, 1], [], []>} : vector<144x32xbf16>, vector<32x64xbf16>, vector<144x64xf32> -> vector<144x64xf32>
    %11 = arith.maximumf %7, %10 : vector<144x64xf32>
    %c3 = arith.constant 3 : index
    %c0_10 = arith.constant 0 : index
    %c0_11 = arith.constant 0 : index
    %12 = vector.load %arg1[%c3, %c0_10, %c0_11] : memref<4x144x32xbf16, #tpu.memory_space<vmem>>, vector<1x144x32xbf16>
    %13 = vector.shape_cast %12 : vector<1x144x32xbf16> to vector<144x32xbf16>
    %cst_12 = arith.constant dense<0.000000e+00> : vector<144x64xf32>
    %14 = tpu.matmul %13, %0, %cst_12 {dimension_numbers = #tpu.dot_dimension_numbers<[1], [0], [0], [1], [0, 0, 1, 1], [], []>} : vector<144x32xbf16>, vector<32x64xbf16>, vector<144x64xf32> -> vector<144x64xf32>
    %15 = arith.maximumf %11, %14 : vector<144x64xf32>
    %c0_13 = arith.constant 0 : index
    %c0_14 = arith.constant 0 : index
    %16 = vector.load %arg3[%c0_13, %c0_14] : memref<1x64xf32, #tpu.memory_space<vmem>>, vector<1x64xf32>
    %17 = vector.broadcast %16 : vector<1x64xf32> to vector<144x64xf32>
    %18 = arith.addf %15, %17 : vector<144x64xf32>
    %cst_15 = arith.constant 0.000000e+00 : f32
    %19 = vector.broadcast %cst_15 : f32 to vector<144x64xf32>
    %20 = arith.maximumf %18, %19 : vector<144x64xf32>
    %21 = arith.truncf %20 : vector<144x64xf32> to vector<144x64xbf16>
    %c0_16 = arith.constant 0 : index
    %c0_17 = arith.constant 0 : index
    %22 = vector.load %arg4[%c0_16, %c0_17] : memref<144x64xbf16, #tpu.memory_space<vmem>>, vector<144x64xbf16>
    tpu.vector_store %arg4[%c0_16, %c0_17], %21 {strides = array<i32>} : memref<144x64xbf16, #tpu.memory_space<vmem>>, vector<144x64xbf16>,
    return
  }
  func.func @transform_0(%arg0: i32) -> (i32, i32, i32) {
    %c0_i32 = arith.constant 0 : i32
    %c0_i32_0 = arith.constant 0 : i32
    %c0_i32_1 = arith.constant 0 : i32
    return %c0_i32, %arg0, %c0_i32_0 : i32, i32, i32
  }
  func.func @transform_1(%arg0: i32) -> (i32, i32) {
    %c0_i32 = arith.constant 0 : i32
    %c0_i32_0 = arith.constant 0 : i32
    %c0_i32_1 = arith.constant 0 : i32
    return %c0_i32, %c0_i32_0 : i32, i32
  }
  func.func @transform_2(%arg0: i32) -> (i32, i32) {
    %c0_i32 = arith.constant 0 : i32
    %c0_i32_0 = arith.constant 0 : i32
    %c0_i32_1 = arith.constant 0 : i32
    return %c0_i32, %c0_i32_0 : i32, i32
  }
  func.func @transform_3(%arg0: i32) -> (i32, i32) {
    %c0_i32 = arith.constant 0 : i32
    %c0_i32_0 = arith.constant 0 : i32
    return %arg0, %c0_i32 : i32, i32
  }
}

module attributes {stable_mosaic.version = 11 : i64} {
  func.func @_conv_pool_kernel(%arg0: i32, %arg1: memref<4x16x1600xbf16, #tpu.memory_space<vmem>>, %arg2: memref<1600x64xbf16, #tpu.memory_space<vmem>>, %arg3: memref<1x64xf32, #tpu.memory_space<vmem>>, %arg4: memref<16x64xbf16, #tpu.memory_space<vmem>>) attributes {dimension_semantics = [#tpu.dimension_semantics<parallel>], iteration_bounds = array<i64: 2>, scalar_prefetch = 0 : i64, scratch_operands = 0 : i64, tpu.core_type = #tpu.core_type<tc>, window_params = [{transform_indices = @transform_0, window_bounds = array<i64: 4, 16, 1600>}, {pipeline_mode = #tpu.pipeline_mode<synchronous>, transform_indices = @transform_1, window_bounds = array<i64: 1600, 64>}, {pipeline_mode = #tpu.pipeline_mode<synchronous>, transform_indices = @transform_2, window_bounds = array<i64: 1, 64>}, {transform_indices = @transform_3, window_bounds = array<i64: 16, 64>}]} {
    %c0 = arith.constant 0 : index
    %c0_0 = arith.constant 0 : index
    %0 = vector.load %arg2[%c0, %c0_0] : memref<1600x64xbf16, #tpu.memory_space<vmem>>, vector<1600x64xbf16>
    %c0_1 = arith.constant 0 : index
    %c0_2 = arith.constant 0 : index
    %c0_3 = arith.constant 0 : index
    %1 = vector.load %arg1[%c0_1, %c0_2, %c0_3] : memref<4x16x1600xbf16, #tpu.memory_space<vmem>>, vector<1x16x1600xbf16>
    %2 = vector.shape_cast %1 : vector<1x16x1600xbf16> to vector<16x1600xbf16>
    %cst = arith.constant dense<0.000000e+00> : vector<16x64xf32>
    %3 = tpu.matmul %2, %0, %cst {dimension_numbers = #tpu.dot_dimension_numbers<[1], [0], [0], [1], [0, 0, 1, 1], [], []>} : vector<16x1600xbf16>, vector<1600x64xbf16>, vector<16x64xf32> -> vector<16x64xf32>
    %c1 = arith.constant 1 : index
    %c0_4 = arith.constant 0 : index
    %c0_5 = arith.constant 0 : index
    %4 = vector.load %arg1[%c1, %c0_4, %c0_5] : memref<4x16x1600xbf16, #tpu.memory_space<vmem>>, vector<1x16x1600xbf16>
    %5 = vector.shape_cast %4 : vector<1x16x1600xbf16> to vector<16x1600xbf16>
    %cst_6 = arith.constant dense<0.000000e+00> : vector<16x64xf32>
    %6 = tpu.matmul %5, %0, %cst_6 {dimension_numbers = #tpu.dot_dimension_numbers<[1], [0], [0], [1], [0, 0, 1, 1], [], []>} : vector<16x1600xbf16>, vector<1600x64xbf16>, vector<16x64xf32> -> vector<16x64xf32>
    %7 = arith.maximumf %3, %6 : vector<16x64xf32>
    %c2 = arith.constant 2 : index
    %c0_7 = arith.constant 0 : index
    %c0_8 = arith.constant 0 : index
    %8 = vector.load %arg1[%c2, %c0_7, %c0_8] : memref<4x16x1600xbf16, #tpu.memory_space<vmem>>, vector<1x16x1600xbf16>
    %9 = vector.shape_cast %8 : vector<1x16x1600xbf16> to vector<16x1600xbf16>
    %cst_9 = arith.constant dense<0.000000e+00> : vector<16x64xf32>
    %10 = tpu.matmul %9, %0, %cst_9 {dimension_numbers = #tpu.dot_dimension_numbers<[1], [0], [0], [1], [0, 0, 1, 1], [], []>} : vector<16x1600xbf16>, vector<1600x64xbf16>, vector<16x64xf32> -> vector<16x64xf32>
    %11 = arith.maximumf %7, %10 : vector<16x64xf32>
    %c3 = arith.constant 3 : index
    %c0_10 = arith.constant 0 : index
    %c0_11 = arith.constant 0 : index
    %12 = vector.load %arg1[%c3, %c0_10, %c0_11] : memref<4x16x1600xbf16, #tpu.memory_space<vmem>>, vector<1x16x1600xbf16>
    %13 = vector.shape_cast %12 : vector<1x16x1600xbf16> to vector<16x1600xbf16>
    %cst_12 = arith.constant dense<0.000000e+00> : vector<16x64xf32>
    %14 = tpu.matmul %13, %0, %cst_12 {dimension_numbers = #tpu.dot_dimension_numbers<[1], [0], [0], [1], [0, 0, 1, 1], [], []>} : vector<16x1600xbf16>, vector<1600x64xbf16>, vector<16x64xf32> -> vector<16x64xf32>
    %15 = arith.maximumf %11, %14 : vector<16x64xf32>
    %c0_13 = arith.constant 0 : index
    %c0_14 = arith.constant 0 : index
    %16 = vector.load %arg3[%c0_13, %c0_14] : memref<1x64xf32, #tpu.memory_space<vmem>>, vector<1x64xf32>
    %17 = vector.broadcast %16 : vector<1x64xf32> to vector<16x64xf32>
    %18 = arith.addf %15, %17 : vector<16x64xf32>
    %cst_15 = arith.constant 0.000000e+00 : f32
    %19 = vector.broadcast %cst_15 : f32 to vector<16x64xf32>
    %20 = arith.maximumf %18, %19 : vector<16x64xf32>
    %21 = arith.truncf %20 : vector<16x64xf32> to vector<16x64xbf16>
    %c0_16 = arith.constant 0 : index
    %c0_17 = arith.constant 0 : index
    %22 = vector.load %arg4[%c0_16, %c0_17] : memref<16x64xbf16, #tpu.memory_space<vmem>>, vector<16x64xbf16>
    tpu.vector_store %arg4[%c0_16, %c0_17], %21 {strides = array<i32>} : memref<16x64xbf16, #tpu.memory_space<vmem>>, vector<16x64xbf16>,
    return
  }
  func.func @transform_0(%arg0: i32) -> (i32, i32, i32) {
    %c0_i32 = arith.constant 0 : i32
    %c0_i32_0 = arith.constant 0 : i32
    %c0_i32_1 = arith.constant 0 : i32
    return %c0_i32, %arg0, %c0_i32_0 : i32, i32, i32
  }
  func.func @transform_1(%arg0: i32) -> (i32, i32) {
    %c0_i32 = arith.constant 0 : i32
    %c0_i32_0 = arith.constant 0 : i32
    %c0_i32_1 = arith.constant 0 : i32
    return %c0_i32, %c0_i32_0 : i32, i32
  }
  func.func @transform_2(%arg0: i32) -> (i32, i32) {
    %c0_i32 = arith.constant 0 : i32
    %c0_i32_0 = arith.constant 0 : i32
    %c0_i32_1 = arith.constant 0 : i32
    return %c0_i32, %c0_i32_0 : i32, i32
  }
  func.func @transform_3(%arg0: i32) -> (i32, i32) {
    %c0_i32 = arith.constant 0 : i32
    %c0_i32_0 = arith.constant 0 : i32
    return %arg0, %c0_i32 : i32, i32
  }
}

module attributes {stable_mosaic.version = 11 : i64} {
  func.func @_fc_chain_kernel(%arg0: i32, %arg1: memref<8x1024xbf16, #tpu.memory_space<vmem>>, %arg2: memref<1024x128xbf16, #tpu.memory_space<vmem>>, %arg3: memref<1x128xf32, #tpu.memory_space<vmem>>, %arg4: memref<128x128xbf16, #tpu.memory_space<vmem>>, %arg5: memref<1x128xf32, #tpu.memory_space<vmem>>, %arg6: memref<128x128xbf16, #tpu.memory_space<vmem>>, %arg7: memref<1x128xf32, #tpu.memory_space<vmem>>, %arg8: memref<8x128xf32, #tpu.memory_space<vmem>>) attributes {dimension_semantics = [#tpu.dimension_semantics<parallel>], iteration_bounds = array<i64: 1>, scalar_prefetch = 0 : i64, scratch_operands = 0 : i64, tpu.core_type = #tpu.core_type<tc>, window_params = [{transform_indices = @transform_0, window_bounds = array<i64: 8, 1024>}, {pipeline_mode = #tpu.pipeline_mode<synchronous>, transform_indices = @transform_1, window_bounds = array<i64: 1024, 128>}, {pipeline_mode = #tpu.pipeline_mode<synchronous>, transform_indices = @transform_2, window_bounds = array<i64: 1, 128>}, {pipeline_mode = #tpu.pipeline_mode<synchronous>, transform_indices = @transform_3, window_bounds = array<i64: 128, 128>}, {pipeline_mode = #tpu.pipeline_mode<synchronous>, transform_indices = @transform_4, window_bounds = array<i64: 1, 128>}, {pipeline_mode = #tpu.pipeline_mode<synchronous>, transform_indices = @transform_5, window_bounds = array<i64: 128, 128>}, {pipeline_mode = #tpu.pipeline_mode<synchronous>, transform_indices = @transform_6, window_bounds = array<i64: 1, 128>}, {transform_indices = @transform_7, window_bounds = array<i64: 8, 128>}]} {
    %c0 = arith.constant 0 : index
    %c0_0 = arith.constant 0 : index
    %0 = vector.load %arg1[%c0, %c0_0] : memref<8x1024xbf16, #tpu.memory_space<vmem>>, vector<8x1024xbf16>
    %c0_1 = arith.constant 0 : index
    %c0_2 = arith.constant 0 : index
    %1 = vector.load %arg2[%c0_1, %c0_2] : memref<1024x128xbf16, #tpu.memory_space<vmem>>, vector<1024x128xbf16>
    %cst = arith.constant dense<0.000000e+00> : vector<8x128xf32>
    %2 = tpu.matmul %0, %1, %cst {dimension_numbers = #tpu.dot_dimension_numbers<[1], [0], [0], [1], [0, 0, 1, 1], [], []>} : vector<8x1024xbf16>, vector<1024x128xbf16>, vector<8x128xf32> -> vector<8x128xf32>
    %c0_3 = arith.constant 0 : index
    %c0_4 = arith.constant 0 : index
    %3 = vector.load %arg3[%c0_3, %c0_4] : memref<1x128xf32, #tpu.memory_space<vmem>>, vector<1x128xf32>
    %4 = vector.broadcast %3 : vector<1x128xf32> to vector<8x128xf32>
    %5 = arith.addf %2, %4 : vector<8x128xf32>
    %cst_5 = arith.constant 0.000000e+00 : f32
    %6 = vector.broadcast %cst_5 : f32 to vector<8x128xf32>
    %7 = arith.maximumf %5, %6 : vector<8x128xf32>
    %8 = arith.truncf %7 : vector<8x128xf32> to vector<8x128xbf16>
    %c0_6 = arith.constant 0 : index
    %c0_7 = arith.constant 0 : index
    %9 = vector.load %arg4[%c0_6, %c0_7] : memref<128x128xbf16, #tpu.memory_space<vmem>>, vector<128x128xbf16>
    %cst_8 = arith.constant dense<0.000000e+00> : vector<8x128xf32>
    %10 = tpu.matmul %8, %9, %cst_8 {dimension_numbers = #tpu.dot_dimension_numbers<[1], [0], [0], [1], [0, 0, 1, 1], [], []>} : vector<8x128xbf16>, vector<128x128xbf16>, vector<8x128xf32> -> vector<8x128xf32>
    %c0_9 = arith.constant 0 : index
    %c0_10 = arith.constant 0 : index
    %11 = vector.load %arg5[%c0_9, %c0_10] : memref<1x128xf32, #tpu.memory_space<vmem>>, vector<1x128xf32>
    %12 = vector.broadcast %11 : vector<1x128xf32> to vector<8x128xf32>
    %13 = arith.addf %10, %12 : vector<8x128xf32>
    %cst_11 = arith.constant 0.000000e+00 : f32
    %14 = vector.broadcast %cst_11 : f32 to vector<8x128xf32>
    %15 = arith.maximumf %13, %14 : vector<8x128xf32>
    %16 = arith.truncf %15 : vector<8x128xf32> to vector<8x128xbf16>
    %c0_12 = arith.constant 0 : index
    %c0_13 = arith.constant 0 : index
    %17 = vector.load %arg6[%c0_12, %c0_13] : memref<128x128xbf16, #tpu.memory_space<vmem>>, vector<128x128xbf16>
    %cst_14 = arith.constant dense<0.000000e+00> : vector<8x128xf32>
    %18 = tpu.matmul %16, %17, %cst_14 {dimension_numbers = #tpu.dot_dimension_numbers<[1], [0], [0], [1], [0, 0, 1, 1], [], []>} : vector<8x128xbf16>, vector<128x128xbf16>, vector<8x128xf32> -> vector<8x128xf32>
    %c0_15 = arith.constant 0 : index
    %c0_16 = arith.constant 0 : index
    %19 = vector.load %arg7[%c0_15, %c0_16] : memref<1x128xf32, #tpu.memory_space<vmem>>, vector<1x128xf32>
    %20 = vector.broadcast %19 : vector<1x128xf32> to vector<8x128xf32>
    %21 = arith.addf %18, %20 : vector<8x128xf32>
    %c0_17 = arith.constant 0 : index
    %c0_18 = arith.constant 0 : index
    %22 = vector.load %arg8[%c0_17, %c0_18] : memref<8x128xf32, #tpu.memory_space<vmem>>, vector<8x128xf32>
    tpu.vector_store %arg8[%c0_17, %c0_18], %21 {strides = array<i32>} : memref<8x128xf32, #tpu.memory_space<vmem>>, vector<8x128xf32>,
    return
  }
  func.func @transform_0(%arg0: i32) -> (i32, i32) {
    %c0_i32 = arith.constant 0 : i32
    %c0_i32_0 = arith.constant 0 : i32
    return %arg0, %c0_i32 : i32, i32
  }
  func.func @transform_1(%arg0: i32) -> (i32, i32) {
    %c0_i32 = arith.constant 0 : i32
    %c0_i32_0 = arith.constant 0 : i32
    %c0_i32_1 = arith.constant 0 : i32
    return %c0_i32, %c0_i32_0 : i32, i32
  }
  func.func @transform_2(%arg0: i32) -> (i32, i32) {
    %c0_i32 = arith.constant 0 : i32
    %c0_i32_0 = arith.constant 0 : i32
    %c0_i32_1 = arith.constant 0 : i32
    return %c0_i32, %c0_i32_0 : i32, i32
  }
  func.func @transform_3(%arg0: i32) -> (i32, i32) {
    %c0_i32 = arith.constant 0 : i32
    %c0_i32_0 = arith.constant 0 : i32
    %c0_i32_1 = arith.constant 0 : i32
    return %c0_i32, %c0_i32_0 : i32, i32
  }
  func.func @transform_4(%arg0: i32) -> (i32, i32) {
    %c0_i32 = arith.constant 0 : i32
    %c0_i32_0 = arith.constant 0 : i32
    %c0_i32_1 = arith.constant 0 : i32
    return %c0_i32, %c0_i32_0 : i32, i32
  }
  func.func @transform_5(%arg0: i32) -> (i32, i32) {
    %c0_i32 = arith.constant 0 : i32
    %c0_i32_0 = arith.constant 0 : i32
    %c0_i32_1 = arith.constant 0 : i32
    return %c0_i32, %c0_i32_0 : i32, i32
  }
  func.func @transform_6(%arg0: i32) -> (i32, i32) {
    %c0_i32 = arith.constant 0 : i32
    %c0_i32_0 = arith.constant 0 : i32
    %c0_i32_1 = arith.constant 0 : i32
    return %c0_i32, %c0_i32_0 : i32, i32
  }
  func.func @transform_7(%arg0: i32) -> (i32, i32) {
    %c0_i32 = arith.constant 0 : i32
    %c0_i32_0 = arith.constant 0 : i32
    return %arg0, %c0_i32 : i32, i32
  }
}

</mosaic_0001>

<llo_original>
// kernel: model_forward.3
$region0: #{model_forward.3}
  #allocation0 [shape = 'u32[]', space=smem, size = 0x4, offset = 0x4, fixed_abs, tag = 'smem constant byte address 0x4 - core index']
  #allocation1 [shape = 'u32[144,128]{1,0:T(1,128)}', space=vmem, size = 0x12000, scoped, tag = 'internal scratch']
  %s0 = inlined_call_operand.vmem [shape: bf16[4,288,32], index: 0, kind: input, shape index: {}]
  %s1 = inlined_call_operand.vmem [shape: bf16[32,64], index: 1, kind: input, shape index: {}]
  %s2 = inlined_call_operand.vmem [shape: f32[1,64], index: 2, kind: input, shape index: {}]
  %s3 = inlined_call_operand.vmem [shape: bf16[288,64], index: 3, kind: output, shape index: {}]
  %s4 = sld [smem:[#allocation0]]
  $region86: #{model_forward.3} parent=0
    _
  %s6 = ssub.s32 1, %s4
  %s7 = scalar_select 0, %s6, %s4
  $region1: #{model_forward.3} parent=0
    #allocation2 [shape = 'u8[294912]{0}', space=vmem, size = 0x48000, scoped, tag = 'input window, operand 0']
    loop: start=0, step=1, limit=4
    $region2: #{model_forward.3} parent=1 // loop_pre_header
      _
    $region3: #{model_forward.3} parent=1 // loop_header
      %s9 = sphi 0, %s13
      %p10 = scmp.ge.s32.totalorder %s9, 4
      %s19 = sphi 0, %s21
      %s22 = sphi 0, %s19
      %s23 = sphi 0, %s22
      %s39 = sphi 0, %s23
      %s43 = sphi 0, %s43
      %s45 = sphi 0, %s43
      %s46 = sphi 0, %s45
      %s60 = sphi 0, %s46
      %s64 = sphi 0, %s64
      %s66 = sphi 0, %s64
      %s67 = sphi 0, %s66
      %s81 = sphi 0, %s67
      %s87 = sphi 0, %s89
      %s90 = sphi 0, %s87
      %s91 = sphi 0, %s90
      %s107 = sphi 0, %s91
    $region4: #{model_forward.3} parent=1 // loop_header_branch
      %12 = sbr.rel (%p10) target = $region8
    $region5: #{model_forward.3} parent=1 // loop_body
      %s14 = ssub.s32 %s9, 1
      %s15 = ssub.s32 %s9, 2
      %s16 = sadd.s32 %s9, 1
      %s17 = ssub.s32 %s9, %s16
      %p18 = scmp.eq.s32.totalorder %s17, 0
      %s20 = sadd.s32 %s19, 1
      %s21 = scalar_select %p18, %s19, %s20
      %p24 = pneg %p18
      %p25 = scmp.eq.s32.totalorder %s9, 1
      %p26 = por %p24, %p25
      %p27 = scmp.ne.s32.totalorder %s19, %s22
      %p28 = scmp.eq.s32.totalorder %s9, 0
      %p29 = por %p27, %p28
      %p30 = scmp.ne.s32.totalorder %s19, %s22
      %p31 = scmp.eq.s32.totalorder %s14, 1
      %p32 = por %p30, %p31
      %p33 = scmp.ne.s32.totalorder %s22, %s23
      %p34 = scmp.eq.s32.totalorder %s14, 0
      %p35 = por %p33, %p34
      %p36 = scmp.ne.s32.totalorder %s22, %s23
      %p37 = scmp.eq.s32.totalorder %s15, 1
      %p38 = por %p36, %p37
      %p40 = scmp.ne.s32.totalorder %s23, %s39
      %p41 = scmp.eq.s32.totalorder %s15, 0
      %p42 = por %p40, %p41
      %s44 = sadd.s32 %s43, 1
      %p47 = scmp.eq.s32.totalorder %s9, 1
      %p48 = scmp.ne.s32.totalorder %s43, %s45
      %p49 = scmp.eq.s32.totalorder %s9, 0
      %p50 = por %p48, %p49
      %p51 = scmp.ne.s32.totalorder %s43, %s45
      %p52 = scmp.eq.s32.totalorder %s14, 1
      %p53 = por %p51, %p52
      %p54 = scmp.ne.s32.totalorder %s45, %s46
      %p55 = scmp.eq.s32.totalorder %s14, 0
      %p56 = por %p54, %p55
      %p57 = scmp.ne.s32.totalorder %s45, %s46
      %p58 = scmp.eq.s32.totalorder %s15, 1
      %p59 = por %p57, %p58
      %p61 = scmp.ne.s32.totalorder %s46, %s60
      %p62 = scmp.eq.s32.totalorder %s15, 0
      %p63 = por %p61, %p62
      %s65 = sadd.s32 %s64, 1
      %p68 = scmp.eq.s32.totalorder %s9, 1
      %p69 = scmp.ne.s32.totalorder %s64, %s66
      %p70 = scmp.eq.s32.totalorder %s9, 0
      %p71 = por %p69, %p70
      %p72 = scmp.ne.s32.totalorder %s64, %s66
      %p73 = scmp.eq.s32.totalorder %s14, 1
      %p74 = por %p72, %p73
      %p75 = scmp.ne.s32.totalorder %s66, %s67
      %p76 = scmp.eq.s32.totalorder %s14, 0
      %p77 = por %p75, %p76
      %p78 = scmp.ne.s32.totalorder %s66, %s67
      %p79 = scmp.eq.s32.totalorder %s15, 1
      %p80 = por %p78, %p79
      %p82 = scmp.ne.s32.totalorder %s67, %s81
      %p83 = scmp.eq.s32.totalorder %s15, 0
      %p84 = por %p82, %p83
      %s85 = ssub.s32 %s9, %s16
      %p86 = scmp.eq.s32.totalorder %s85, 0
      %s88 = sadd.s32 %s87, 1
      %s89 = scalar_select %p86, %s87, %s88
      %p92 = pneg %p86
      %p93 = scmp.eq.s32.totalorder %s9, 1
      %p94 = por %p92, %p93
      %p95 = scmp.ne.s32.totalorder %s87, %s90
      %p96 = scmp.eq.s32.totalorder %s9, 0
      %p97 = por %p95, %p96
      %p98 = scmp.ne.s32.totalorder %s87, %s90
      %p99 = scmp.eq.s32.totalorder %s14, 1
      %p100 = por %p98, %p99
      %p101 = scmp.ne.s32.totalorder %s90, %s91
      %p102 = scmp.eq.s32.totalorder %s14, 0
      %p103 = por %p101, %p102
      %p104 = scmp.ne.s32.totalorder %s90, %s91
      %p105 = scmp.eq.s32.totalorder %s15, 1
      %p106 = por %p104, %p105
      %p108 = scmp.ne.s32.totalorder %s91, %s107
      %p109 = scmp.eq.s32.totalorder %s15, 0
      %p110 = por %p108, %p109
      %p111 = scmp.le.s32.totalorder 1, %s9
      %p112 = scmp.lt.s32.totalorder %s9, 3
      %p113 = pnand %p111, %p112
      %p114 = pneg %p113
      // Predicated region
      $region9: #{model_forward.3} parent=5 // pred_check
        _
      $region10: #{model_forward.3} parent=5 // pred_check_branch
        %116 = sbr.rel (%p113) target = $region12
      $region11: #{model_forward.3} parent=5 // pred_region
        %s117 = ssub.s32 %s9, 1
        // Predicated region
        $region13: #{model_forward.3} parent=11 // pred_check
          %p118 = pneg %p56
        $region14: #{model_forward.3} parent=11 // pred_check_branch
          %120 = sbr.rel (%p118) target = $region16
        $region15: #{model_forward.3} parent=11 // pred_region
          _
        $region16: #{model_forward.3} parent=11 // pred_fallthru
          _
        // Predicated region
        $region17: #{model_forward.3} parent=11 // pred_check
          %p121 = pneg %p77
        $region18: #{model_forward.3} parent=11 // pred_check_branch
          %123 = sbr.rel (%p121) target = $region20
        $region19: #{model_forward.3} parent=11 // pred_region
          _
        $region20: #{model_forward.3} parent=11 // pred_fallthru
          _
      $region12: #{model_forward.3} parent=5 // pred_fallthru
        _
      %p124 = scmp.lt.s32.totalorder %s9, 2
      // Predicated region
      $region21: #{model_forward.3} parent=5 // pred_check
        %p125 = pneg %p124
      $region22: #{model_forward.3} parent=5 // pred_check_branch
        %127 = sbr.rel (%p125) target = $region24
      $region23: #{model_forward.3} parent=5 // pred_region
        // Predicated region
        $region25: #{model_forward.3} parent=23 // pred_check
          %p128 = pneg %p29
        $region26: #{model_forward.3} parent=23 // pred_check_branch
          %130 = sbr.rel (%p128) target = $region28
        $region27: #{model_forward.3} parent=23 // pred_region
          %s131 = sand.u32 %s19, 1
          %s132 = sand.u32 %s19, 1
          %s133 = smul.addr %s132, 288
          %s134 = scalar_lea.vmem [#allocation2], %s133
          %s135 = smul.u32 18, %s9
          %s136 = smul.addr %s135, 4
          %s137 = scalar_lea.vmem %s0, %s136
          // Predicated region
          $region29: #{model_forward.3} parent=27 // pred_check
            _
          $region30: #{model_forward.3} parent=27 // pred_check_branch
            %139 = sbr.rel (0) target = $region32
          $region31: #{model_forward.3} parent=27 // pred_region
            // Predicated region
            $region33: #{model_forward.3} parent=31 // pred_check
              _
            $region34: #{model_forward.3} parent=31 // pred_check_branch
              %141 = sbr.rel target = $region36
            $region35: #{model_forward.3} parent=31 // pred_region
              // Predicated region
              $region48: #{model_forward.3} parent=35 // pred_check
                _
              $region49: #{model_forward.3} parent=35 // pred_check_branch
                %299 = sbr.rel (0) target = $region51
              $region50: #{model_forward.3} parent=35 // pred_region
                loop: start=0, step=1, limit=1
                $region52: #{model_forward.3} parent=50 // loop_pre_header
                  _
                $region53: #{model_forward.3} parent=50 // loop_header
                  %s301 = sphi 0, %s305
                  %p302 = scmp.ge.s32.totalorder %s301, 1
                  %s306 = sphi %s137, %s137
                  %s307 = sphi %s134, %s134
                $region54: #{model_forward.3} parent=50 // loop_header_branch
                  %304 = sbr.rel (%p302) target = $region58
                $region55: #{model_forward.3} parent=50 // loop_body
                  _
                $region56: #{model_forward.3} parent=50 // loop_footer
                  %s305 = sadd.s32 1, %s301
                $region57: #{model_forward.3} parent=50 // loop_footer_branch
                  %300 = sbr.rel target = $region53
                $region58: #{model_forward.3} parent=50 // loop_exit
                  _
                %s309 = ssub.s32 16, 1
                loop: start=0, step=1, limit=1
                $region59: #{model_forward.3} parent=50 // loop_pre_header
                  _
                $region60: #{model_forward.3} parent=50 // loop_header
                  %s311 = sphi 0, %s315
                  %p312 = scmp.ge.s32.totalorder %s311, 1
                  %s316 = sphi %s137, %s137
                  %s317 = sphi %s134, %s134
                $region61: #{model_forward.3} parent=50 // loop_header_branch
                  %314 = sbr.rel (%p312) target = $region65
                $region62: #{model_forward.3} parent=50 // loop_body
                  %v318 = vld [vmem:[%s316] sm:%s309]
                  %319 = vst [vmem:[%s317] sm:%s309] %v318
                  %v320 = vld [vmem:[%s316 + $0x4] sm:%s309]
                  %321 = vst [vmem:[%s317 + $0x4] sm:%s309] %v320
                  %v322 = vld [vmem:[%s316 + $0x8] sm:%s309]
                  %323 = vst [vmem:[%s317 + $0x8] sm:%s309] %v322
                  %v324 = vld [vmem:[%s316 + $0xc] sm:%s309]
                  %325 = vst [vmem:[%s317 + $0xc] sm:%s309] %v324
                  %v326 = vld [vmem:[%s316 + $0x10] sm:%s309]
                  %327 = vst [vmem:[%s317 + $0x10] sm:%s309] %v326
                  %v328 = vld [vmem:[%s316 + $0x14] sm:%s309]
                  %329 = vst [vmem:[%s317 + $0x14] sm:%s309] %v328
                  %v330 = vld [vmem:[%s316 + $0x18] sm:%s309]
                  %331 = vst [vmem:[%s317 + $0x18] sm:%s309] %v330
                  %v332 = vld [vmem:[%s316 + $0x1c] sm:%s309]
                  %333 = vst [vmem:[%s317 + $0x1c] sm:%s309] %v332
                  %v334 = vld [vmem:[%s316 + $0x20] sm:%s309]
                  %335 = vst [vmem:[%s317 + $0x20] sm:%s309] %v334
                  %v336 = vld [vmem:[%s316 + $0x24] sm:%s309]
                  %337 = vst [vmem:[%s317 + $0x24] sm:%s309] %v336
                  %v338 = vld [vmem:[%s316 + $0x28] sm:%s309]
                  %339 = vst [vmem:[%s317 + $0x28] sm:%s309] %v338
                  %v340 = vld [vmem:[%s316 + $0x2c] sm:%s309]
                  %341 = vst [vmem:[%s317 + $0x2c] sm:%s309] %v340
                  %v342 = vld [vmem:[%s316 + $0x30] sm:%s309]
                  %343 = vst [vmem:[%s317 + $0x30] sm:%s309] %v342
                  %v344 = vld [vmem:[%s316 + $0x34] sm:%s309]
                  %345 = vst [vmem:[%s317 + $0x34] sm:%s309] %v344
                  %v346 = vld [vmem:[%s316 + $0x38] sm:%s309]
                  %347 = vst [vmem:[%s317 + $0x38] sm:%s309] %v346
                  %v348 = vld [vmem:[%s316 + $0x3c] sm:%s309]
                  %349 = vst [vmem:[%s317 + $0x3c] sm:%s309] %v348
                  %v350 = vld [vmem:[%s316 + $0x40] sm:%s309]
                  %351 = vst [vmem:[%s317 + $0x40] sm:%s309] %v350
                  %v352 = vld [vmem:[%s316 + $0x44] sm:%s309]
                  %353 = vst [vmem:[%s317 + $0x44] sm:%s309] %v352
                  %v354 = vld [vmem:[%s316 + $0x90] sm:%s309]
                  %355 = vst [vmem:[%s317 + $0x48] sm:%s309] %v354
                  %v356 = vld [vmem:[%s316 + $0x94] sm:%s309]
                  %357 = vst [vmem:[%s317 + $0x4c] sm:%s309] %v356
                  %v358 = vld [vmem:[%s316 + $0x98] sm:%s309]
                  %359 = vst [vmem:[%s317 + $0x50] sm:%s309] %v358
                  %v360 = vld [vmem:[%s316 + $0x9c] sm:%s309]
                  %361 = vst [vmem:[%s317 + $0x54] sm:%s309] %v360
                  %v362 = vld [vmem:[%s316 + $0xa0] sm:%s309]
                  %363 = vst [vmem:[%s317 + $0x58] sm:%s309] %v362
                  %v364 = vld [vmem:[%s316 + $0xa4] sm:%s309]
                  %365 = vst [vmem:[%s317 + $0x5c] sm:%s309] %v364
                  %v366 = vld [vmem:[%s316 + $0xa8] sm:%s309]
                  %367 = vst [vmem:[%s317 + $0x60] sm:%s309] %v366
                  %v368 = vld [vmem:[%s316 + $0xac] sm:%s309]
                  %369 = vst [vmem:[%s317 + $0x64] sm:%s309] %v368
                  %v370 = vld [vmem:[%s316 + $0xb0] sm:%s309]
                  %371 = vst [vmem:[%s317 + $0x68] sm:%s309] %v370
                  %v372 = vld [vmem:[%s316 + $0xb4] sm:%s309]
                  %373 = vst [vmem:[%s317 + $0x6c] sm:%s309] %v372
                  %v374 = vld [vmem:[%s316 + $0xb8] sm:%s309]
                  %375 = vst [vmem:[%s317 + $0x70] sm:%s309] %v374
                  %v376 = vld [vmem:[%s316 + $0xbc] sm:%s309]
                  %377 = vst [vmem:[%s317 + $0x74] sm:%s309] %v376
                  %v378 = vld [vmem:[%s316 + $0xc0] sm:%s309]
                  %379 = vst [vmem:[%s317 + $0x78] sm:%s309] %v378
                  %v380 = vld [vmem:[%s316 + $0xc4] sm:%s309]
                  %381 = vst [vmem:[%s317 + $0x7c] sm:%s309] %v380
                  %v382 = vld [vmem:[%s316 + $0xc8] sm:%s309]
                  %383 = vst [vmem:[%s317 + $0x80] sm:%s309] %v382
                  %v384 = vld [vmem:[%s316 + $0xcc] sm:%s309]
                  %385 = vst [vmem:[%s317 + $0x84] sm:%s309] %v384
                  %v386 = vld [vmem:[%s316 + $0xd0] sm:%s309]
                  %387 = vst [vmem:[%s317 + $0x88] sm:%s309] %v386
                  %v388 = vld [vmem:[%s316 + $0xd4] sm:%s309]
                  %389 = vst [vmem:[%s317 + $0x8c] sm:%s309] %v388
                  %v390 = vld [vmem:[%s316 + $0x120] sm:%s309]
                  %391 = vst [vmem:[%s317 + $0x90] sm:%s309] %v390
                  %v392 = vld [vmem:[%s316 + $0x124] sm:%s309]
                  %393 = vst [vmem:[%s317 + $0x94] sm:%s309] %v392
                  %v394 = vld [vmem:[%s316 + $0x128] sm:%s309]
                  %395 = vst [vmem:[%s317 + $0x98] sm:%s309] %v394
                  %v396 = vld [vmem:[%s316 + $0x12c] sm:%s309]
                  %397 = vst [vmem:[%s317 + $0x9c] sm:%s309] %v396
                  %v398 = vld [vmem:[%s316 + $0x130] sm:%s309]
                  %399 = vst [vmem:[%s317 + $0xa0] sm:%s309] %v398
                  %v400 = vld [vmem:[%s316 + $0x134] sm:%s309]
                  %401 = vst [vmem:[%s317 + $0xa4] sm:%s309] %v400
                  %v402 = vld [vmem:[%s316 + $0x138] sm:%s309]
                  %403 = vst [vmem:[%s317 + $0xa8] sm:%s309] %v402
                  %v404 = vld [vmem:[%s316 + $0x13c] sm:%s309]
                  %405 = vst [vmem:[%s317 + $0xac] sm:%s309] %v404
                  %v406 = vld [vmem:[%s316 + $0x140] sm:%s309]
                  %407 = vst [vmem:[%s317 + $0xb0] sm:%s309] %v406
                  %v408 = vld [vmem:[%s316 + $0x144] sm:%s309]
                  %409 = vst [vmem:[%s317 + $0xb4] sm:%s309] %v408
                  %v410 = vld [vmem:[%s316 + $0x148] sm:%s309]
                  %411 = vst [vmem:[%s317 + $0xb8] sm:%s309] %v410
                  %v412 = vld [vmem:[%s316 + $0x14c] sm:%s309]
                  %413 = vst [vmem:[%s317 + $0xbc] sm:%s309] %v412
                  %v414 = vld [vmem:[%s316 + $0x150] sm:%s309]
                  %415 = vst [vmem:[%s317 + $0xc0] sm:%s309] %v414
                  %v416 = vld [vmem:[%s316 + $0x154] sm:%s309]
                  %417 = vst [vmem:[%s317 + $0xc4] sm:%s309] %v416
                  %v418 = vld [vmem:[%s316 + $0x158] sm:%s309]
                  %419 = vst [vmem:[%s317 + $0xc8] sm:%s309] %v418
                  %v420 = vld [vmem:[%s316 + $0x15c] sm:%s309]
                  %421 = vst [vmem:[%s317 + $0xcc] sm:%s309] %v420
                  %v422 = vld [vmem:[%s316 + $0x160] sm:%s309]
                  %423 = vst [vmem:[%s317 + $0xd0] sm:%s309] %v422
                  %v424 = vld [vmem:[%s316 + $0x164] sm:%s309]
                  %425 = vst [vmem:[%s317 + $0xd4] sm:%s309] %v424
                  %v426 = vld [vmem:[%s316 + $0x1b0] sm:%s309]
                  %427 = vst [vmem:[%s317 + $0xd8] sm:%s309] %v426
                  %v428 = vld [vmem:[%s316 + $0x1b4] sm:%s309]
                  %429 = vst [vmem:[%s317 + $0xdc] sm:%s309] %v428
                  %v430 = vld [vmem:[%s316 + $0x1b8] sm:%s309]
                  %431 = vst [vmem:[%s317 + $0xe0] sm:%s309] %v430
                  %v432 = vld [vmem:[%s316 + $0x1bc] sm:%s309]
                  %433 = vst [vmem:[%s317 + $0xe4] sm:%s309] %v432
                  %v434 = vld [vmem:[%s316 + $0x1c0] sm:%s309]
                  %435 = vst [vmem:[%s317 + $0xe8] sm:%s309] %v434
                  %v436 = vld [vmem:[%s316 + $0x1c4] sm:%s309]
                  %437 = vst [vmem:[%s317 + $0xec] sm:%s309] %v436
                  %v438 = vld [vmem:[%s316 + $0x1c8] sm:%s309]
                  %439 = vst [vmem:[%s317 + $0xf0] sm:%s309] %v438
                  %v440 = vld [vmem:[%s316 + $0x1cc] sm:%s309]
                  %441 = vst [vmem:[%s317 + $0xf4] sm:%s309] %v440
                  %v442 = vld [vmem:[%s316 + $0x1d0] sm:%s309]
                  %443 = vst [vmem:[%s317 + $0xf8] sm:%s309] %v442
                  %v444 = vld [vmem:[%s316 + $0x1d4] sm:%s309]
                  %445 = vst [vmem:[%s317 + $0xfc] sm:%s309] %v444
                  %v446 = vld [vmem:[%s316 + $0x1d8] sm:%s309]
                  %447 = vst [vmem:[%s317 + $0x100] sm:%s309] %v446
                  %v448 = vld [vmem:[%s316 + $0x1dc] sm:%s309]
                  %449 = vst [vmem:[%s317 + $0x104] sm:%s309] %v448
                  %v450 = vld [vmem:[%s316 + $0x1e0] sm:%s309]
                  %451 = vst [vmem:[%s317 + $0x108] sm:%s309] %v450
                  %v452 = vld [vmem:[%s316 + $0x1e4] sm:%s309]
                  %453 = vst [vmem:[%s317 + $0x10c] sm:%s309] %v452
                  %v454 = vld [vmem:[%s316 + $0x1e8] sm:%s309]
                  %455 = vst [vmem:[%s317 + $0x110] sm:%s309] %v454
                  %v456 = vld [vmem:[%s316 + $0x1ec] sm:%s309]
                  %457 = vst [vmem:[%s317 + $0x114] sm:%s309] %v456
                  %v458 = vld [vmem:[%s316 + $0x1f0] sm:%s309]
                  %459 = vst [vmem:[%s317 + $0x118] sm:%s309] %v458
                  %v460 = vld [vmem:[%s316 + $0x1f4] sm:%s309]
                  %461 = vst [vmem:[%s317 + $0x11c] sm:%s309] %v460
                $region63: #{model_forward.3} parent=50 // loop_footer
                  %s315 = sadd.s32 1, %s311
                $region64: #{model_forward.3} parent=50 // loop_footer_branch
                  %310 = sbr.rel target = $region60
                $region65: #{model_forward.3} parent=50 // loop_exit
                  _
              $region51: #{model_forward.3} parent=35 // pred_fallthru
                _
            $region36: #{model_forward.3} parent=31 // pred_fallthru
              _
            // Predicated region
            $region37: #{model_forward.3} parent=31 // pred_check
              _
            $region38: #{model_forward.3} parent=31 // pred_check_branch
              %143 = sbr.rel (0) target = $region40
            $region39: #{model_forward.3} parent=31 // pred_region
              %s145 = ssub.s32 16, 1
              loop: start=0, step=1, limit=1
              $region41: #{model_forward.3} parent=39 // loop_pre_header
                _
              $region42: #{model_forward.3} parent=39 // loop_header
                %s147 = sphi 0, %s151
                %p148 = scmp.ge.s32.totalorder %s147, 1
                %s152 = sphi %s137, %s137
                %s153 = sphi %s134, %s134
              $region43: #{model_forward.3} parent=39 // loop_header_branch
                %150 = sbr.rel (%p148) target = $region47
              $region44: #{model_forward.3} parent=39 // loop_body
                %v154 = vld [vmem:[%s152] sm:%s145]
                %155 = vst [vmem:[%s153] sm:%s145] %v154
                %v156 = vld [vmem:[%s152 + $0x4] sm:%s145]
                %157 = vst [vmem:[%s153 + $0x4] sm:%s145] %v156
                %v158 = vld [vmem:[%s152 + $0x8] sm:%s145]
                %159 = vst [vmem:[%s153 + $0x8] sm:%s145] %v158
                %v160 = vld [vmem:[%s152 + $0xc] sm:%s145]
                %161 = vst [vmem:[%s153 + $0xc] sm:%s145] %v160
                %v162 = vld [vmem:[%s152 + $0x10] sm:%s145]
                %163 = vst [vmem:[%s153 + $0x10] sm:%s145] %v162
                %v164 = vld [vmem:[%s152 + $0x14] sm:%s145]
                %165 = vst [vmem:[%s153 + $0x14] sm:%s145] %v164
                %v166 = vld [vmem:[%s152 + $0x18] sm:%s145]
                %167 = vst [vmem:[%s153 + $0x18] sm:%s145] %v166
                %v168 = vld [vmem:[%s152 + $0x1c] sm:%s145]
                %169 = vst [vmem:[%s153 + $0x1c] sm:%s145] %v168
                %v170 = vld [vmem:[%s152 + $0x20] sm:%s145]
                %171 = vst [vmem:[%s153 + $0x20] sm:%s145] %v170
                %v172 = vld [vmem:[%s152 + $0x24] sm:%s145]
                %173 = vst [vmem:[%s153 + $0x24] sm:%s145] %v172
                %v174 = vld [vmem:[%s152 + $0x28] sm:%s145]
                %175 = vst [vmem:[%s153 + $0x28] sm:%s145] %v174
                %v176 = vld [vmem:[%s152 + $0x2c] sm:%s145]
                %177 = vst [vmem:[%s153 + $0x2c] sm:%s145] %v176
                %v178 = vld [vmem:[%s152 + $0x30] sm:%s145]
                %179 = vst [vmem:[%s153 + $0x30] sm:%s145] %v178
                %v180 = vld [vmem:[%s152 + $0x34] sm:%s145]
                %181 = vst [vmem:[%s153 + $0x34] sm:%s145] %v180
                %v182 = vld [vmem:[%s152 + $0x38] sm:%s145]
                %183 = vst [vmem:[%s153 + $0x38] sm:%s145] %v182
                %v184 = vld [vmem:[%s152 + $0x3c] sm:%s145]
                %185 = vst [vmem:[%s153 + $0x3c] sm:%s145] %v184
                %v186 = vld [vmem:[%s152 + $0x40] sm:%s145]
                %187 = vst [vmem:[%s153 + $0x40] sm:%s145] %v186
                %v188 = vld [vmem:[%s152 + $0x44] sm:%s145]
                %189 = vst [vmem:[%s153 + $0x44] sm:%s145] %v188
                %v190 = vld [vmem:[%s152 + $0x90] sm:%s145]
                %191 = vst [vmem:[%s153 + $0x48] sm:%s145] %v190
                %v192 = vld [vmem:[%s152 + $0x94] sm:%s145]
                %193 = vst [vmem:[%s153 + $0x4c] sm:%s145] %v192
                %v194 = vld [vmem:[%s152 + $0x98] sm:%s145]
                %195 = vst [vmem:[%s153 + $0x50] sm:%s145] %v194
                %v196 = vld [vmem:[%s152 + $0x9c] sm:%s145]
                %197 = vst [vmem:[%s153 + $0x54] sm:%s145] %v196
                %v198 = vld [vmem:[%s152 + $0xa0] sm:%s145]
                %199 = vst [vmem:[%s153 + $0x58] sm:%s145] %v198
                %v200 = vld [vmem:[%s152 + $0xa4] sm:%s145]
                %201 = vst [vmem:[%s153 + $0x5c] sm:%s145] %v200
                %v202 = vld [vmem:[%s152 + $0xa8] sm:%s145]
                %203 = vst [vmem:[%s153 + $0x60] sm:%s145] %v202
                %v204 = vld [vmem:[%s152 + $0xac] sm:%s145]
                %205 = vst [vmem:[%s153 + $0x64] sm:%s145] %v204
                %v206 = vld [vmem:[%s152 + $0xb0] sm:%s145]
                %207 = vst [vmem:[%s153 + $0x68] sm:%s145] %v206
                %v208 = vld [vmem:[%s152 + $0xb4] sm:%s145]
                %209 = vst [vmem:[%s153 + $0x6c] sm:%s145] %v208
                %v210 = vld [vmem:[%s152 + $0xb8] sm:%s145]
                %211 = vst [vmem:[%s153 + $0x70] sm:%s145] %v210
                %v212 = vld [vmem:[%s152 + $0xbc] sm:%s145]
                %213 = vst [vmem:[%s153 + $0x74] sm:%s145] %v212
                %v214 = vld [vmem:[%s152 + $0xc0] sm:%s145]
                %215 = vst [vmem:[%s153 + $0x78] sm:%s145] %v214
                %v216 = vld [vmem:[%s152 + $0xc4] sm:%s145]
                %217 = vst [vmem:[%s153 + $0x7c] sm:%s145] %v216
                %v218 = vld [vmem:[%s152 + $0xc8] sm:%s145]
                %219 = vst [vmem:[%s153 + $0x80] sm:%s145] %v218
                %v220 = vld [vmem:[%s152 + $0xcc] sm:%s145]
                %221 = vst [vmem:[%s153 + $0x84] sm:%s145] %v220
                %v222 = vld [vmem:[%s152 + $0xd0] sm:%s145]
                %223 = vst [vmem:[%s153 + $0x88] sm:%s145] %v222
                %v224 = vld [vmem:[%s152 + $0xd4] sm:%s145]
                %225 = vst [vmem:[%s153 + $0x8c] sm:%s145] %v224
                %v226 = vld [vmem:[%s152 + $0x120] sm:%s145]
                %227 = vst [vmem:[%s153 + $0x90] sm:%s145] %v226
                %v228 = vld [vmem:[%s152 + $0x124] sm:%s145]
                %229 = vst [vmem:[%s153 + $0x94] sm:%s145] %v228
                %v230 = vld [vmem:[%s152 + $0x128] sm:%s145]
                %231 = vst [vmem:[%s153 + $0x98] sm:%s145] %v230
                %v232 = vld [vmem:[%s152 + $0x12c] sm:%s145]
                %233 = vst [vmem:[%s153 + $0x9c] sm:%s145] %v232
                %v234 = vld [vmem:[%s152 + $0x130] sm:%s145]
                %235 = vst [vmem:[%s153 + $0xa0] sm:%s145] %v234
                %v236 = vld [vmem:[%s152 + $0x134] sm:%s145]
                %237 = vst [vmem:[%s153 + $0xa4] sm:%s145] %v236
                %v238 = vld [vmem:[%s152 + $0x138] sm:%s145]
                %239 = vst [vmem:[%s153 + $0xa8] sm:%s145] %v238
                %v240 = vld [vmem:[%s152 + $0x13c] sm:%s145]
                %241 = vst [vmem:[%s153 + $0xac] sm:%s145] %v240
                %v242 = vld [vmem:[%s152 + $0x140] sm:%s145]
                %243 = vst [vmem:[%s153 + $0xb0] sm:%s145] %v242
                %v244 = vld [vmem:[%s152 + $0x144] sm:%s145]
                %245 = vst [vmem:[%s153 + $0xb4] sm:%s145] %v244
                %v246 = vld [vmem:[%s152 + $0x148] sm:%s145]
                %247 = vst [vmem:[%s153 + $0xb8] sm:%s145] %v246
                %v248 = vld [vmem:[%s152 + $0x14c] sm:%s145]
                %249 = vst [vmem:[%s153 + $0xbc] sm:%s145] %v248
                %v250 = vld [vmem:[%s152 + $0x150] sm:%s145]
                %251 = vst [vmem:[%s153 + $0xc0] sm:%s145] %v250
                %v252 = vld [vmem:[%s152 + $0x154] sm:%s145]
                %253 = vst [vmem:[%s153 + $0xc4] sm:%s145] %v252
                %v254 = vld [vmem:[%s152 + $0x158] sm:%s145]
                %255 = vst [vmem:[%s153 + $0xc8] sm:%s145] %v254
                %v256 = vld [vmem:[%s152 + $0x15c] sm:%s145]
                %257 = vst [vmem:[%s153 + $0xcc] sm:%s145] %v256
                %v258 = vld [vmem:[%s152 + $0x160] sm:%s145]
                %259 = vst [vmem:[%s153 + $0xd0] sm:%s145] %v258
                %v260 = vld [vmem:[%s152 + $0x164] sm:%s145]
                %261 = vst [vmem:[%s153 + $0xd4] sm:%s145] %v260
                %v262 = vld [vmem:[%s152 + $0x1b0] sm:%s145]
                %263 = vst [vmem:[%s153 + $0xd8] sm:%s145] %v262
                %v264 = vld [vmem:[%s152 + $0x1b4] sm:%s145]
                %265 = vst [vmem:[%s153 + $0xdc] sm:%s145] %v264
                %v266 = vld [vmem:[%s152 + $0x1b8] sm:%s145]
                %267 = vst [vmem:[%s153 + $0xe0] sm:%s145] %v266
                %v268 = vld [vmem:[%s152 + $0x1bc] sm:%s145]
                %269 = vst [vmem:[%s153 + $0xe4] sm:%s145] %v268
                %v270 = vld [vmem:[%s152 + $0x1c0] sm:%s145]
                %271 = vst [vmem:[%s153 + $0xe8] sm:%s145] %v270
                %v272 = vld [vmem:[%s152 + $0x1c4] sm:%s145]
                %273 = vst [vmem:[%s153 + $0xec] sm:%s145] %v272
                %v274 = vld [vmem:[%s152 + $0x1c8] sm:%s145]
                %275 = vst [vmem:[%s153 + $0xf0] sm:%s145] %v274
                %v276 = vld [vmem:[%s152 + $0x1cc] sm:%s145]
                %277 = vst [vmem:[%s153 + $0xf4] sm:%s145] %v276
                %v278 = vld [vmem:[%s152 + $0x1d0] sm:%s145]
                %279 = vst [vmem:[%s153 + $0xf8] sm:%s145] %v278
                %v280 = vld [vmem:[%s152 + $0x1d4] sm:%s145]
                %281 = vst [vmem:[%s153 + $0xfc] sm:%s145] %v280
                %v282 = vld [vmem:[%s152 + $0x1d8] sm:%s145]
                %283 = vst [vmem:[%s153 + $0x100] sm:%s145] %v282
                %v284 = vld [vmem:[%s152 + $0x1dc] sm:%s145]
                %285 = vst [vmem:[%s153 + $0x104] sm:%s145] %v284
                %v286 = vld [vmem:[%s152 + $0x1e0] sm:%s145]
                %287 = vst [vmem:[%s153 + $0x108] sm:%s145] %v286
                %v288 = vld [vmem:[%s152 + $0x1e4] sm:%s145]
                %289 = vst [vmem:[%s153 + $0x10c] sm:%s145] %v288
                %v290 = vld [vmem:[%s152 + $0x1e8] sm:%s145]
                %291 = vst [vmem:[%s153 + $0x110] sm:%s145] %v290
                %v292 = vld [vmem:[%s152 + $0x1ec] sm:%s145]
                %293 = vst [vmem:[%s153 + $0x114] sm:%s145] %v292
                %v294 = vld [vmem:[%s152 + $0x1f0] sm:%s145]
                %295 = vst [vmem:[%s153 + $0x118] sm:%s145] %v294
                %v296 = vld [vmem:[%s152 + $0x1f4] sm:%s145]
                %297 = vst [vmem:[%s153 + $0x11c] sm:%s145] %v296
              $region45: #{model_forward.3} parent=39 // loop_footer
                %s151 = sadd.s32 1, %s147
              $region46: #{model_forward.3} parent=39 // loop_footer_branch
                %146 = sbr.rel target = $region42
              $region47: #{model_forward.3} parent=39 // loop_exit
                _
            $region40: #{model_forward.3} parent=31 // pred_fallthru
              _
          $region32: #{model_forward.3} parent=27 // pred_fallthru
            _
          %462 = vnop
        $region28: #{model_forward.3} parent=23 // pred_fallthru
          _
      $region24: #{model_forward.3} parent=5 // pred_fallthru
        _
      %p463 = scmp.le.s32.totalorder 1, %s9
      %p464 = scmp.lt.s32.totalorder %s9, 3
      %p465 = pnand %p463, %p464
      %p466 = pneg %p465
      // Predicated region
      $region66: #{model_forward.3} parent=5 // pred_check
        _
      $region67: #{model_forward.3} parent=5 // pred_check_branch
        %468 = sbr.rel (%p465) target = $region69
      $region68: #{model_forward.3} parent=5 // pred_region
        %s469 = ssub.s32 %s9, 1
        %s470 = sand.u32 %s22, 1
        %s471 = sand.u32 %s22, 1
        %s472 = smul.addr %s471, 288
        %s473 = scalar_lea.vmem [#allocation2], %s472
        // Predicated region
        $region70: #{model_forward.3} parent=68 // pred_check
          %p474 = pneg %p35
        $region71: #{model_forward.3} parent=68 // pred_check_branch
          %476 = sbr.rel (%p474) target = $region73
        $region72: #{model_forward.3} parent=68 // pred_region
          _
        $region73: #{model_forward.3} parent=68 // pred_fallthru
          _
        %s477 = sand.u32 %s22, 1
        %s478 = sand.u32 %s22, 1
        %s479 = smul.addr %s478, 288
        %s480 = scalar_lea.vmem [#allocation2], %s479
        %p481 = pneg %p35
        %p482 = pneg %p32
        %p483 = pneg %p56
        %p484 = pneg %p53
        %p485 = pneg %p77
        %p486 = pneg %p74
        %p487 = pneg %p103
        %p488 = pneg %p100
        %s489 = smul.u32 18, %s14
        %p490 = scmp.lt.s32.totalorder %s489, 35
        %s491 = scalar_select %p490, %s489, 35
        %s492 = smul.addr %s491, 4
        %s493 = scalar_lea.vmem %s3, %s492
        %s494 = smul.u32 18, %s14
        %s495 = smul.u32 18, %s14
        %p496 = scmp.lt.s32.totalorder %s495, 35
        %s497 = scalar_select %p496, %s495, 35
        %s498 = smul.addr %s497, 4
        %s499 = scalar_lea.vmem %s3, %s498
        %s500 = smul.u32 18, %s14
        %v502 = vld [vmem:[%s1] sm:$0xf]
        %v503 = vld [vmem:[%s1 + $0x4] sm:$0xf]
        %v504 = vld [vmem:[%s1 + $0x8] sm:$0xf]
        %v505 = vld [vmem:[%s1 + $0xc] sm:$0xf]
        %v506 = vld [vmem:[%s473] sm:$0xf]
        %v507 = vld [vmem:[%s473 + $0x4] sm:$0xf]
        %v508 = vld [vmem:[%s473 + $0x8] sm:$0xf]
        %v509 = vld [vmem:[%s473 + $0xc] sm:$0xf]
        %v510 = vld [vmem:[%s473 + $0x10] sm:$0xf]
        %v511 = vld [vmem:[%s473 + $0x14] sm:$0xf]
        %v512 = vld [vmem:[%s473 + $0x18] sm:$0xf]
        %v513 = vld [vmem:[%s473 + $0x1c] sm:$0xf]
        %v514 = vld [vmem:[%s473 + $0x20] sm:$0xf]
        %v515 = vld [vmem:[%s473 + $0x24] sm:$0xf]
        %v516 = vld [vmem:[%s473 + $0x28] sm:$0xf]
        %v517 = vld [vmem:[%s473 + $0x2c] sm:$0xf]
        %v518 = vld [vmem:[%s473 + $0x30] sm:$0xf]
        %v519 = vld [vmem:[%s473 + $0x34] sm:$0xf]
        %v520 = vld [vmem:[%s473 + $0x38] sm:$0xf]
        %v521 = vld [vmem:[%s473 + $0x3c] sm:$0xf]
        %v522 = vld [vmem:[%s473 + $0x40] sm:$0xf]
        %v523 = vld [vmem:[%s473 + $0x44] sm:$0xf]
        %v542 = vunpack.c.l.b16 %v506
        %v543 = vunpack.c.l.b16 %v507
        %v544 = vunpack.c.l.b16 %v508
        %v545 = vunpack.c.l.b16 %v509
        %v546 = vunpack.c.l.b16 %v510
        %v547 = vunpack.c.l.b16 %v511
        %v548 = vunpack.c.l.b16 %v512
        %v549 = vunpack.c.l.b16 %v513
        %v550 = vunpack.c.l.b16 %v514
        %v551 = vunpack.c.l.b16 %v515
        %v552 = vunpack.c.l.b16 %v516
        %v553 = vunpack.c.l.b16 %v517
        %v554 = vunpack.c.l.b16 %v518
        %v555 = vunpack.c.l.b16 %v519
        %v556 = vunpack.c.l.b16 %v520
        %v557 = vunpack.c.l.b16 %v521
        %v558 = vunpack.c.l.b16 %v522
        %v559 = vunpack.c.l.b16 %v523
        %v560 = vpack.c.b16 %v543, %v542
        %v561 = vpack.c.b16 %v545, %v544
        %v562 = vpack.c.b16 %v547, %v546
        %v563 = vpack.c.b16 %v549, %v548
        %v564 = vpack.c.b16 %v551, %v550
        %v565 = vpack.c.b16 %v553, %v552
        %v566 = vpack.c.b16 %v555, %v554
        %v567 = vpack.c.b16 %v557, %v556
        %v568 = vpack.c.b16 %v559, %v558
        %v573 = vunpack.c.l.b16 %v502
        %v574 = vunpack.c.l.b16 %v503
        %v575 = vunpack.c.l.b16 %v504
        %v576 = vunpack.c.l.b16 %v505
        %v577 = vpack.c.b16 %v574, %v573
        %v578 = vpack.c.b16 %v576, %v575
        %vm581 = vcmask 261120
        %v583 = vsel %vm581, %v560, 0
        %v586 = vsel %vm581, %v561, 0
        %v589 = vsel %vm581, %v562, 0
        %v592 = vsel %vm581, %v563, 0
        %v595 = vsel %vm581, %v564, 0
        %v598 = vsel %vm581, %v565, 0
        %v601 = vsel %vm581, %v566, 0
        %v604 = vsel %vm581, %v567, 0
        %v607 = vsel %vm581, %v568, 0
        %609 = vmatprep.subr.bf16.mxu0 0
        %610 = vmatpush1.bf16.msra.mxu0 0
        %611 = vmatprep.subr.bf16.mxu0 0
        %612 = vmatpush1.bf16.msra.mxu0 0
        %613 = vmatprep.subr.bf16.mxu0 0
        %614 = vmatpush1.bf16.msra.mxu0 0
        %615 = vmatprep.subr.bf16.mxu0 0
        %616 = vmatpush1.bf16.msra.mxu0 0
        %617 = vmatprep.subr.bf16.mxu0 0
        %618 = vmatpush1.bf16.msra.mxu0 0
        %619 = vmatprep.subr.bf16.mxu0 0
        %620 = vmatpush1.bf16.msra.mxu0 0
        %621 = vmatprep.subr.bf16.mxu0 0
        %622 = vmatpush1.bf16.msra.mxu0 %v578
        %623 = vmatprep.subr.bf16.mxu0 0
        %624 = vmatpush1.bf16.msra.mxu0 %v577
        %625 = vmatprep.subr.bf16.mxu0 0
        %626 = vmatpush2.bf16.msra.mxu0 0
        %627 = vmatprep.subr.bf16.mxu0 0
        %628 = vmatpush2.bf16.msra.mxu0 0
        %629 = vmatprep.subr.bf16.mxu0 0
        %630 = vmatpush2.bf16.msra.mxu0 0
        %631 = vmatprep.subr.bf16.mxu0 0
        %632 = vmatpush2.bf16.msra.mxu0 0
        %633 = vmatprep.subr.bf16.mxu0 0
        %634 = vmatpush2.bf16.msra.mxu0 0
        %635 = vmatprep.subr.bf16.mxu0 0
        %636 = vmatpush2.bf16.msra.mxu0 0
        %637 = vmatprep.subr.bf16.mxu0 0
        %638 = vmatpush2.bf16.msra.mxu0 0
        %639 = vmatprep.subr.bf16.mxu0 0
        %640 = vmatpush2.bf16.msra.mxu0 0
        %641 = vmatprep.mubr.bf16.mxu0 0
        %642 = vmatmul.mubr.bf16.gmra.mxu0 %v583
        %v643 = vpop.f32.mrf.mxu0
        %v644 = vadd.f32 0.0, %v643
        %v645 = vpop.f32.mrf.mxu0
        %v646 = vpop.f32.mrf.mxu0
        %v647 = vadd.f32 0.0, %v646
        %v648 = vpop.f32.mrf.mxu0
        %649 = vmatprep.mubr.bf16.mxu0 0
        %650 = vmatmul.mubr.bf16.gmra.mxu0 %v586
        %v651 = vpop.f32.mrf.mxu0
        %v652 = vadd.f32 0.0, %v651
        %v653 = vpop.f32.mrf.mxu0
        %v654 = vpop.f32.mrf.mxu0
        %v655 = vadd.f32 0.0, %v654
        %v656 = vpop.f32.mrf.mxu0
        %657 = vmatprep.mubr.bf16.mxu0 0
        %658 = vmatmul.mubr.bf16.gmra.mxu0 %v589
        %v659 = vpop.f32.mrf.mxu0
        %v660 = vadd.f32 0.0, %v659
        %v661 = vpop.f32.mrf.mxu0
        %v662 = vpop.f32.mrf.mxu0
        %v663 = vadd.f32 0.0, %v662
        %v664 = vpop.f32.mrf.mxu0
        %665 = vmatprep.mubr.bf16.mxu0 0
        %666 = vmatmul.mubr.bf16.gmra.mxu0 %v592
        %v667 = vpop.f32.mrf.mxu0
        %v668 = vadd.f32 0.0, %v667
        %v669 = vpop.f32.mrf.mxu0
        %v670 = vpop.f32.mrf.mxu0
        %v671 = vadd.f32 0.0, %v670
        %v672 = vpop.f32.mrf.mxu0
        %673 = vmatprep.mubr.bf16.mxu0 0
        %674 = vmatmul.mubr.bf16.gmra.mxu0 %v595
        %v675 = vpop.f32.mrf.mxu0
        %v676 = vadd.f32 0.0, %v675
        %v677 = vpop.f32.mrf.mxu0
        %v678 = vpop.f32.mrf.mxu0
        %v679 = vadd.f32 0.0, %v678
        %v680 = vpop.f32.mrf.mxu0
        %681 = vmatprep.mubr.bf16.mxu0 0
        %682 = vmatmul.mubr.bf16.gmra.mxu0 %v598
        %v683 = vpop.f32.mrf.mxu0
        %v684 = vadd.f32 0.0, %v683
        %v685 = vpop.f32.mrf.mxu0
        %v686 = vpop.f32.mrf.mxu0
        %v687 = vadd.f32 0.0, %v686
        %v688 = vpop.f32.mrf.mxu0
        %689 = vmatprep.mubr.bf16.mxu0 0
        %690 = vmatmul.mubr.bf16.gmra.mxu0 %v601
        %v691 = vpop.f32.mrf.mxu0
        %v692 = vadd.f32 0.0, %v691
        %v693 = vpop.f32.mrf.mxu0
        %v694 = vpop.f32.mrf.mxu0
        %v695 = vadd.f32 0.0, %v694
        %v696 = vpop.f32.mrf.mxu0
        %697 = vmatprep.mubr.bf16.mxu0 0
        %698 = vmatmul.mubr.bf16.gmra.mxu0 %v604
        %v699 = vpop.f32.mrf.mxu0
        %v700 = vadd.f32 0.0, %v699
        %v701 = vpop.f32.mrf.mxu0
        %v702 = vpop.f32.mrf.mxu0
        %v703 = vadd.f32 0.0, %v702
        %v704 = vpop.f32.mrf.mxu0
        %705 = vmatprep.mubr.bf16.mxu0 0
        %706 = vmatmul.mubr.bf16.gmra.mxu0 %v607
        %v707 = vpop.f32.mrf.mxu0
        %v708 = vadd.f32 0.0, %v707
        %v709 = vpop.f32.mrf.mxu0
        %v710 = vpop.f32.mrf.mxu0
        %v711 = vadd.f32 0.0, %v710
        %v712 = vpop.f32.mrf.mxu0
        %713 = vdwg.mxu0
        %s714 = scalar_lea.vmem %s473, 72 [#allocation2]
        %v715 = vld [vmem:[%s714] sm:$0xf]
        %v716 = vld [vmem:[%s714 + $0x4] sm:$0xf]
        %v717 = vld [vmem:[%s714 + $0x8] sm:$0xf]
        %v718 = vld [vmem:[%s714 + $0xc] sm:$0xf]
        %v719 = vld [vmem:[%s714 + $0x10] sm:$0xf]
        %v720 = vld [vmem:[%s714 + $0x14] sm:$0xf]
        %v721 = vld [vmem:[%s714 + $0x18] sm:$0xf]
        %v722 = vld [vmem:[%s714 + $0x1c] sm:$0xf]
        %v723 = vld [vmem:[%s714 + $0x20] sm:$0xf]
        %v724 = vld [vmem:[%s714 + $0x24] sm:$0xf]
        %v725 = vld [vmem:[%s714 + $0x28] sm:$0xf]
        %v726 = vld [vmem:[%s714 + $0x2c] sm:$0xf]
        %v727 = vld [vmem:[%s714 + $0x30] sm:$0xf]
        %v728 = vld [vmem:[%s714 + $0x34] sm:$0xf]
        %v729 = vld [vmem:[%s714 + $0x38] sm:$0xf]
        %v730 = vld [vmem:[%s714 + $0x3c] sm:$0xf]
        %v731 = vld [vmem:[%s714 + $0x40] sm:$0xf]
        %v732 = vld [vmem:[%s714 + $0x44] sm:$0xf]
        %v751 = vunpack.c.l.b16 %v715
        %v752 = vunpack.c.l.b16 %v716
        %v753 = vunpack.c.l.b16 %v717
        %v754 = vunpack.c.l.b16 %v718
        %v755 = vunpack.c.l.b16 %v719
        %v756 = vunpack.c.l.b16 %v720
        %v757 = vunpack.c.l.b16 %v721
        %v758 = vunpack.c.l.b16 %v722
        %v759 = vunpack.c.l.b16 %v723
        %v760 = vunpack.c.l.b16 %v724
        %v761 = vunpack.c.l.b16 %v725
        %v762 = vunpack.c.l.b16 %v726
        %v763 = vunpack.c.l.b16 %v727
        %v764 = vunpack.c.l.b16 %v728
        %v765 = vunpack.c.l.b16 %v729
        %v766 = vunpack.c.l.b16 %v730
        %v767 = vunpack.c.l.b16 %v731
        %v768 = vunpack.c.l.b16 %v732
        %v769 = vpack.c.b16 %v752, %v751
        %v770 = vpack.c.b16 %v754, %v753
        %v771 = vpack.c.b16 %v756, %v755
        %v772 = vpack.c.b16 %v758, %v757
        %v773 = vpack.c.b16 %v760, %v759
        %v774 = vpack.c.b16 %v762, %v761
        %v775 = vpack.c.b16 %v764, %v763
        %v776 = vpack.c.b16 %v766, %v765
        %v777 = vpack.c.b16 %v768, %v767
        %v779 = vsel %vm581, %v769, 0
        %v782 = vsel %vm581, %v770, 0
        %v785 = vsel %vm581, %v771, 0
        %v788 = vsel %vm581, %v772, 0
        %v791 = vsel %vm581, %v773, 0
        %v794 = vsel %vm581, %v774, 0
        %v797 = vsel %vm581, %v775, 0
        %v800 = vsel %vm581, %v776, 0
        %v803 = vsel %vm581, %v777, 0
        %805 = vmatprep.subr.bf16.mxu0 0
        %806 = vmatpush1.bf16.msra.mxu0 0
        %807 = vmatprep.subr.bf16.mxu0 0
        %808 = vmatpush1.bf16.msra.mxu0 0
        %809 = vmatprep.subr.bf16.mxu0 0
        %810 = vmatpush1.bf16.msra.mxu0 0
        %811 = vmatprep.subr.bf16.mxu0 0
        %812 = vmatpush1.bf16.msra.mxu0 0
        %813 = vmatprep.subr.bf16.mxu0 0
        %814 = vmatpush1.bf16.msra.mxu0 0
        %815 = vmatprep.subr.bf16.mxu0 0
        %816 = vmatpush1.bf16.msra.mxu0 0
        %817 = vmatprep.subr.bf16.mxu0 0
        %818 = vmatpush1.bf16.msra.mxu0 %v578
        %819 = vmatprep.subr.bf16.mxu0 0
        %820 = vmatpush1.bf16.msra.mxu0 %v577
        %821 = vmatprep.subr.bf16.mxu0 0
        %822 = vmatpush2.bf16.msra.mxu0 0
        %823 = vmatprep.subr.bf16.mxu0 0
        %824 = vmatpush2.bf16.msra.mxu0 0
        %825 = vmatprep.subr.bf16.mxu0 0
        %826 = vmatpush2.bf16.msra.mxu0 0
        %827 = vmatprep.subr.bf16.mxu0 0
        %828 = vmatpush2.bf16.msra.mxu0 0
        %829 = vmatprep.subr.bf16.mxu0 0
        %830 = vmatpush2.bf16.msra.mxu0 0
        %831 = vmatprep.subr.bf16.mxu0 0
        %832 = vmatpush2.bf16.msra.mxu0 0
        %833 = vmatprep.subr.bf16.mxu0 0
        %834 = vmatpush2.bf16.msra.mxu0 0
        %835 = vmatprep.subr.bf16.mxu0 0
        %836 = vmatpush2.bf16.msra.mxu0 0
        %837 = vmatprep.mubr.bf16.mxu0 0
        %838 = vmatmul.mubr.bf16.gmra.mxu0 %v779
        %v839 = vpop.f32.mrf.mxu0
        %v840 = vadd.f32 0.0, %v839
        %v841 = vpop.f32.mrf.mxu0
        %v842 = vpop.f32.mrf.mxu0
        %v843 = vadd.f32 0.0, %v842
        %v844 = vpop.f32.mrf.mxu0
        %845 = vmatprep.mubr.bf16.mxu0 0
        %846 = vmatmul.mubr.bf16.gmra.mxu0 %v782
        %v847 = vpop.f32.mrf.mxu0
        %v848 = vadd.f32 0.0, %v847
        %v849 = vpop.f32.mrf.mxu0
        %v850 = vpop.f32.mrf.mxu0
        %v851 = vadd.f32 0.0, %v850
        %v852 = vpop.f32.mrf.mxu0
        %853 = vmatprep.mubr.bf16.mxu0 0
        %854 = vmatmul.mubr.bf16.gmra.mxu0 %v785
        %v855 = vpop.f32.mrf.mxu0
        %v856 = vadd.f32 0.0, %v855
        %v857 = vpop.f32.mrf.mxu0
        %v858 = vpop.f32.mrf.mxu0
        %v859 = vadd.f32 0.0, %v858
        %v860 = vpop.f32.mrf.mxu0
        %861 = vmatprep.mubr.bf16.mxu0 0
        %862 = vmatmul.mubr.bf16.gmra.mxu0 %v788
        %v863 = vpop.f32.mrf.mxu0
        %v864 = vadd.f32 0.0, %v863
        %v865 = vpop.f32.mrf.mxu0
        %v866 = vpop.f32.mrf.mxu0
        %v867 = vadd.f32 0.0, %v866
        %v868 = vpop.f32.mrf.mxu0
        %869 = vmatprep.mubr.bf16.mxu0 0
        %870 = vmatmul.mubr.bf16.gmra.mxu0 %v791
        %v871 = vpop.f32.mrf.mxu0
        %v872 = vadd.f32 0.0, %v871
        %v873 = vpop.f32.mrf.mxu0
        %v874 = vpop.f32.mrf.mxu0
        %v875 = vadd.f32 0.0, %v874
        %v876 = vpop.f32.mrf.mxu0
        %877 = vmatprep.mubr.bf16.mxu0 0
        %878 = vmatmul.mubr.bf16.gmra.mxu0 %v794
        %v879 = vpop.f32.mrf.mxu0
        %v880 = vadd.f32 0.0, %v879
        %v881 = vpop.f32.mrf.mxu0
        %v882 = vpop.f32.mrf.mxu0
        %v883 = vadd.f32 0.0, %v882
        %v884 = vpop.f32.mrf.mxu0
        %885 = vmatprep.mubr.bf16.mxu0 0
        %886 = vmatmul.mubr.bf16.gmra.mxu0 %v797
        %v887 = vpop.f32.mrf.mxu0
        %v888 = vadd.f32 0.0, %v887
        %v889 = vpop.f32.mrf.mxu0
        %v890 = vpop.f32.mrf.mxu0
        %v891 = vadd.f32 0.0, %v890
        %v892 = vpop.f32.mrf.mxu0
        %893 = vmatprep.mubr.bf16.mxu0 0
        %894 = vmatmul.mubr.bf16.gmra.mxu0 %v800
        %v895 = vpop.f32.mrf.mxu0
        %v896 = vadd.f32 0.0, %v895
        %v897 = vpop.f32.mrf.mxu0
        %v898 = vpop.f32.mrf.mxu0
        %v899 = vadd.f32 0.0, %v898
        %v900 = vpop.f32.mrf.mxu0
        %901 = vmatprep.mubr.bf16.mxu0 0
        %902 = vmatmul.mubr.bf16.gmra.mxu0 %v803
        %v903 = vpop.f32.mrf.mxu0
        %v904 = vadd.f32 0.0, %v903
        %v905 = vpop.f32.mrf.mxu0
        %v906 = vpop.f32.mrf.mxu0
        %v907 = vadd.f32 0.0, %v906
        %v908 = vpop.f32.mrf.mxu0
        %909 = vdwg.mxu0
        %v910 = vmax.f32 %v644, %v840
        %v911 = vmax.f32 %v647, %v843
        %v912 = vmax.f32 %v652, %v848
        %v913 = vmax.f32 %v655, %v851
        %v914 = vmax.f32 %v660, %v856
        %v915 = vmax.f32 %v663, %v859
        %v916 = vmax.f32 %v668, %v864
        %v917 = vmax.f32 %v671, %v867
        %v918 = vmax.f32 %v676, %v872
        %v919 = vmax.f32 %v679, %v875
        %v920 = vmax.f32 %v684, %v880
        %v921 = vmax.f32 %v687, %v883
        %v922 = vmax.f32 %v692, %v888
        %v923 = vmax.f32 %v695, %v891
        %v924 = vmax.f32 %v700, %v896
        %v925 = vmax.f32 %v703, %v899
        %v926 = vmax.f32 %v708, %v904
        %v927 = vmax.f32 %v711, %v907
        %s928 = scalar_lea.vmem %s473, 144 [#allocation2]
        %v929 = vld [vmem:[%s928] sm:$0xf]
        %v930 = vld [vmem:[%s928 + $0x4] sm:$0xf]
        %v931 = vld [vmem:[%s928 + $0x8] sm:$0xf]
        %v932 = vld [vmem:[%s928 + $0xc] sm:$0xf]
        %v933 = vld [vmem:[%s928 + $0x10] sm:$0xf]
        %v934 = vld [vmem:[%s928 + $0x14] sm:$0xf]
        %v935 = vld [vmem:[%s928 + $0x18] sm:$0xf]
        %v936 = vld [vmem:[%s928 + $0x1c] sm:$0xf]
        %v937 = vld [vmem:[%s928 + $0x20] sm:$0xf]
        %v938 = vld [vmem:[%s928 + $0x24] sm:$0xf]
        %v939 = vld [vmem:[%s928 + $0x28] sm:$0xf]
        %v940 = vld [vmem:[%s928 + $0x2c] sm:$0xf]
        %v941 = vld [vmem:[%s928 + $0x30] sm:$0xf]
        %v942 = vld [vmem:[%s928 + $0x34] sm:$0xf]
        %v943 = vld [vmem:[%s928 + $0x38] sm:$0xf]
        %v944 = vld [vmem:[%s928 + $0x3c] sm:$0xf]
        %v945 = vld [vmem:[%s928 + $0x40] sm:$0xf]
        %v946 = vld [vmem:[%s928 + $0x44] sm:$0xf]
        %v965 = vunpack.c.l.b16 %v929
        %v966 = vunpack.c.l.b16 %v930
        %v967 = vunpack.c.l.b16 %v931
        %v968 = vunpack.c.l.b16 %v932
        %v969 = vunpack.c.l.b16 %v933
        %v970 = vunpack.c.l.b16 %v934
        %v971 = vunpack.c.l.b16 %v935
        %v972 = vunpack.c.l.b16 %v936
        %v973 = vunpack.c.l.b16 %v937
        %v974 = vunpack.c.l.b16 %v938
        %v975 = vunpack.c.l.b16 %v939
        %v976 = vunpack.c.l.b16 %v940
        %v977 = vunpack.c.l.b16 %v941
        %v978 = vunpack.c.l.b16 %v942
        %v979 = vunpack.c.l.b16 %v943
        %v980 = vunpack.c.l.b16 %v944
        %v981 = vunpack.c.l.b16 %v945
        %v982 = vunpack.c.l.b16 %v946
        %v983 = vpack.c.b16 %v966, %v965
        %v984 = vpack.c.b16 %v968, %v967
        %v985 = vpack.c.b16 %v970, %v969
        %v986 = vpack.c.b16 %v972, %v971
        %v987 = vpack.c.b16 %v974, %v973
        %v988 = vpack.c.b16 %v976, %v975
        %v989 = vpack.c.b16 %v978, %v977
        %v990 = vpack.c.b16 %v980, %v979
        %v991 = vpack.c.b16 %v982, %v981
        %v993 = vsel %vm581, %v983, 0
        %v996 = vsel %vm581, %v984, 0
        %v999 = vsel %vm581, %v985, 0
        %v1002 = vsel %vm581, %v986, 0
        %v1005 = vsel %vm581, %v987, 0
        %v1008 = vsel %vm581, %v988, 0
        %v1011 = vsel %vm581, %v989, 0
        %v1014 = vsel %vm581, %v990, 0
        %v1017 = vsel %vm581, %v991, 0
        %1019 = vmatprep.subr.bf16.mxu0 0
        %1020 = vmatpush1.bf16.msra.mxu0 0
        %1021 = vmatprep.subr.bf16.mxu0 0
        %1022 = vmatpush1.bf16.msra.mxu0 0
        %1023 = vmatprep.subr.bf16.mxu0 0
        %1024 = vmatpush1.bf16.msra.mxu0 0
        %1025 = vmatprep.subr.bf16.mxu0 0
        %1026 = vmatpush1.bf16.msra.mxu0 0
        %1027 = vmatprep.subr.bf16.mxu0 0
        %1028 = vmatpush1.bf16.msra.mxu0 0
        %1029 = vmatprep.subr.bf16.mxu0 0
        %1030 = vmatpush1.bf16.msra.mxu0 0
        %1031 = vmatprep.subr.bf16.mxu0 0
        %1032 = vmatpush1.bf16.msra.mxu0 %v578
        %1033 = vmatprep.subr.bf16.mxu0 0
        %1034 = vmatpush1.bf16.msra.mxu0 %v577
        %1035 = vmatprep.subr.bf16.mxu0 0
        %1036 = vmatpush2.bf16.msra.mxu0 0
        %1037 = vmatprep.subr.bf16.mxu0 0
        %1038 = vmatpush2.bf16.msra.mxu0 0
        %1039 = vmatprep.subr.bf16.mxu0 0
        %1040 = vmatpush2.bf16.msra.mxu0 0
        %1041 = vmatprep.subr.bf16.mxu0 0
        %1042 = vmatpush2.bf16.msra.mxu0 0
        %1043 = vmatprep.subr.bf16.mxu0 0
        %1044 = vmatpush2.bf16.msra.mxu0 0
        %1045 = vmatprep.subr.bf16.mxu0 0
        %1046 = vmatpush2.bf16.msra.mxu0 0
        %1047 = vmatprep.subr.bf16.mxu0 0
        %1048 = vmatpush2.bf16.msra.mxu0 0
        %1049 = vmatprep.subr.bf16.mxu0 0
        %1050 = vmatpush2.bf16.msra.mxu0 0
        %1051 = vmatprep.mubr.bf16.mxu0 0
        %1052 = vmatmul.mubr.bf16.gmra.mxu0 %v993
        %v1053 = vpop.f32.mrf.mxu0
        %v1054 = vadd.f32 0.0, %v1053
        %v1055 = vpop.f32.mrf.mxu0
        %v1056 = vpop.f32.mrf.mxu0
        %v1057 = vadd.f32 0.0, %v1056
        %v1058 = vpop.f32.mrf.mxu0
        %1059 = vmatprep.mubr.bf16.mxu0 0
        %1060 = vmatmul.mubr.bf16.gmra.mxu0 %v996
        %v1061 = vpop.f32.mrf.mxu0
        %v1062 = vadd.f32 0.0, %v1061
        %v1063 = vpop.f32.mrf.mxu0
        %v1064 = vpop.f32.mrf.mxu0
        %v1065 = vadd.f32 0.0, %v1064
        %v1066 = vpop.f32.mrf.mxu0
        %1067 = vmatprep.mubr.bf16.mxu0 0
        %1068 = vmatmul.mubr.bf16.gmra.mxu0 %v999
        %v1069 = vpop.f32.mrf.mxu0
        %v1070 = vadd.f32 0.0, %v1069
        %v1071 = vpop.f32.mrf.mxu0
        %v1072 = vpop.f32.mrf.mxu0
        %v1073 = vadd.f32 0.0, %v1072
        %v1074 = vpop.f32.mrf.mxu0
        %1075 = vmatprep.mubr.bf16.mxu0 0
        %1076 = vmatmul.mubr.bf16.gmra.mxu0 %v1002
        %v1077 = vpop.f32.mrf.mxu0
        %v1078 = vadd.f32 0.0, %v1077
        %v1079 = vpop.f32.mrf.mxu0
        %v1080 = vpop.f32.mrf.mxu0
        %v1081 = vadd.f32 0.0, %v1080
        %v1082 = vpop.f32.mrf.mxu0
        %1083 = vmatprep.mubr.bf16.mxu0 0
        %1084 = vmatmul.mubr.bf16.gmra.mxu0 %v1005
        %v1085 = vpop.f32.mrf.mxu0
        %v1086 = vadd.f32 0.0, %v1085
        %v1087 = vpop.f32.mrf.mxu0
        %v1088 = vpop.f32.mrf.mxu0
        %v1089 = vadd.f32 0.0, %v1088
        %v1090 = vpop.f32.mrf.mxu0
        %1091 = vmatprep.mubr.bf16.mxu0 0
        %1092 = vmatmul.mubr.bf16.gmra.mxu0 %v1008
        %v1093 = vpop.f32.mrf.mxu0
        %v1094 = vadd.f32 0.0, %v1093
        %v1095 = vpop.f32.mrf.mxu0
        %v1096 = vpop.f32.mrf.mxu0
        %v1097 = vadd.f32 0.0, %v1096
        %v1098 = vpop.f32.mrf.mxu0
        %1099 = vmatprep.mubr.bf16.mxu0 0
        %1100 = vmatmul.mubr.bf16.gmra.mxu0 %v1011
        %v1101 = vpop.f32.mrf.mxu0
        %v1102 = vadd.f32 0.0, %v1101
        %v1103 = vpop.f32.mrf.mxu0
        %v1104 = vpop.f32.mrf.mxu0
        %v1105 = vadd.f32 0.0, %v1104
        %v1106 = vpop.f32.mrf.mxu0
        %1107 = vmatprep.mubr.bf16.mxu0 0
        %1108 = vmatmul.mubr.bf16.gmra.mxu0 %v1014
        %v1109 = vpop.f32.mrf.mxu0
        %v1110 = vadd.f32 0.0, %v1109
        %v1111 = vpop.f32.mrf.mxu0
        %v1112 = vpop.f32.mrf.mxu0
        %v1113 = vadd.f32 0.0, %v1112
        %v1114 = vpop.f32.mrf.mxu0
        %1115 = vmatprep.mubr.bf16.mxu0 0
        %1116 = vmatmul.mubr.bf16.gmra.mxu0 %v1017
        %v1117 = vpop.f32.mrf.mxu0
        %v1118 = vadd.f32 0.0, %v1117
        %v1119 = vpop.f32.mrf.mxu0
        %v1120 = vpop.f32.mrf.mxu0
        %v1121 = vadd.f32 0.0, %v1120
        %v1122 = vpop.f32.mrf.mxu0
        %1123 = vdwg.mxu0
        %v1124 = vmax.f32 %v910, %v1054
        %v1125 = vmax.f32 %v911, %v1057
        %v1126 = vmax.f32 %v912, %v1062
        %v1127 = vmax.f32 %v913, %v1065
        %v1128 = vmax.f32 %v914, %v1070
        %v1129 = vmax.f32 %v915, %v1073
        %v1130 = vmax.f32 %v916, %v1078
        %v1131 = vmax.f32 %v917, %v1081
        %v1132 = vmax.f32 %v918, %v1086
        %v1133 = vmax.f32 %v919, %v1089
        %v1134 = vmax.f32 %v920, %v1094
        %v1135 = vmax.f32 %v921, %v1097
        %v1136 = vmax.f32 %v922, %v1102
        %v1137 = vmax.f32 %v923, %v1105
        %v1138 = vmax.f32 %v924, %v1110
        %v1139 = vmax.f32 %v925, %v1113
        %v1140 = vmax.f32 %v926, %v1118
        %v1141 = vmax.f32 %v927, %v1121
        %s1142 = scalar_lea.vmem %s473, 216 [#allocation2]
        %v1143 = vld [vmem:[%s1142] sm:$0xf]
        %v1144 = vld [vmem:[%s1142 + $0x4] sm:$0xf]
        %v1145 = vld [vmem:[%s1142 + $0x8] sm:$0xf]
        %v1146 = vld [vmem:[%s1142 + $0xc] sm:$0xf]
        %v1147 = vld [vmem:[%s1142 + $0x10] sm:$0xf]
        %v1148 = vld [vmem:[%s1142 + $0x14] sm:$0xf]
        %v1149 = vld [vmem:[%s1142 + $0x18] sm:$0xf]
        %v1150 = vld [vmem:[%s1142 + $0x1c] sm:$0xf]
        %v1151 = vld [vmem:[%s1142 + $0x20] sm:$0xf]
        %v1152 = vld [vmem:[%s1142 + $0x24] sm:$0xf]
        %v1153 = vld [vmem:[%s1142 + $0x28] sm:$0xf]
        %v1154 = vld [vmem:[%s1142 + $0x2c] sm:$0xf]
        %v1155 = vld [vmem:[%s1142 + $0x30] sm:$0xf]
        %v1156 = vld [vmem:[%s1142 + $0x34] sm:$0xf]
        %v1157 = vld [vmem:[%s1142 + $0x38] sm:$0xf]
        %v1158 = vld [vmem:[%s1142 + $0x3c] sm:$0xf]
        %v1159 = vld [vmem:[%s1142 + $0x40] sm:$0xf]
        %v1160 = vld [vmem:[%s1142 + $0x44] sm:$0xf]
        %v1179 = vunpack.c.l.b16 %v1143
        %v1180 = vunpack.c.l.b16 %v1144
        %v1181 = vunpack.c.l.b16 %v1145
        %v1182 = vunpack.c.l.b16 %v1146
        %v1183 = vunpack.c.l.b16 %v1147
        %v1184 = vunpack.c.l.b16 %v1148
        %v1185 = vunpack.c.l.b16 %v1149
        %v1186 = vunpack.c.l.b16 %v1150
        %v1187 = vunpack.c.l.b16 %v1151
        %v1188 = vunpack.c.l.b16 %v1152
        %v1189 = vunpack.c.l.b16 %v1153
        %v1190 = vunpack.c.l.b16 %v1154
        %v1191 = vunpack.c.l.b16 %v1155
        %v1192 = vunpack.c.l.b16 %v1156
        %v1193 = vunpack.c.l.b16 %v1157
        %v1194 = vunpack.c.l.b16 %v1158
        %v1195 = vunpack.c.l.b16 %v1159
        %v1196 = vunpack.c.l.b16 %v1160
        %v1197 = vpack.c.b16 %v1180, %v1179
        %v1198 = vpack.c.b16 %v1182, %v1181
        %v1199 = vpack.c.b16 %v1184, %v1183
        %v1200 = vpack.c.b16 %v1186, %v1185
        %v1201 = vpack.c.b16 %v1188, %v1187
        %v1202 = vpack.c.b16 %v1190, %v1189
        %v1203 = vpack.c.b16 %v1192, %v1191
        %v1204 = vpack.c.b16 %v1194, %v1193
        %v1205 = vpack.c.b16 %v1196, %v1195
        %v1207 = vsel %vm581, %v1197, 0
        %v1210 = vsel %vm581, %v1198, 0
        %v1213 = vsel %vm581, %v1199, 0
        %v1216 = vsel %vm581, %v1200, 0
        %v1219 = vsel %vm581, %v1201, 0
        %v1222 = vsel %vm581, %v1202, 0
        %v1225 = vsel %vm581, %v1203, 0
        %v1228 = vsel %vm581, %v1204, 0
        %v1231 = vsel %vm581, %v1205, 0
        %1233 = vmatprep.subr.bf16.mxu0 0
        %1234 = vmatpush1.bf16.msra.mxu0 0
        %1235 = vmatprep.subr.bf16.mxu0 0
        %1236 = vmatpush1.bf16.msra.mxu0 0
        %1237 = vmatprep.subr.bf16.mxu0 0
        %1238 = vmatpush1.bf16.msra.mxu0 0
        %1239 = vmatprep.subr.bf16.mxu0 0
        %1240 = vmatpush1.bf16.msra.mxu0 0
        %1241 = vmatprep.subr.bf16.mxu0 0
        %1242 = vmatpush1.bf16.msra.mxu0 0
        %1243 = vmatprep.subr.bf16.mxu0 0
        %1244 = vmatpush1.bf16.msra.mxu0 0
        %1245 = vmatprep.subr.bf16.mxu0 0
        %1246 = vmatpush1.bf16.msra.mxu0 %v578
        %1247 = vmatprep.subr.bf16.mxu0 0
        %1248 = vmatpush1.bf16.msra.mxu0 %v577
        %1249 = vmatprep.subr.bf16.mxu0 0
        %1250 = vmatpush2.bf16.msra.mxu0 0
        %1251 = vmatprep.subr.bf16.mxu0 0
        %1252 = vmatpush2.bf16.msra.mxu0 0
        %1253 = vmatprep.subr.bf16.mxu0 0
        %1254 = vmatpush2.bf16.msra.mxu0 0
        %1255 = vmatprep.subr.bf16.mxu0 0
        %1256 = vmatpush2.bf16.msra.mxu0 0
        %1257 = vmatprep.subr.bf16.mxu0 0
        %1258 = vmatpush2.bf16.msra.mxu0 0
        %1259 = vmatprep.subr.bf16.mxu0 0
        %1260 = vmatpush2.bf16.msra.mxu0 0
        %1261 = vmatprep.subr.bf16.mxu0 0
        %1262 = vmatpush2.bf16.msra.mxu0 0
        %1263 = vmatprep.subr.bf16.mxu0 0
        %1264 = vmatpush2.bf16.msra.mxu0 0
        %1265 = vmatprep.mubr.bf16.mxu0 0
        %1266 = vmatmul.mubr.bf16.gmra.mxu0 %v1207
        %v1267 = vpop.f32.mrf.mxu0
        %v1268 = vadd.f32 0.0, %v1267
        %v1269 = vpop.f32.mrf.mxu0
        %v1270 = vpop.f32.mrf.mxu0
        %v1271 = vadd.f32 0.0, %v1270
        %v1272 = vpop.f32.mrf.mxu0
        %1273 = vmatprep.mubr.bf16.mxu0 0
        %1274 = vmatmul.mubr.bf16.gmra.mxu0 %v1210
        %v1275 = vpop.f32.mrf.mxu0
        %v1276 = vadd.f32 0.0, %v1275
        %v1277 = vpop.f32.mrf.mxu0
        %v1278 = vpop.f32.mrf.mxu0
        %v1279 = vadd.f32 0.0, %v1278
        %v1280 = vpop.f32.mrf.mxu0
        %1281 = vmatprep.mubr.bf16.mxu0 0
        %1282 = vmatmul.mubr.bf16.gmra.mxu0 %v1213
        %v1283 = vpop.f32.mrf.mxu0
        %v1284 = vadd.f32 0.0, %v1283
        %v1285 = vpop.f32.mrf.mxu0
        %v1286 = vpop.f32.mrf.mxu0
        %v1287 = vadd.f32 0.0, %v1286
        %v1288 = vpop.f32.mrf.mxu0
        %1289 = vmatprep.mubr.bf16.mxu0 0
        %1290 = vmatmul.mubr.bf16.gmra.mxu0 %v1216
        %v1291 = vpop.f32.mrf.mxu0
        %v1292 = vadd.f32 0.0, %v1291
        %v1293 = vpop.f32.mrf.mxu0
        %v1294 = vpop.f32.mrf.mxu0
        %v1295 = vadd.f32 0.0, %v1294
        %v1296 = vpop.f32.mrf.mxu0
        %1297 = vmatprep.mubr.bf16.mxu0 0
        %1298 = vmatmul.mubr.bf16.gmra.mxu0 %v1219
        %v1299 = vpop.f32.mrf.mxu0
        %v1300 = vadd.f32 0.0, %v1299
        %v1301 = vpop.f32.mrf.mxu0
        %v1302 = vpop.f32.mrf.mxu0
        %v1303 = vadd.f32 0.0, %v1302
        %v1304 = vpop.f32.mrf.mxu0
        %1305 = vmatprep.mubr.bf16.mxu0 0
        %1306 = vmatmul.mubr.bf16.gmra.mxu0 %v1222
        %v1307 = vpop.f32.mrf.mxu0
        %v1308 = vadd.f32 0.0, %v1307
        %v1309 = vpop.f32.mrf.mxu0
        %v1310 = vpop.f32.mrf.mxu0
        %v1311 = vadd.f32 0.0, %v1310
        %v1312 = vpop.f32.mrf.mxu0
        %1313 = vmatprep.mubr.bf16.mxu0 0
        %1314 = vmatmul.mubr.bf16.gmra.mxu0 %v1225
        %v1315 = vpop.f32.mrf.mxu0
        %v1316 = vadd.f32 0.0, %v1315
        %v1317 = vpop.f32.mrf.mxu0
        %v1318 = vpop.f32.mrf.mxu0
        %v1319 = vadd.f32 0.0, %v1318
        %v1320 = vpop.f32.mrf.mxu0
        %1321 = vmatprep.mubr.bf16.mxu0 0
        %1322 = vmatmul.mubr.bf16.gmra.mxu0 %v1228
        %v1323 = vpop.f32.mrf.mxu0
        %v1324 = vadd.f32 0.0, %v1323
        %v1325 = vpop.f32.mrf.mxu0
        %v1326 = vpop.f32.mrf.mxu0
        %v1327 = vadd.f32 0.0, %v1326
        %v1328 = vpop.f32.mrf.mxu0
        %1329 = vmatprep.mubr.bf16.mxu0 0
        %1330 = vmatmul.mubr.bf16.gmra.mxu0 %v1231
        %v1331 = vpop.f32.mrf.mxu0
        %v1332 = vadd.f32 0.0, %v1331
        %v1333 = vpop.f32.mrf.mxu0
        %v1334 = vpop.f32.mrf.mxu0
        %v1335 = vadd.f32 0.0, %v1334
        %v1336 = vpop.f32.mrf.mxu0
        %1337 = vdwg.mxu0
        %v1338 = vmax.f32 %v1124, %v1268
        %v1339 = vmax.f32 %v1125, %v1271
        %v1340 = vmax.f32 %v1126, %v1276
        %v1341 = vmax.f32 %v1127, %v1279
        %v1342 = vmax.f32 %v1128, %v1284
        %v1343 = vmax.f32 %v1129, %v1287
        %v1344 = vmax.f32 %v1130, %v1292
        %v1345 = vmax.f32 %v1131, %v1295
        %v1346 = vmax.f32 %v1132, %v1300
        %v1347 = vmax.f32 %v1133, %v1303
        %v1348 = vmax.f32 %v1134, %v1308
        %v1349 = vmax.f32 %v1135, %v1311
        %v1350 = vmax.f32 %v1136, %v1316
        %v1351 = vmax.f32 %v1137, %v1319
        %v1352 = vmax.f32 %v1138, %v1324
        %v1353 = vmax.f32 %v1139, %v1327
        %v1354 = vmax.f32 %v1140, %v1332
        %v1355 = vmax.f32 %v1141, %v1335
        %v1356 = vld [vmem:[%s2] sm:$0x1]
        %v1358 = vlaneseq
        %v1359 = vshrl.u32 %v1358, 7
        %v1360 = vsub.s32 0, %v1359
        %v1361 = vrot.slane %v1356, %v1360
        %v1363 = vadd.f32 %v1338, %v1361
        %v1364 = vadd.f32 %v1339, %v1361
        %v1365 = vadd.f32 %v1340, %v1361
        %v1366 = vadd.f32 %v1341, %v1361
        %v1367 = vadd.f32 %v1342, %v1361
        %v1368 = vadd.f32 %v1343, %v1361
        %v1369 = vadd.f32 %v1344, %v1361
        %v1370 = vadd.f32 %v1345, %v1361
        %v1371 = vadd.f32 %v1346, %v1361
        %v1372 = vadd.f32 %v1347, %v1361
        %v1373 = vadd.f32 %v1348, %v1361
        %v1374 = vadd.f32 %v1349, %v1361
        %v1375 = vadd.f32 %v1350, %v1361
        %v1376 = vadd.f32 %v1351, %v1361
        %v1377 = vadd.f32 %v1352, %v1361
        %v1378 = vadd.f32 %v1353, %v1361
        %v1379 = vadd.f32 %v1354, %v1361
        %v1380 = vadd.f32 %v1355, %v1361
        %v1381 = vmax.f32 %v1363, 0.0
        %v1382 = vmax.f32 %v1364, 0.0
        %v1383 = vmax.f32 %v1365, 0.0
        %v1384 = vmax.f32 %v1366, 0.0
        %v1385 = vmax.f32 %v1367, 0.0
        %v1386 = vmax.f32 %v1368, 0.0
        %v1387 = vmax.f32 %v1369, 0.0
        %v1388 = vmax.f32 %v1370, 0.0
        %v1389 = vmax.f32 %v1371, 0.0
        %v1390 = vmax.f32 %v1372, 0.0
        %v1391 = vmax.f32 %v1373, 0.0
        %v1392 = vmax.f32 %v1374, 0.0
        %v1393 = vmax.f32 %v1375, 0.0
        %v1394 = vmax.f32 %v1376, 0.0
        %v1395 = vmax.f32 %v1377, 0.0
        %v1396 = vmax.f32 %v1378, 0.0
        %v1397 = vmax.f32 %v1379, 0.0
        %v1398 = vmax.f32 %v1380, 0.0
        %v1399 = vpack.c.bf16 %v1382, %v1381
        %v1400 = vpack.c.bf16 %v1384, %v1383
        %v1401 = vpack.c.bf16 %v1386, %v1385
        %v1402 = vpack.c.bf16 %v1388, %v1387
        %v1403 = vpack.c.bf16 %v1390, %v1389
        %v1404 = vpack.c.bf16 %v1392, %v1391
        %v1405 = vpack.c.bf16 %v1394, %v1393
        %v1406 = vpack.c.bf16 %v1396, %v1395
        %v1407 = vpack.c.bf16 %v1398, %v1397
        %v1417 = vunpack.c.l.b16 %v1399
        %v1418 = vunpack.c.h.b16 %v1399
        %v1419 = vunpack.c.l.b16 %v1400
        %v1420 = vunpack.c.h.b16 %v1400
        %v1421 = vunpack.c.l.b16 %v1401
        %v1422 = vunpack.c.h.b16 %v1401
        %v1423 = vunpack.c.l.b16 %v1402
        %v1424 = vunpack.c.h.b16 %v1402
        %v1425 = vunpack.c.l.b16 %v1403
        %v1426 = vunpack.c.h.b16 %v1403
        %v1427 = vunpack.c.l.b16 %v1404
        %v1428 = vunpack.c.h.b16 %v1404
        %v1429 = vunpack.c.l.b16 %v1405
        %v1430 = vunpack.c.h.b16 %v1405
        %v1431 = vunpack.c.l.b16 %v1406
        %v1432 = vunpack.c.h.b16 %v1406
        %v1433 = vunpack.c.l.b16 %v1407
        %v1434 = vunpack.c.h.b16 %v1407
        %v1435 = vpack.c.b16 %v1417, %v1417
        %v1436 = vpack.c.b16 %v1418, %v1418
        %v1437 = vpack.c.b16 %v1419, %v1419
        %v1438 = vpack.c.b16 %v1420, %v1420
        %v1439 = vpack.c.b16 %v1421, %v1421
        %v1440 = vpack.c.b16 %v1422, %v1422
        %v1441 = vpack.c.b16 %v1423, %v1423
        %v1442 = vpack.c.b16 %v1424, %v1424
        %v1443 = vpack.c.b16 %v1425, %v1425
        %v1444 = vpack.c.b16 %v1426, %v1426
        %v1445 = vpack.c.b16 %v1427, %v1427
        %v1446 = vpack.c.b16 %v1428, %v1428
        %v1447 = vpack.c.b16 %v1429, %v1429
        %v1448 = vpack.c.b16 %v1430, %v1430
        %v1449 = vpack.c.b16 %v1431, %v1431
        %v1450 = vpack.c.b16 %v1432, %v1432
        %v1451 = vpack.c.b16 %v1433, %v1433
        %v1452 = vpack.c.b16 %v1434, %v1434
        %vm1471 = vcmask 519168
        %1472 = vst.msk [vmem:[%s499] sm:$0xf] %vm1471, %v1435
        %1473 = vst.msk [vmem:[%s499 + $0x4] sm:$0xf] %vm1471, %v1436
        %1474 = vst.msk [vmem:[%s499 + $0x8] sm:$0xf] %vm1471, %v1437
        %1475 = vst.msk [vmem:[%s499 + $0xc] sm:$0xf] %vm1471, %v1438
        %1476 = vst.msk [vmem:[%s499 + $0x10] sm:$0xf] %vm1471, %v1439
        %1477 = vst.msk [vmem:[%s499 + $0x14] sm:$0xf] %vm1471, %v1440
        %1478 = vst.msk [vmem:[%s499 + $0x18] sm:$0xf] %vm1471, %v1441
        %1479 = vst.msk [vmem:[%s499 + $0x1c] sm:$0xf] %vm1471, %v1442
        %1480 = vst.msk [vmem:[%s499 + $0x20] sm:$0xf] %vm1471, %v1443
        %1481 = vst.msk [vmem:[%s499 + $0x24] sm:$0xf] %vm1471, %v1444
        %1482 = vst.msk [vmem:[%s499 + $0x28] sm:$0xf] %vm1471, %v1445
        %1483 = vst.msk [vmem:[%s499 + $0x2c] sm:$0xf] %vm1471, %v1446
        %1484 = vst.msk [vmem:[%s499 + $0x30] sm:$0xf] %vm1471, %v1447
        %1485 = vst.msk [vmem:[%s499 + $0x34] sm:$0xf] %vm1471, %v1448
        %1486 = vst.msk [vmem:[%s499 + $0x38] sm:$0xf] %vm1471, %v1449
        %1487 = vst.msk [vmem:[%s499 + $0x3c] sm:$0xf] %vm1471, %v1450
        %1488 = vst.msk [vmem:[%s499 + $0x40] sm:$0xf] %vm1471, %v1451
        %1489 = vst.msk [vmem:[%s499 + $0x44] sm:$0xf] %vm1471, %v1452
        %s1490 = smul.u32 18, %s14
        %p1491 = scmp.lt.s32.totalorder %s1490, 35
        %s1492 = scalar_select %p1491, %s1490, 35
        %s1493 = smul.addr %s1492, 4
        %s1494 = scalar_lea.vmem %s3, %s1493
        // Predicated region
        $region74: #{model_forward.3} parent=68 // pred_check
          %p1495 = pneg %p100
        $region75: #{model_forward.3} parent=68 // pred_check_branch
          %1497 = sbr.rel (%p1495) target = $region77
        $region76: #{model_forward.3} parent=68 // pred_region
          %s1498 = smul.u32 18, %s14
        $region77: #{model_forward.3} parent=68 // pred_fallthru
          _
      $region69: #{model_forward.3} parent=5 // pred_fallthru
        _
      %p1499 = scmp.le.s32.totalorder 2, %s9
      // Predicated region
      $region78: #{model_forward.3} parent=5 // pred_check
        %p1500 = pneg %p1499
      $region79: #{model_forward.3} parent=5 // pred_check_branch
        %1502 = sbr.rel (%p1500) target = $region81
      $region80: #{model_forward.3} parent=5 // pred_region
        %s1503 = ssub.s32 %s9, 2
        // Predicated region
        $region82: #{model_forward.3} parent=80 // pred_check
          %p1504 = pneg %p106
        $region83: #{model_forward.3} parent=80 // pred_check_branch
          %1506 = sbr.rel (%p1504) target = $region85
        $region84: #{model_forward.3} parent=80 // pred_region
          %s1507 = smul.u32 18, %s15
          %p1508 = scmp.lt.s32.totalorder %s1507, 35
          %s1509 = scalar_select %p1508, %s1507, 35
          %s1510 = smul.addr %s1509, 4
          %s1511 = scalar_lea.vmem %s3, %s1510
        $region85: #{model_forward.3} parent=80 // pred_fallthru
          _
      $region81: #{model_forward.3} parent=5 // pred_fallthru
        _
    $region6: #{model_forward.3} parent=1 // loop_footer
      %s13 = sadd.s32 1, %s9
    $region7: #{model_forward.3} parent=1 // loop_footer_branch
      %8 = sbr.rel target = $region3
    $region8: #{model_forward.3} parent=1 // loop_exit
      _

// kernel: model_forward.5
$region0: #{model_forward.5}
  #allocation0 [shape = 'u32[]', space=smem, size = 0x4, offset = 0x4, fixed_abs, tag = 'smem constant byte address 0x4 - core index']
  #allocation1 [shape = 'u32[144,128]{1,0:T(1,128)}', space=vmem, size = 0x12000, scoped, tag = 'internal scratch']
  %s0 = inlined_call_operand.vmem [shape: bf16[8,1024], index: 0, kind: input, shape index: {}]
  %s1 = inlined_call_operand.vmem [shape: bf16[1024,128], index: 1, kind: input, shape index: {}]
  %s2 = inlined_call_operand.vmem [shape: f32[1,128], index: 2, kind: input, shape index: {}]
  %s3 = inlined_call_operand.vmem [shape: bf16[128,128], index: 3, kind: input, shape index: {}]
  %s4 = inlined_call_operand.vmem [shape: f32[1,128], index: 4, kind: input, shape index: {}]
  %s5 = inlined_call_operand.vmem [shape: bf16[128,128], index: 5, kind: input, shape index: {}]
  %s6 = inlined_call_operand.vmem [shape: f32[1,128], index: 6, kind: input, shape index: {}]
  %s7 = inlined_call_operand.vmem [shape: f32[8,128], index: 7, kind: output, shape index: {}]
  %s8 = sld [smem:[#allocation0]]
  $region38: #{model_forward.5} parent=0
    _
  %s10 = ssub.s32 1, %s8
  %s11 = scalar_select 0, %s10, %s8
  // Predicated region
  $region2: #{model_forward.5} parent=0 // pred_check
    _
  $region3: #{model_forward.5} parent=0 // pred_check_branch
    %13 = sbr.rel (0) target = $region5
  $region4: #{model_forward.5} parent=0 // pred_region
    _
  $region5: #{model_forward.5} parent=0 // pred_fallthru
    _
  // Predicated region
  $region6: #{model_forward.5} parent=0 // pred_check
    _
  $region7: #{model_forward.5} parent=0 // pred_check_branch
    %15 = sbr.rel (0) target = $region9
  $region8: #{model_forward.5} parent=0 // pred_region
    _
  $region9: #{model_forward.5} parent=0 // pred_fallthru
    _
  // Predicated region
  $region10: #{model_forward.5} parent=0 // pred_check
    _
  $region11: #{model_forward.5} parent=0 // pred_check_branch
    %17 = sbr.rel (0) target = $region13
  $region12: #{model_forward.5} parent=0 // pred_region
    _
  $region13: #{model_forward.5} parent=0 // pred_fallthru
    _
  // Predicated region
  $region14: #{model_forward.5} parent=0 // pred_check
    _
  $region15: #{model_forward.5} parent=0 // pred_check_branch
    %19 = sbr.rel (0) target = $region17
  $region16: #{model_forward.5} parent=0 // pred_region
    _
  $region17: #{model_forward.5} parent=0 // pred_fallthru
    _
  // Predicated region
  $region18: #{model_forward.5} parent=0 // pred_check
    _
  $region19: #{model_forward.5} parent=0 // pred_check_branch
    %21 = sbr.rel (0) target = $region21
  $region20: #{model_forward.5} parent=0 // pred_region
    _
  $region21: #{model_forward.5} parent=0 // pred_fallthru
    _
  // Predicated region
  $region22: #{model_forward.5} parent=0 // pred_check
    _
  $region23: #{model_forward.5} parent=0 // pred_check_branch
    %23 = sbr.rel (0) target = $region25
  $region24: #{model_forward.5} parent=0 // pred_region
    _
  $region25: #{model_forward.5} parent=0 // pred_fallthru
    _
  // Predicated region
  $region26: #{model_forward.5} parent=0 // pred_check
    _
  $region27: #{model_forward.5} parent=0 // pred_check_branch
    %25 = sbr.rel (0) target = $region29
  $region28: #{model_forward.5} parent=0 // pred_region
    _
  $region29: #{model_forward.5} parent=0 // pred_fallthru
    _
  %v27 = vld [vmem:[%s0] sm:$0xff]
  %v28 = vld [vmem:[%s0 + $0x8] sm:$0xff]
  %v29 = vld [vmem:[%s0 + $0x10] sm:$0xff]
  %v30 = vld [vmem:[%s0 + $0x18] sm:$0xff]
  %v31 = vld [vmem:[%s1] sm:$0xf]
  %v32 = vld [vmem:[%s1 + $0x4] sm:$0xf]
  %v33 = vld [vmem:[%s1 + $0x8] sm:$0xf]
  %v34 = vld [vmem:[%s1 + $0xc] sm:$0xf]
  %v35 = vld [vmem:[%s1 + $0x10] sm:$0xf]
  %v36 = vld [vmem:[%s1 + $0x14] sm:$0xf]
  %v37 = vld [vmem:[%s1 + $0x18] sm:$0xf]
  %v38 = vld [vmem:[%s1 + $0x1c] sm:$0xf]
  %v39 = vld [vmem:[%s1 + $0x20] sm:$0xf]
  %v40 = vld [vmem:[%s1 + $0x24] sm:$0xf]
  %v41 = vld [vmem:[%s1 + $0x28] sm:$0xf]
  %v42 = vld [vmem:[%s1 + $0x2c] sm:$0xf]
  %v43 = vld [vmem:[%s1 + $0x30] sm:$0xf]
  %v44 = vld [vmem:[%s1 + $0x34] sm:$0xf]
  %v45 = vld [vmem:[%s1 + $0x38] sm:$0xf]
  %v46 = vld [vmem:[%s1 + $0x3c] sm:$0xf]
  %v47 = vld [vmem:[%s1 + $0x40] sm:$0xf]
  %v48 = vld [vmem:[%s1 + $0x44] sm:$0xf]
  %v49 = vld [vmem:[%s1 + $0x48] sm:$0xf]
  %v50 = vld [vmem:[%s1 + $0x4c] sm:$0xf]
  %v51 = vld [vmem:[%s1 + $0x50] sm:$0xf]
  %v52 = vld [vmem:[%s1 + $0x54] sm:$0xf]
  %v53 = vld [vmem:[%s1 + $0x58] sm:$0xf]
  %v54 = vld [vmem:[%s1 + $0x5c] sm:$0xf]
  %v55 = vld [vmem:[%s1 + $0x60] sm:$0xf]
  %v56 = vld [vmem:[%s1 + $0x64] sm:$0xf]
  %v57 = vld [vmem:[%s1 + $0x68] sm:$0xf]
  %v58 = vld [vmem:[%s1 + $0x6c] sm:$0xf]
  %v59 = vld [vmem:[%s1 + $0x70] sm:$0xf]
  %v60 = vld [vmem:[%s1 + $0x74] sm:$0xf]
  %v61 = vld [vmem:[%s1 + $0x78] sm:$0xf]
  %v62 = vld [vmem:[%s1 + $0x7c] sm:$0xf]
  %v63 = vld [vmem:[%s1 + $0x80] sm:$0xf]
  %v64 = vld [vmem:[%s1 + $0x84] sm:$0xf]
  %v65 = vld [vmem:[%s1 + $0x88] sm:$0xf]
  %v66 = vld [vmem:[%s1 + $0x8c] sm:$0xf]
  %v67 = vld [vmem:[%s1 + $0x90] sm:$0xf]
  %v68 = vld [vmem:[%s1 + $0x94] sm:$0xf]
  %v69 = vld [vmem:[%s1 + $0x98] sm:$0xf]
  %v70 = vld [vmem:[%s1 + $0x9c] sm:$0xf]
  %v71 = vld [vmem:[%s1 + $0xa0] sm:$0xf]
  %v72 = vld [vmem:[%s1 + $0xa4] sm:$0xf]
  %v73 = vld [vmem:[%s1 + $0xa8] sm:$0xf]
  %v74 = vld [vmem:[%s1 + $0xac] sm:$0xf]
  %v75 = vld [vmem:[%s1 + $0xb0] sm:$0xf]
  %v76 = vld [vmem:[%s1 + $0xb4] sm:$0xf]
  %v77 = vld [vmem:[%s1 + $0xb8] sm:$0xf]
  %v78 = vld [vmem:[%s1 + $0xbc] sm:$0xf]
  %v79 = vld [vmem:[%s1 + $0xc0] sm:$0xf]
  %v80 = vld [vmem:[%s1 + $0xc4] sm:$0xf]
  %v81 = vld [vmem:[%s1 + $0xc8] sm:$0xf]
  %v82 = vld [vmem:[%s1 + $0xcc] sm:$0xf]
  %v83 = vld [vmem:[%s1 + $0xd0] sm:$0xf]
  %v84 = vld [vmem:[%s1 + $0xd4] sm:$0xf]
  %v85 = vld [vmem:[%s1 + $0xd8] sm:$0xf]
  %v86 = vld [vmem:[%s1 + $0xdc] sm:$0xf]
  %v87 = vld [vmem:[%s1 + $0xe0] sm:$0xf]
  %v88 = vld [vmem:[%s1 + $0xe4] sm:$0xf]
  %v89 = vld [vmem:[%s1 + $0xe8] sm:$0xf]
  %v90 = vld [vmem:[%s1 + $0xec] sm:$0xf]
  %v91 = vld [vmem:[%s1 + $0xf0] sm:$0xf]
  %v92 = vld [vmem:[%s1 + $0xf4] sm:$0xf]
  %v93 = vld [vmem:[%s1 + $0xf8] sm:$0xf]
  %v94 = vld [vmem:[%s1 + $0xfc] sm:$0xf]
  %v95 = vld [vmem:[%s1 + $0x100] sm:$0xf]
  %v96 = vld [vmem:[%s1 + $0x104] sm:$0xf]
  %v97 = vld [vmem:[%s1 + $0x108] sm:$0xf]
  %v98 = vld [vmem:[%s1 + $0x10c] sm:$0xf]
  %v99 = vld [vmem:[%s1 + $0x110] sm:$0xf]
  %v100 = vld [vmem:[%s1 + $0x114] sm:$0xf]
  %v101 = vld [vmem:[%s1 + $0x118] sm:$0xf]
  %v102 = vld [vmem:[%s1 + $0x11c] sm:$0xf]
  %v103 = vld [vmem:[%s1 + $0x120] sm:$0xf]
  %v104 = vld [vmem:[%s1 + $0x124] sm:$0xf]
  %v105 = vld [vmem:[%s1 + $0x128] sm:$0xf]
  %v106 = vld [vmem:[%s1 + $0x12c] sm:$0xf]
  %v107 = vld [vmem:[%s1 + $0x130] sm:$0xf]
  %v108 = vld [vmem:[%s1 + $0x134] sm:$0xf]
  %v109 = vld [vmem:[%s1 + $0x138] sm:$0xf]
  %v110 = vld [vmem:[%s1 + $0x13c] sm:$0xf]
  %v111 = vld [vmem:[%s1 + $0x140] sm:$0xf]
  %v112 = vld [vmem:[%s1 + $0x144] sm:$0xf]
  %v113 = vld [vmem:[%s1 + $0x148] sm:$0xf]
  %v114 = vld [vmem:[%s1 + $0x14c] sm:$0xf]
  %v115 = vld [vmem:[%s1 + $0x150] sm:$0xf]
  %v116 = vld [vmem:[%s1 + $0x154] sm:$0xf]
  %v117 = vld [vmem:[%s1 + $0x158] sm:$0xf]
  %v118 = vld [vmem:[%s1 + $0x15c] sm:$0xf]
  %v119 = vld [vmem:[%s1 + $0x160] sm:$0xf]
  %v120 = vld [vmem:[%s1 + $0x164] sm:$0xf]
  %v121 = vld [vmem:[%s1 + $0x168] sm:$0xf]
  %v122 = vld [vmem:[%s1 + $0x16c] sm:$0xf]
  %v123 = vld [vmem:[%s1 + $0x170] sm:$0xf]
  %v124 = vld [vmem:[%s1 + $0x174] sm:$0xf]
  %v125 = vld [vmem:[%s1 + $0x178] sm:$0xf]
  %v126 = vld [vmem:[%s1 + $0x17c] sm:$0xf]
  %v127 = vld [vmem:[%s1 + $0x180] sm:$0xf]
  %v128 = vld [vmem:[%s1 + $0x184] sm:$0xf]
  %v129 = vld [vmem:[%s1 + $0x188] sm:$0xf]
  %v130 = vld [vmem:[%s1 + $0x18c] sm:$0xf]
  %v131 = vld [vmem:[%s1 + $0x190] sm:$0xf]
  %v132 = vld [vmem:[%s1 + $0x194] sm:$0xf]
  %v133 = vld [vmem:[%s1 + $0x198] sm:$0xf]
  %v134 = vld [vmem:[%s1 + $0x19c] sm:$0xf]
  %v135 = vld [vmem:[%s1 + $0x1a0] sm:$0xf]
  %v136 = vld [vmem:[%s1 + $0x1a4] sm:$0xf]
  %v137 = vld [vmem:[%s1 + $0x1a8] sm:$0xf]
  %v138 = vld [vmem:[%s1 + $0x1ac] sm:$0xf]
  %v139 = vld [vmem:[%s1 + $0x1b0] sm:$0xf]
  %v140 = vld [vmem:[%s1 + $0x1b4] sm:$0xf]
  %v141 = vld [vmem:[%s1 + $0x1b8] sm:$0xf]
  %v142 = vld [vmem:[%s1 + $0x1bc] sm:$0xf]
  %v143 = vld [vmem:[%s1 + $0x1c0] sm:$0xf]
  %v144 = vld [vmem:[%s1 + $0x1c4] sm:$0xf]
  %v145 = vld [vmem:[%s1 + $0x1c8] sm:$0xf]
  %v146 = vld [vmem:[%s1 + $0x1cc] sm:$0xf]
  %v147 = vld [vmem:[%s1 + $0x1d0] sm:$0xf]
  %v148 = vld [vmem:[%s1 + $0x1d4] sm:$0xf]
  %v149 = vld [vmem:[%s1 + $0x1d8] sm:$0xf]
  %v150 = vld [vmem:[%s1 + $0x1dc] sm:$0xf]
  %v151 = vld [vmem:[%s1 + $0x1e0] sm:$0xf]
  %v152 = vld [vmem:[%s1 + $0x1e4] sm:$0xf]
  %v153 = vld [vmem:[%s1 + $0x1e8] sm:$0xf]
  %v154 = vld [vmem:[%s1 + $0x1ec] sm:$0xf]
  %v155 = vld [vmem:[%s1 + $0x1f0] sm:$0xf]
  %v156 = vld [vmem:[%s1 + $0x1f4] sm:$0xf]
  %v157 = vld [vmem:[%s1 + $0x1f8] sm:$0xf]
  %v158 = vld [vmem:[%s1 + $0x1fc] sm:$0xf]
  %v159 = vld [vmem:[%s2] sm:$0x1]
  %v161 = vlaneseq
  %v162 = vshrl.u32 %v161, 7
  %v163 = vsub.s32 0, %v162
  %v164 = vrot.slane %v159, %v163
  %v170 = vunpack.c.l.b16 %v27
  %v171 = vunpack.c.h.b16 %v27
  %v172 = vunpack.c.l.b16 %v28
  %v173 = vunpack.c.h.b16 %v28
  %v174 = vunpack.c.l.b16 %v29
  %v175 = vunpack.c.h.b16 %v29
  %v176 = vunpack.c.l.b16 %v30
  %v177 = vunpack.c.h.b16 %v30
  %v178 = vpack.c.b16 %v170, %v170
  %v179 = vpack.c.b16 %v171, %v171
  %v180 = vpack.c.b16 %v172, %v172
  %v181 = vpack.c.b16 %v173, %v173
  %v182 = vpack.c.b16 %v174, %v174
  %v183 = vpack.c.b16 %v175, %v175
  %v184 = vpack.c.b16 %v176, %v176
  %v185 = vpack.c.b16 %v177, %v177
  %v322 = vunpack.c.l.b16 %v31
  %v323 = vunpack.c.l.b16 %v32
  %v324 = vunpack.c.l.b16 %v33
  %v325 = vunpack.c.l.b16 %v34
  %v326 = vunpack.c.l.b16 %v35
  %v327 = vunpack.c.l.b16 %v36
  %v328 = vunpack.c.l.b16 %v37
  %v329 = vunpack.c.l.b16 %v38
  %v330 = vunpack.c.l.b16 %v39
  %v331 = vunpack.c.l.b16 %v40
  %v332 = vunpack.c.l.b16 %v41
  %v333 = vunpack.c.l.b16 %v42
  %v334 = vunpack.c.l.b16 %v43
  %v335 = vunpack.c.l.b16 %v44
  %v336 = vunpack.c.l.b16 %v45
  %v337 = vunpack.c.l.b16 %v46
  %v338 = vunpack.c.l.b16 %v47
  %v339 = vunpack.c.l.b16 %v48
  %v340 = vunpack.c.l.b16 %v49
  %v341 = vunpack.c.l.b16 %v50
  %v342 = vunpack.c.l.b16 %v51
  %v343 = vunpack.c.l.b16 %v52
  %v344 = vunpack.c.l.b16 %v53
  %v345 = vunpack.c.l.b16 %v54
  %v346 = vunpack.c.l.b16 %v55
  %v347 = vunpack.c.l.b16 %v56
  %v348 = vunpack.c.l.b16 %v57
  %v349 = vunpack.c.l.b16 %v58
  %v350 = vunpack.c.l.b16 %v59
  %v351 = vunpack.c.l.b16 %v60
  %v352 = vunpack.c.l.b16 %v61
  %v353 = vunpack.c.l.b16 %v62
  %v354 = vunpack.c.l.b16 %v63
  %v355 = vunpack.c.l.b16 %v64
  %v356 = vunpack.c.l.b16 %v65
  %v357 = vunpack.c.l.b16 %v66
  %v358 = vunpack.c.l.b16 %v67
  %v359 = vunpack.c.l.b16 %v68
  %v360 = vunpack.c.l.b16 %v69
  %v361 = vunpack.c.l.b16 %v70
  %v362 = vunpack.c.l.b16 %v71
  %v363 = vunpack.c.l.b16 %v72
  %v364 = vunpack.c.l.b16 %v73
  %v365 = vunpack.c.l.b16 %v74
  %v366 = vunpack.c.l.b16 %v75
  %v367 = vunpack.c.l.b16 %v76
  %v368 = vunpack.c.l.b16 %v77
  %v369 = vunpack.c.l.b16 %v78
  %v370 = vunpack.c.l.b16 %v79
  %v371 = vunpack.c.l.b16 %v80
  %v372 = vunpack.c.l.b16 %v81
  %v373 = vunpack.c.l.b16 %v82
  %v374 = vunpack.c.l.b16 %v83
  %v375 = vunpack.c.l.b16 %v84
  %v376 = vunpack.c.l.b16 %v85
  %v377 = vunpack.c.l.b16 %v86
  %v378 = vunpack.c.l.b16 %v87
  %v379 = vunpack.c.l.b16 %v88
  %v380 = vunpack.c.l.b16 %v89
  %v381 = vunpack.c.l.b16 %v90
  %v382 = vunpack.c.l.b16 %v91
  %v383 = vunpack.c.l.b16 %v92
  %v384 = vunpack.c.l.b16 %v93
  %v385 = vunpack.c.l.b16 %v94
  %v386 = vunpack.c.l.b16 %v95
  %v387 = vunpack.c.l.b16 %v96
  %v388 = vunpack.c.l.b16 %v97
  %v389 = vunpack.c.l.b16 %v98
  %v390 = vunpack.c.l.b16 %v99
  %v391 = vunpack.c.l.b16 %v100
  %v392 = vunpack.c.l.b16 %v101
  %v393 = vunpack.c.l.b16 %v102
  %v394 = vunpack.c.l.b16 %v103
  %v395 = vunpack.c.l.b16 %v104
  %v396 = vunpack.c.l.b16 %v105
  %v397 = vunpack.c.l.b16 %v106
  %v398 = vunpack.c.l.b16 %v107
  %v399 = vunpack.c.l.b16 %v108
  %v400 = vunpack.c.l.b16 %v109
  %v401 = vunpack.c.l.b16 %v110
  %v402 = vunpack.c.l.b16 %v111
  %v403 = vunpack.c.l.b16 %v112
  %v404 = vunpack.c.l.b16 %v113
  %v405 = vunpack.c.l.b16 %v114
  %v406 = vunpack.c.l.b16 %v115
  %v407 = vunpack.c.l.b16 %v116
  %v408 = vunpack.c.l.b16 %v117
  %v409 = vunpack.c.l.b16 %v118
  %v410 = vunpack.c.l.b16 %v119
  %v411 = vunpack.c.l.b16 %v120
  %v412 = vunpack.c.l.b16 %v121
  %v413 = vunpack.c.l.b16 %v122
  %v414 = vunpack.c.l.b16 %v123
  %v415 = vunpack.c.l.b16 %v124
  %v416 = vunpack.c.l.b16 %v125
  %v417 = vunpack.c.l.b16 %v126
  %v418 = vunpack.c.l.b16 %v127
  %v419 = vunpack.c.l.b16 %v128
  %v420 = vunpack.c.l.b16 %v129
  %v421 = vunpack.c.l.b16 %v130
  %v422 = vunpack.c.l.b16 %v131
  %v423 = vunpack.c.l.b16 %v132
  %v424 = vunpack.c.l.b16 %v133
  %v425 = vunpack.c.l.b16 %v134
  %v426 = vunpack.c.l.b16 %v135
  %v427 = vunpack.c.l.b16 %v136
  %v428 = vunpack.c.l.b16 %v137
  %v429 = vunpack.c.l.b16 %v138
  %v430 = vunpack.c.l.b16 %v139
  %v431 = vunpack.c.l.b16 %v140
  %v432 = vunpack.c.l.b16 %v141
  %v433 = vunpack.c.l.b16 %v142
  %v434 = vunpack.c.l.b16 %v143
  %v435 = vunpack.c.l.b16 %v144
  %v436 = vunpack.c.l.b16 %v145
  %v437 = vunpack.c.l.b16 %v146
  %v438 = vunpack.c.l.b16 %v147
  %v439 = vunpack.c.l.b16 %v148
  %v440 = vunpack.c.l.b16 %v149
  %v441 = vunpack.c.l.b16 %v150
  %v442 = vunpack.c.l.b16 %v151
  %v443 = vunpack.c.l.b16 %v152
  %v444 = vunpack.c.l.b16 %v153
  %v445 = vunpack.c.l.b16 %v154
  %v446 = vunpack.c.l.b16 %v155
  %v447 = vunpack.c.l.b16 %v156
  %v448 = vunpack.c.l.b16 %v157
  %v449 = vunpack.c.l.b16 %v158
  %v450 = vpack.c.b16 %v323, %v322
  %v451 = vpack.c.b16 %v325, %v324
  %v452 = vpack.c.b16 %v327, %v326
  %v453 = vpack.c.b16 %v329, %v328
  %v454 = vpack.c.b16 %v331, %v330
  %v455 = vpack.c.b16 %v333, %v332
  %v456 = vpack.c.b16 %v335, %v334
  %v457 = vpack.c.b16 %v337, %v336
  %v458 = vpack.c.b16 %v339, %v338
  %v459 = vpack.c.b16 %v341, %v340
  %v460 = vpack.c.b16 %v343, %v342
  %v461 = vpack.c.b16 %v345, %v344
  %v462 = vpack.c.b16 %v347, %v346
  %v463 = vpack.c.b16 %v349, %v348
  %v464 = vpack.c.b16 %v351, %v350
  %v465 = vpack.c.b16 %v353, %v352
  %v466 = vpack.c.b16 %v355, %v354
  %v467 = vpack.c.b16 %v357, %v356
  %v468 = vpack.c.b16 %v359, %v358
  %v469 = vpack.c.b16 %v361, %v360
  %v470 = vpack.c.b16 %v363, %v362
  %v471 = vpack.c.b16 %v365, %v364
  %v472 = vpack.c.b16 %v367, %v366
  %v473 = vpack.c.b16 %v369, %v368
  %v474 = vpack.c.b16 %v371, %v370
  %v475 = vpack.c.b16 %v373, %v372
  %v476 = vpack.c.b16 %v375, %v374
  %v477 = vpack.c.b16 %v377, %v376
  %v478 = vpack.c.b16 %v379, %v378
  %v479 = vpack.c.b16 %v381, %v380
  %v480 = vpack.c.b16 %v383, %v382
  %v481 = vpack.c.b16 %v385, %v384
  %v482 = vpack.c.b16 %v387, %v386
  %v483 = vpack.c.b16 %v389, %v388
  %v484 = vpack.c.b16 %v391, %v390
  %v485 = vpack.c.b16 %v393, %v392
  %v486 = vpack.c.b16 %v395, %v394
  %v487 = vpack.c.b16 %v397, %v396
  %v488 = vpack.c.b16 %v399, %v398
  %v489 = vpack.c.b16 %v401, %v400
  %v490 = vpack.c.b16 %v403, %v402
  %v491 = vpack.c.b16 %v405, %v404
  %v492 = vpack.c.b16 %v407, %v406
  %v493 = vpack.c.b16 %v409, %v408
  %v494 = vpack.c.b16 %v411, %v410
  %v495 = vpack.c.b16 %v413, %v412
  %v496 = vpack.c.b16 %v415, %v414
  %v497 = vpack.c.b16 %v417, %v416
  %v498 = vpack.c.b16 %v419, %v418
  %v499 = vpack.c.b16 %v421, %v420
  %v500 = vpack.c.b16 %v423, %v422
  %v501 = vpack.c.b16 %v425, %v424
  %v502 = vpack.c.b16 %v427, %v426
  %v503 = vpack.c.b16 %v429, %v428
  %v504 = vpack.c.b16 %v431, %v430
  %v505 = vpack.c.b16 %v433, %v432
  %v506 = vpack.c.b16 %v435, %v434
  %v507 = vpack.c.b16 %v437, %v436
  %v508 = vpack.c.b16 %v439, %v438
  %v509 = vpack.c.b16 %v441, %v440
  %v510 = vpack.c.b16 %v443, %v442
  %v511 = vpack.c.b16 %v445, %v444
  %v512 = vpack.c.b16 %v447, %v446
  %v513 = vpack.c.b16 %v449, %v448
  %578 = vmatprep.subr.bf16.mxu0 0
  %579 = vmatpush1.bf16.msra.mxu0 %v457
  %580 = vmatprep.subr.bf16.mxu0 0
  %581 = vmatpush1.bf16.msra.mxu0 %v456
  %582 = vmatprep.subr.bf16.mxu0 0
  %583 = vmatpush1.bf16.msra.mxu0 %v455
  %584 = vmatprep.subr.bf16.mxu0 0
  %585 = vmatpush1.bf16.msra.mxu0 %v454
  %586 = vmatprep.subr.bf16.mxu0 0
  %587 = vmatpush1.bf16.msra.mxu0 %v453
  %588 = vmatprep.subr.bf16.mxu0 0
  %589 = vmatpush1.bf16.msra.mxu0 %v452
  %590 = vmatprep.subr.bf16.mxu0 0
  %591 = vmatpush1.bf16.msra.mxu0 %v451
  %592 = vmatprep.subr.bf16.mxu0 0
  %593 = vmatpush1.bf16.msra.mxu0 %v450
  %594 = vmatprep.subr.bf16.mxu0 0
  %595 = vmatpush2.bf16.msra.mxu0 %v465
  %596 = vmatprep.subr.bf16.mxu0 0
  %597 = vmatpush2.bf16.msra.mxu0 %v464
  %598 = vmatprep.subr.bf16.mxu0 0
  %599 = vmatpush2.bf16.msra.mxu0 %v463
  %600 = vmatprep.subr.bf16.mxu0 0
  %601 = vmatpush2.bf16.msra.mxu0 %v462
  %602 = vmatprep.subr.bf16.mxu0 0
  %603 = vmatpush2.bf16.msra.mxu0 %v461
  %604 = vmatprep.subr.bf16.mxu0 0
  %605 = vmatpush2.bf16.msra.mxu0 %v460
  %606 = vmatprep.subr.bf16.mxu0 0
  %607 = vmatpush2.bf16.msra.mxu0 %v459
  %608 = vmatprep.subr.bf16.mxu0 0
  %609 = vmatpush2.bf16.msra.mxu0 %v458
  %610 = vmatprep.mubr.bf16.mxu0 %v179
  %611 = vmatmul.mubr.bf16.gmra.mxu0 %v178
  %v612 = vpop.f32.mrf.mxu0
  %v613 = vadd.f32 %v164, %v612
  %v614 = vpop.f32.mrf.mxu0
  %v615 = vpop.f32.mrf.mxu0
  %v616 = vpop.f32.mrf.mxu0
  %617 = vdwg.mxu0
  %618 = vmatprep.subr.bf16.mxu0 0
  %619 = vmatpush1.bf16.msra.mxu0 %v473
  %620 = vmatprep.subr.bf16.mxu0 0
  %621 = vmatpush1.bf16.msra.mxu0 %v472
  %622 = vmatprep.subr.bf16.mxu0 0
  %623 = vmatpush1.bf16.msra.mxu0 %v471
  %624 = vmatprep.subr.bf16.mxu0 0
  %625 = vmatpush1.bf16.msra.mxu0 %v470
  %626 = vmatprep.subr.bf16.mxu0 0
  %627 = vmatpush1.bf16.msra.mxu0 %v469
  %628 = vmatprep.subr.bf16.mxu0 0
  %629 = vmatpush1.bf16.msra.mxu0 %v468
  %630 = vmatprep.subr.bf16.mxu0 0
  %631 = vmatpush1.bf16.msra.mxu0 %v467
  %632 = vmatprep.subr.bf16.mxu0 0
  %633 = vmatpush1.bf16.msra.mxu0 %v466
  %634 = vmatprep.subr.bf16.mxu0 0
  %635 = vmatpush2.bf16.msra.mxu0 %v481
  %636 = vmatprep.subr.bf16.mxu0 0
  %637 = vmatpush2.bf16.msra.mxu0 %v480
  %638 = vmatprep.subr.bf16.mxu0 0
  %639 = vmatpush2.bf16.msra.mxu0 %v479
  %640 = vmatprep.subr.bf16.mxu0 0
  %641 = vmatpush2.bf16.msra.mxu0 %v478
  %642 = vmatprep.subr.bf16.mxu0 0
  %643 = vmatpush2.bf16.msra.mxu0 %v477
  %644 = vmatprep.subr.bf16.mxu0 0
  %645 = vmatpush2.bf16.msra.mxu0 %v476
  %646 = vmatprep.subr.bf16.mxu0 0
  %647 = vmatpush2.bf16.msra.mxu0 %v475
  %648 = vmatprep.subr.bf16.mxu0 0
  %649 = vmatpush2.bf16.msra.mxu0 %v474
  %650 = vmatprep.mubr.bf16.mxu0 %v181
  %651 = vmatmul.mubr.bf16.gmra.mxu0 %v180
  %v652 = vpop.f32.mrf.mxu0
  %v653 = vadd.f32 %v613, %v652
  %v654 = vpop.f32.mrf.mxu0
  %v655 = vpop.f32.mrf.mxu0
  %v656 = vpop.f32.mrf.mxu0
  %657 = vdwg.mxu0
  %658 = vmatprep.subr.bf16.mxu0 0
  %659 = vmatpush1.bf16.msra.mxu0 %v489
  %660 = vmatprep.subr.bf16.mxu0 0
  %661 = vmatpush1.bf16.msra.mxu0 %v488
  %662 = vmatprep.subr.bf16.mxu0 0
  %663 = vmatpush1.bf16.msra.mxu0 %v487
  %664 = vmatprep.subr.bf16.mxu0 0
  %665 = vmatpush1.bf16.msra.mxu0 %v486
  %666 = vmatprep.subr.bf16.mxu0 0
  %667 = vmatpush1.bf16.msra.mxu0 %v485
  %668 = vmatprep.subr.bf16.mxu0 0
  %669 = vmatpush1.bf16.msra.mxu0 %v484
  %670 = vmatprep.subr.bf16.mxu0 0
  %671 = vmatpush1.bf16.msra.mxu0 %v483
  %672 = vmatprep.subr.bf16.mxu0 0
  %673 = vmatpush1.bf16.msra.mxu0 %v482
  %674 = vmatprep.subr.bf16.mxu0 0
  %675 = vmatpush2.bf16.msra.mxu0 %v497
  %676 = vmatprep.subr.bf16.mxu0 0
  %677 = vmatpush2.bf16.msra.mxu0 %v496
  %678 = vmatprep.subr.bf16.mxu0 0
  %679 = vmatpush2.bf16.msra.mxu0 %v495
  %680 = vmatprep.subr.bf16.mxu0 0
  %681 = vmatpush2.bf16.msra.mxu0 %v494
  %682 = vmatprep.subr.bf16.mxu0 0
  %683 = vmatpush2.bf16.msra.mxu0 %v493
  %684 = vmatprep.subr.bf16.mxu0 0
  %685 = vmatpush2.bf16.msra.mxu0 %v492
  %686 = vmatprep.subr.bf16.mxu0 0
  %687 = vmatpush2.bf16.msra.mxu0 %v491
  %688 = vmatprep.subr.bf16.mxu0 0
  %689 = vmatpush2.bf16.msra.mxu0 %v490
  %690 = vmatprep.mubr.bf16.mxu0 %v183
  %691 = vmatmul.mubr.bf16.gmra.mxu0 %v182
  %v692 = vpop.f32.mrf.mxu0
  %v693 = vadd.f32 %v653, %v692
  %v694 = vpop.f32.mrf.mxu0
  %v695 = vpop.f32.mrf.mxu0
  %v696 = vpop.f32.mrf.mxu0
  %697 = vdwg.mxu0
  %698 = vmatprep.subr.bf16.mxu0 0
  %699 = vmatpush1.bf16.msra.mxu0 %v505
  %700 = vmatprep.subr.bf16.mxu0 0
  %701 = vmatpush1.bf16.msra.mxu0 %v504
  %702 = vmatprep.subr.bf16.mxu0 0
  %703 = vmatpush1.bf16.msra.mxu0 %v503
  %704 = vmatprep.subr.bf16.mxu0 0
  %705 = vmatpush1.bf16.msra.mxu0 %v502
  %706 = vmatprep.subr.bf16.mxu0 0
  %707 = vmatpush1.bf16.msra.mxu0 %v501
  %708 = vmatprep.subr.bf16.mxu0 0
  %709 = vmatpush1.bf16.msra.mxu0 %v500
  %710 = vmatprep.subr.bf16.mxu0 0
  %711 = vmatpush1.bf16.msra.mxu0 %v499
  %712 = vmatprep.subr.bf16.mxu0 0
  %713 = vmatpush1.bf16.msra.mxu0 %v498
  %714 = vmatprep.subr.bf16.mxu0 0
  %715 = vmatpush2.bf16.msra.mxu0 %v513
  %716 = vmatprep.subr.bf16.mxu0 0
  %717 = vmatpush2.bf16.msra.mxu0 %v512
  %718 = vmatprep.subr.bf16.mxu0 0
  %719 = vmatpush2.bf16.msra.mxu0 %v511
  %720 = vmatprep.subr.bf16.mxu0 0
  %721 = vmatpush2.bf16.msra.mxu0 %v510
  %722 = vmatprep.subr.bf16.mxu0 0
  %723 = vmatpush2.bf16.msra.mxu0 %v509
  %724 = vmatprep.subr.bf16.mxu0 0
  %725 = vmatpush2.bf16.msra.mxu0 %v508
  %726 = vmatprep.subr.bf16.mxu0 0
  %727 = vmatpush2.bf16.msra.mxu0 %v507
  %728 = vmatprep.subr.bf16.mxu0 0
  %729 = vmatpush2.bf16.msra.mxu0 %v506
  %730 = vmatprep.mubr.bf16.mxu0 %v185
  %731 = vmatmul.mubr.bf16.gmra.mxu0 %v184
  %v732 = vpop.f32.mrf.mxu0
  %v733 = vadd.f32 %v693, %v732
  %v734 = vpop.f32.mrf.mxu0
  %v735 = vpop.f32.mrf.mxu0
  %v736 = vpop.f32.mrf.mxu0
  %737 = vdwg.mxu0
  %v738 = vmax.f32 %v733, 0.0
  %v739 = vpack.c.bf16 %v738, %v738
  %v740 = vld [vmem:[%s3] sm:$0xf]
  %v741 = vld [vmem:[%s3 + $0x4] sm:$0xf]
  %v742 = vld [vmem:[%s3 + $0x8] sm:$0xf]
  %v743 = vld [vmem:[%s3 + $0xc] sm:$0xf]
  %v744 = vld [vmem:[%s3 + $0x10] sm:$0xf]
  %v745 = vld [vmem:[%s3 + $0x14] sm:$0xf]
  %v746 = vld [vmem:[%s3 + $0x18] sm:$0xf]
  %v747 = vld [vmem:[%s3 + $0x1c] sm:$0xf]
  %v748 = vld [vmem:[%s3 + $0x20] sm:$0xf]
  %v749 = vld [vmem:[%s3 + $0x24] sm:$0xf]
  %v750 = vld [vmem:[%s3 + $0x28] sm:$0xf]
  %v751 = vld [vmem:[%s3 + $0x2c] sm:$0xf]
  %v752 = vld [vmem:[%s3 + $0x30] sm:$0xf]
  %v753 = vld [vmem:[%s3 + $0x34] sm:$0xf]
  %v754 = vld [vmem:[%s3 + $0x38] sm:$0xf]
  %v755 = vld [vmem:[%s3 + $0x3c] sm:$0xf]
  %v756 = vld [vmem:[%s4] sm:$0x1]
  %v758 = vlaneseq
  %v759 = vshrl.u32 %v758, 7
  %v760 = vsub.s32 0, %v759
  %v761 = vrot.slane %v756, %v760
  %v779 = vunpack.c.l.b16 %v740
  %v780 = vunpack.c.l.b16 %v741
  %v781 = vunpack.c.l.b16 %v742
  %v782 = vunpack.c.l.b16 %v743
  %v783 = vunpack.c.l.b16 %v744
  %v784 = vunpack.c.l.b16 %v745
  %v785 = vunpack.c.l.b16 %v746
  %v786 = vunpack.c.l.b16 %v747
  %v787 = vunpack.c.l.b16 %v748
  %v788 = vunpack.c.l.b16 %v749
  %v789 = vunpack.c.l.b16 %v750
  %v790 = vunpack.c.l.b16 %v751
  %v791 = vunpack.c.l.b16 %v752
  %v792 = vunpack.c.l.b16 %v753
  %v793 = vunpack.c.l.b16 %v754
  %v794 = vunpack.c.l.b16 %v755
  %v795 = vpack.c.b16 %v780, %v779
  %v796 = vpack.c.b16 %v782, %v781
  %v797 = vpack.c.b16 %v784, %v783
  %v798 = vpack.c.b16 %v786, %v785
  %v799 = vpack.c.b16 %v788, %v787
  %v800 = vpack.c.b16 %v790, %v789
  %v801 = vpack.c.b16 %v792, %v791
  %v802 = vpack.c.b16 %v794, %v793
  %811 = vmatprep.subr.bf16.mxu0 0
  %812 = vmatpush1.bf16.msra.mxu0 %v802
  %813 = vmatprep.subr.bf16.mxu0 0
  %814 = vmatpush1.bf16.msra.mxu0 %v801
  %815 = vmatprep.subr.bf16.mxu0 0
  %816 = vmatpush1.bf16.msra.mxu0 %v800
  %817 = vmatprep.subr.bf16.mxu0 0
  %818 = vmatpush1.bf16.msra.mxu0 %v799
  %819 = vmatprep.subr.bf16.mxu0 0
  %820 = vmatpush1.bf16.msra.mxu0 %v798
  %821 = vmatprep.subr.bf16.mxu0 0
  %822 = vmatpush1.bf16.msra.mxu0 %v797
  %823 = vmatprep.subr.bf16.mxu0 0
  %824 = vmatpush1.bf16.msra.mxu0 %v796
  %825 = vmatprep.subr.bf16.mxu0 0
  %826 = vmatpush1.bf16.msra.mxu0 %v795
  %827 = vmatprep.subr.bf16.mxu0 0
  %828 = vmatpush2.bf16.msra.mxu0 0
  %829 = vmatprep.subr.bf16.mxu0 0
  %830 = vmatpush2.bf16.msra.mxu0 0
  %831 = vmatprep.subr.bf16.mxu0 0
  %832 = vmatpush2.bf16.msra.mxu0 0
  %833 = vmatprep.subr.bf16.mxu0 0
  %834 = vmatpush2.bf16.msra.mxu0 0
  %835 = vmatprep.subr.bf16.mxu0 0
  %836 = vmatpush2.bf16.msra.mxu0 0
  %837 = vmatprep.subr.bf16.mxu0 0
  %838 = vmatpush2.bf16.msra.mxu0 0
  %839 = vmatprep.subr.bf16.mxu0 0
  %840 = vmatpush2.bf16.msra.mxu0 0
  %841 = vmatprep.subr.bf16.mxu0 0
  %842 = vmatpush2.bf16.msra.mxu0 0
  %843 = vmatprep.mubr.bf16.mxu0 0
  %844 = vmatmul.mubr.bf16.gmra.mxu0 %v739
  %v845 = vpop.f32.mrf.mxu0
  %v846 = vadd.f32 %v761, %v845
  %v847 = vpop.f32.mrf.mxu0
  %v848 = vpop.f32.mrf.mxu0
  %v849 = vpop.f32.mrf.mxu0
  %850 = vdwg.mxu0
  %v851 = vmax.f32 %v846, 0.0
  %v852 = vpack.c.bf16 %v851, %v851
  %v853 = vld [vmem:[%s5] sm:$0xf]
  %v854 = vld [vmem:[%s5 + $0x4] sm:$0xf]
  %v855 = vld [vmem:[%s5 + $0x8] sm:$0xf]
  %v856 = vld [vmem:[%s5 + $0xc] sm:$0xf]
  %v857 = vld [vmem:[%s5 + $0x10] sm:$0xf]
  %v858 = vld [vmem:[%s5 + $0x14] sm:$0xf]
  %v859 = vld [vmem:[%s5 + $0x18] sm:$0xf]
  %v860 = vld [vmem:[%s5 + $0x1c] sm:$0xf]
  %v861 = vld [vmem:[%s5 + $0x20] sm:$0xf]
  %v862 = vld [vmem:[%s5 + $0x24] sm:$0xf]
  %v863 = vld [vmem:[%s5 + $0x28] sm:$0xf]
  %v864 = vld [vmem:[%s5 + $0x2c] sm:$0xf]
  %v865 = vld [vmem:[%s5 + $0x30] sm:$0xf]
  %v866 = vld [vmem:[%s5 + $0x34] sm:$0xf]
  %v867 = vld [vmem:[%s5 + $0x38] sm:$0xf]
  %v868 = vld [vmem:[%s5 + $0x3c] sm:$0xf]
  %v869 = vld [vmem:[%s6] sm:$0x1]
  %v871 = vlaneseq
  %v872 = vshrl.u32 %v871, 7
  %v873 = vsub.s32 0, %v872
  %v874 = vrot.slane %v869, %v873
  %v892 = vunpack.c.l.b16 %v853
  %v893 = vunpack.c.l.b16 %v854
  %v894 = vunpack.c.l.b16 %v855
  %v895 = vunpack.c.l.b16 %v856
  %v896 = vunpack.c.l.b16 %v857
  %v897 = vunpack.c.l.b16 %v858
  %v898 = vunpack.c.l.b16 %v859
  %v899 = vunpack.c.l.b16 %v860
  %v900 = vunpack.c.l.b16 %v861
  %v901 = vunpack.c.l.b16 %v862
  %v902 = vunpack.c.l.b16 %v863
  %v903 = vunpack.c.l.b16 %v864
  %v904 = vunpack.c.l.b16 %v865
  %v905 = vunpack.c.l.b16 %v866
  %v906 = vunpack.c.l.b16 %v867
  %v907 = vunpack.c.l.b16 %v868
  %v908 = vpack.c.b16 %v893, %v892
  %v909 = vpack.c.b16 %v895, %v894
  %v910 = vpack.c.b16 %v897, %v896
  %v911 = vpack.c.b16 %v899, %v898
  %v912 = vpack.c.b16 %v901, %v900
  %v913 = vpack.c.b16 %v903, %v902
  %v914 = vpack.c.b16 %v905, %v904
  %v915 = vpack.c.b16 %v907, %v906
  %924 = vmatprep.subr.bf16.mxu0 0
  %925 = vmatpush1.bf16.msra.mxu0 %v915
  %926 = vmatprep.subr.bf16.mxu0 0
  %927 = vmatpush1.bf16.msra.mxu0 %v914
  %928 = vmatprep.subr.bf16.mxu0 0
  %929 = vmatpush1.bf16.msra.mxu0 %v913
  %930 = vmatprep.subr.bf16.mxu0 0
  %931 = vmatpush1.bf16.msra.mxu0 %v912
  %932 = vmatprep.subr.bf16.mxu0 0
  %933 = vmatpush1.bf16.msra.mxu0 %v911
  %934 = vmatprep.subr.bf16.mxu0 0
  %935 = vmatpush1.bf16.msra.mxu0 %v910
  %936 = vmatprep.subr.bf16.mxu0 0
  %937 = vmatpush1.bf16.msra.mxu0 %v909
  %938 = vmatprep.subr.bf16.mxu0 0
  %939 = vmatpush1.bf16.msra.mxu0 %v908
  %940 = vmatprep.subr.bf16.mxu0 0
  %941 = vmatpush2.bf16.msra.mxu0 0
  %942 = vmatprep.subr.bf16.mxu0 0
  %943 = vmatpush2.bf16.msra.mxu0 0
  %944 = vmatprep.subr.bf16.mxu0 0
  %945 = vmatpush2.bf16.msra.mxu0 0
  %946 = vmatprep.subr.bf16.mxu0 0
  %947 = vmatpush2.bf16.msra.mxu0 0
  %948 = vmatprep.subr.bf16.mxu0 0
  %949 = vmatpush2.bf16.msra.mxu0 0
  %950 = vmatprep.subr.bf16.mxu0 0
  %951 = vmatpush2.bf16.msra.mxu0 0
  %952 = vmatprep.subr.bf16.mxu0 0
  %953 = vmatpush2.bf16.msra.mxu0 0
  %954 = vmatprep.subr.bf16.mxu0 0
  %955 = vmatpush2.bf16.msra.mxu0 0
  %956 = vmatprep.mubr.bf16.mxu0 0
  %957 = vmatmul.mubr.bf16.gmra.mxu0 %v852
  %v958 = vpop.f32.mrf.mxu0
  %v959 = vadd.f32 %v874, %v958
  %v960 = vpop.f32.mrf.mxu0
  %v961 = vpop.f32.mrf.mxu0
  %v962 = vpop.f32.mrf.mxu0
  %963 = vdwg.mxu0
  %964 = vst [vmem:[%s7] sm:$0xff] %v959
  // Predicated region
  $region30: #{model_forward.5} parent=0 // pred_check
    _
  $region31: #{model_forward.5} parent=0 // pred_check_branch
    %966 = sbr.rel (0) target = $region33
  $region32: #{model_forward.5} parent=0 // pred_region
    _
  $region33: #{model_forward.5} parent=0 // pred_fallthru
    _
  // Predicated region
  $region34: #{model_forward.5} parent=0 // pred_check
    _
  $region35: #{model_forward.5} parent=0 // pred_check_branch
    %968 = sbr.rel (0) target = $region37
  $region36: #{model_forward.5} parent=0 // pred_region
    _
  $region37: #{model_forward.5} parent=0 // pred_fallthru
    _

// kernel: model_forward.4
$region0: #{model_forward.4}
  #allocation0 [shape = 'u32[]', space=smem, size = 0x4, offset = 0x4, fixed_abs, tag = 'smem constant byte address 0x4 - core index']
  #allocation1 [shape = 'u32[144,128]{1,0:T(1,128)}', space=vmem, size = 0x12000, scoped, tag = 'internal scratch']
  %s0 = inlined_call_operand.vmem [shape: bf16[4,32,1600], index: 0, kind: input, shape index: {}]
  %s1 = inlined_call_operand.vmem [shape: bf16[1600,64], index: 1, kind: input, shape index: {}]
  %s2 = inlined_call_operand.vmem [shape: f32[1,64], index: 2, kind: input, shape index: {}]
  %s3 = inlined_call_operand.vmem [shape: bf16[32,64], index: 3, kind: output, shape index: {}]
  %s4 = sld [smem:[#allocation0]]
  $region71: #{model_forward.4} parent=0
    _
  %s6 = ssub.s32 1, %s4
  %s7 = scalar_select 0, %s6, %s4
  $region1: #{model_forward.4} parent=0
    #allocation2 [shape = 'u8[425984]{0}', space=vmem, size = 0x68000, scoped, tag = 'input window, operand 0']
    loop: start=0, step=1, limit=4
    $region2: #{model_forward.4} parent=1 // loop_pre_header
      _
    $region3: #{model_forward.4} parent=1 // loop_header
      %s9 = sphi 0, %s13
      %p10 = scmp.ge.s32.totalorder %s9, 4
      %s19 = sphi 0, %s21
      %s22 = sphi 0, %s19
      %s23 = sphi 0, %s22
      %s39 = sphi 0, %s23
      %s43 = sphi 0, %s43
      %s45 = sphi 0, %s43
      %s46 = sphi 0, %s45
      %s60 = sphi 0, %s46
      %s64 = sphi 0, %s64
      %s66 = sphi 0, %s64
      %s67 = sphi 0, %s66
      %s81 = sphi 0, %s67
      %s87 = sphi 0, %s89
      %s90 = sphi 0, %s87
      %s91 = sphi 0, %s90
      %s107 = sphi 0, %s91
    $region4: #{model_forward.4} parent=1 // loop_header_branch
      %12 = sbr.rel (%p10) target = $region8
    $region5: #{model_forward.4} parent=1 // loop_body
      %s14 = ssub.s32 %s9, 1
      %s15 = ssub.s32 %s9, 2
      %s16 = sadd.s32 %s9, 1
      %s17 = ssub.s32 %s9, %s16
      %p18 = scmp.eq.s32.totalorder %s17, 0
      %s20 = sadd.s32 %s19, 1
      %s21 = scalar_select %p18, %s19, %s20
      %p24 = pneg %p18
      %p25 = scmp.eq.s32.totalorder %s9, 1
      %p26 = por %p24, %p25
      %p27 = scmp.ne.s32.totalorder %s19, %s22
      %p28 = scmp.eq.s32.totalorder %s9, 0
      %p29 = por %p27, %p28
      %p30 = scmp.ne.s32.totalorder %s19, %s22
      %p31 = scmp.eq.s32.totalorder %s14, 1
      %p32 = por %p30, %p31
      %p33 = scmp.ne.s32.totalorder %s22, %s23
      %p34 = scmp.eq.s32.totalorder %s14, 0
      %p35 = por %p33, %p34
      %p36 = scmp.ne.s32.totalorder %s22, %s23
      %p37 = scmp.eq.s32.totalorder %s15, 1
      %p38 = por %p36, %p37
      %p40 = scmp.ne.s32.totalorder %s23, %s39
      %p41 = scmp.eq.s32.totalorder %s15, 0
      %p42 = por %p40, %p41
      %s44 = sadd.s32 %s43, 1
      %p47 = scmp.eq.s32.totalorder %s9, 1
      %p48 = scmp.ne.s32.totalorder %s43, %s45
      %p49 = scmp.eq.s32.totalorder %s9, 0
      %p50 = por %p48, %p49
      %p51 = scmp.ne.s32.totalorder %s43, %s45
      %p52 = scmp.eq.s32.totalorder %s14, 1
      %p53 = por %p51, %p52
      %p54 = scmp.ne.s32.totalorder %s45, %s46
      %p55 = scmp.eq.s32.totalorder %s14, 0
      %p56 = por %p54, %p55
      %p57 = scmp.ne.s32.totalorder %s45, %s46
      %p58 = scmp.eq.s32.totalorder %s15, 1
      %p59 = por %p57, %p58
      %p61 = scmp.ne.s32.totalorder %s46, %s60
      %p62 = scmp.eq.s32.totalorder %s15, 0
      %p63 = por %p61, %p62
      %s65 = sadd.s32 %s64, 1
      %p68 = scmp.eq.s32.totalorder %s9, 1
      %p69 = scmp.ne.s32.totalorder %s64, %s66
      %p70 = scmp.eq.s32.totalorder %s9, 0
      %p71 = por %p69, %p70
      %p72 = scmp.ne.s32.totalorder %s64, %s66
      %p73 = scmp.eq.s32.totalorder %s14, 1
      %p74 = por %p72, %p73
      %p75 = scmp.ne.s32.totalorder %s66, %s67
      %p76 = scmp.eq.s32.totalorder %s14, 0
      %p77 = por %p75, %p76
      %p78 = scmp.ne.s32.totalorder %s66, %s67
      %p79 = scmp.eq.s32.totalorder %s15, 1
      %p80 = por %p78, %p79
      %p82 = scmp.ne.s32.totalorder %s67, %s81
      %p83 = scmp.eq.s32.totalorder %s15, 0
      %p84 = por %p82, %p83
      %s85 = ssub.s32 %s9, %s16
      %p86 = scmp.eq.s32.totalorder %s85, 0
      %s88 = sadd.s32 %s87, 1
      %s89 = scalar_select %p86, %s87, %s88
      %p92 = pneg %p86
      %p93 = scmp.eq.s32.totalorder %s9, 1
      %p94 = por %p92, %p93
      %p95 = scmp.ne.s32.totalorder %s87, %s90
      %p96 = scmp.eq.s32.totalorder %s9, 0
      %p97 = por %p95, %p96
      %p98 = scmp.ne.s32.totalorder %s87, %s90
      %p99 = scmp.eq.s32.totalorder %s14, 1
      %p100 = por %p98, %p99
      %p101 = scmp.ne.s32.totalorder %s90, %s91
      %p102 = scmp.eq.s32.totalorder %s14, 0
      %p103 = por %p101, %p102
      %p104 = scmp.ne.s32.totalorder %s90, %s91
      %p105 = scmp.eq.s32.totalorder %s15, 1
      %p106 = por %p104, %p105
      %p108 = scmp.ne.s32.totalorder %s91, %s107
      %p109 = scmp.eq.s32.totalorder %s15, 0
      %p110 = por %p108, %p109
      %p111 = scmp.le.s32.totalorder 1, %s9
      %p112 = scmp.lt.s32.totalorder %s9, 3
      %p113 = pnand %p111, %p112
      %p114 = pneg %p113
      // Predicated region
      $region9: #{model_forward.4} parent=5 // pred_check
        _
      $region10: #{model_forward.4} parent=5 // pred_check_branch
        %116 = sbr.rel (%p113) target = $region12
      $region11: #{model_forward.4} parent=5 // pred_region
        %s117 = ssub.s32 %s9, 1
        // Predicated region
        $region13: #{model_forward.4} parent=11 // pred_check
          %p118 = pneg %p56
        $region14: #{model_forward.4} parent=11 // pred_check_branch
          %120 = sbr.rel (%p118) target = $region16
        $region15: #{model_forward.4} parent=11 // pred_region
          _
        $region16: #{model_forward.4} parent=11 // pred_fallthru
          _
        // Predicated region
        $region17: #{model_forward.4} parent=11 // pred_check
          %p121 = pneg %p77
        $region18: #{model_forward.4} parent=11 // pred_check_branch
          %123 = sbr.rel (%p121) target = $region20
        $region19: #{model_forward.4} parent=11 // pred_region
          _
        $region20: #{model_forward.4} parent=11 // pred_fallthru
          _
      $region12: #{model_forward.4} parent=5 // pred_fallthru
        _
      %p124 = scmp.lt.s32.totalorder %s9, 2
      // Predicated region
      $region21: #{model_forward.4} parent=5 // pred_check
        %p125 = pneg %p124
      $region22: #{model_forward.4} parent=5 // pred_check_branch
        %127 = sbr.rel (%p125) target = $region24
      $region23: #{model_forward.4} parent=5 // pred_region
        // Predicated region
        $region25: #{model_forward.4} parent=23 // pred_check
          %p128 = pneg %p29
        $region26: #{model_forward.4} parent=23 // pred_check_branch
          %130 = sbr.rel (%p128) target = $region28
        $region27: #{model_forward.4} parent=23 // pred_region
          %s131 = sand.u32 %s19, 1
          %s132 = sand.u32 %s19, 1
          %s133 = smul.addr %s132, 416
          %s134 = scalar_lea.vmem [#allocation2], %s133
          %s135 = smul.u32 2, %s9
          %s136 = smul.addr %s135, 13
          %s137 = smul.addr %s136, 4
          %s138 = scalar_lea.vmem %s0, %s137
          // Predicated region
          $region29: #{model_forward.4} parent=27 // pred_check
            _
          $region30: #{model_forward.4} parent=27 // pred_check_branch
            %140 = sbr.rel (0) target = $region32
          $region31: #{model_forward.4} parent=27 // pred_region
            // Predicated region
            $region33: #{model_forward.4} parent=31 // pred_check
              _
            $region34: #{model_forward.4} parent=31 // pred_check_branch
              %142 = sbr.rel (0) target = $region36
            $region35: #{model_forward.4} parent=31 // pred_region
              %s143 = scalar_lea.vmem %s138, 48
              %s144 = scalar_lea.vmem %s134, 48 [#allocation2]
              loop: start=0, step=1, limit=1
              $region37: #{model_forward.4} parent=35 // loop_pre_header
                _
              $region38: #{model_forward.4} parent=35 // loop_header
                %s146 = sphi 0, %s150
                %p147 = scmp.ge.s32.totalorder %s146, 1
                %s151 = sphi %s138, %s138
                %s152 = sphi %s134, %s134
              $region39: #{model_forward.4} parent=35 // loop_header_branch
                %149 = sbr.rel (%p147) target = $region43
              $region40: #{model_forward.4} parent=35 // loop_body
                %v153 = vld [vmem:[%s151] sm:$0xff]
                %154 = vst [vmem:[%s152] sm:$0xff] %v153
                %v155 = vld [vmem:[%s151 + $0x8] sm:$0xff]
                %156 = vst [vmem:[%s152 + $0x8] sm:$0xff] %v155
                %v157 = vld [vmem:[%s151 + $0x10] sm:$0xff]
                %158 = vst [vmem:[%s152 + $0x10] sm:$0xff] %v157
                %v159 = vld [vmem:[%s151 + $0x18] sm:$0xff]
                %160 = vst [vmem:[%s152 + $0x18] sm:$0xff] %v159
                %v161 = vld [vmem:[%s151 + $0x20] sm:$0xff]
                %162 = vst [vmem:[%s152 + $0x20] sm:$0xff] %v161
                %v163 = vld [vmem:[%s151 + $0x28] sm:$0xff]
                %164 = vst [vmem:[%s152 + $0x28] sm:$0xff] %v163
                %v165 = vld [vmem:[%s151 + $0x34] sm:$0xff]
                %166 = vst [vmem:[%s152 + $0x34] sm:$0xff] %v165
                %v167 = vld [vmem:[%s151 + $0x3c] sm:$0xff]
                %168 = vst [vmem:[%s152 + $0x3c] sm:$0xff] %v167
                %v169 = vld [vmem:[%s151 + $0x44] sm:$0xff]
                %170 = vst [vmem:[%s152 + $0x44] sm:$0xff] %v169
                %v171 = vld [vmem:[%s151 + $0x4c] sm:$0xff]
                %172 = vst [vmem:[%s152 + $0x4c] sm:$0xff] %v171
                %v173 = vld [vmem:[%s151 + $0x54] sm:$0xff]
                %174 = vst [vmem:[%s152 + $0x54] sm:$0xff] %v173
                %v175 = vld [vmem:[%s151 + $0x5c] sm:$0xff]
                %176 = vst [vmem:[%s152 + $0x5c] sm:$0xff] %v175
                %v177 = vld [vmem:[%s151 + $0xd0] sm:$0xff]
                %178 = vst [vmem:[%s152 + $0x68] sm:$0xff] %v177
                %v179 = vld [vmem:[%s151 + $0xd8] sm:$0xff]
                %180 = vst [vmem:[%s152 + $0x70] sm:$0xff] %v179
                %v181 = vld [vmem:[%s151 + $0xe0] sm:$0xff]
                %182 = vst [vmem:[%s152 + $0x78] sm:$0xff] %v181
                %v183 = vld [vmem:[%s151 + $0xe8] sm:$0xff]
                %184 = vst [vmem:[%s152 + $0x80] sm:$0xff] %v183
                %v185 = vld [vmem:[%s151 + $0xf0] sm:$0xff]
                %186 = vst [vmem:[%s152 + $0x88] sm:$0xff] %v185
                %v187 = vld [vmem:[%s151 + $0xf8] sm:$0xff]
                %188 = vst [vmem:[%s152 + $0x90] sm:$0xff] %v187
                %v189 = vld [vmem:[%s151 + $0x104] sm:$0xff]
                %190 = vst [vmem:[%s152 + $0x9c] sm:$0xff] %v189
                %v191 = vld [vmem:[%s151 + $0x10c] sm:$0xff]
                %192 = vst [vmem:[%s152 + $0xa4] sm:$0xff] %v191
                %v193 = vld [vmem:[%s151 + $0x114] sm:$0xff]
                %194 = vst [vmem:[%s152 + $0xac] sm:$0xff] %v193
                %v195 = vld [vmem:[%s151 + $0x11c] sm:$0xff]
                %196 = vst [vmem:[%s152 + $0xb4] sm:$0xff] %v195
                %v197 = vld [vmem:[%s151 + $0x124] sm:$0xff]
                %198 = vst [vmem:[%s152 + $0xbc] sm:$0xff] %v197
                %v199 = vld [vmem:[%s151 + $0x12c] sm:$0xff]
                %200 = vst [vmem:[%s152 + $0xc4] sm:$0xff] %v199
                %v201 = vld [vmem:[%s151 + $0x1a0] sm:$0xff]
                %202 = vst [vmem:[%s152 + $0xd0] sm:$0xff] %v201
                %v203 = vld [vmem:[%s151 + $0x1a8] sm:$0xff]
                %204 = vst [vmem:[%s152 + $0xd8] sm:$0xff] %v203
                %v205 = vld [vmem:[%s151 + $0x1b0] sm:$0xff]
                %206 = vst [vmem:[%s152 + $0xe0] sm:$0xff] %v205
                %v207 = vld [vmem:[%s151 + $0x1b8] sm:$0xff]
                %208 = vst [vmem:[%s152 + $0xe8] sm:$0xff] %v207
                %v209 = vld [vmem:[%s151 + $0x1c0] sm:$0xff]
                %210 = vst [vmem:[%s152 + $0xf0] sm:$0xff] %v209
                %v211 = vld [vmem:[%s151 + $0x1c8] sm:$0xff]
                %212 = vst [vmem:[%s152 + $0xf8] sm:$0xff] %v211
                %v213 = vld [vmem:[%s151 + $0x1d4] sm:$0xff]
                %214 = vst [vmem:[%s152 + $0x104] sm:$0xff] %v213
                %v215 = vld [vmem:[%s151 + $0x1dc] sm:$0xff]
                %216 = vst [vmem:[%s152 + $0x10c] sm:$0xff] %v215
                %v217 = vld [vmem:[%s151 + $0x1e4] sm:$0xff]
                %218 = vst [vmem:[%s152 + $0x114] sm:$0xff] %v217
                %v219 = vld [vmem:[%s151 + $0x1ec] sm:$0xff]
                %220 = vst [vmem:[%s152 + $0x11c] sm:$0xff] %v219
                %v221 = vld [vmem:[%s151 + $0x1f4] sm:$0xff]
                %222 = vst [vmem:[%s152 + $0x124] sm:$0xff] %v221
                %v223 = vld [vmem:[%s151 + $0x1fc] sm:$0xff]
                %224 = vst [vmem:[%s152 + $0x12c] sm:$0xff] %v223
                %v225 = vld [vmem:[%s151 + $0x270] sm:$0xff]
                %226 = vst [vmem:[%s152 + $0x138] sm:$0xff] %v225
                %v227 = vld [vmem:[%s151 + $0x278] sm:$0xff]
                %228 = vst [vmem:[%s152 + $0x140] sm:$0xff] %v227
                %v229 = vld [vmem:[%s151 + $0x280] sm:$0xff]
                %230 = vst [vmem:[%s152 + $0x148] sm:$0xff] %v229
                %v231 = vld [vmem:[%s151 + $0x288] sm:$0xff]
                %232 = vst [vmem:[%s152 + $0x150] sm:$0xff] %v231
                %v233 = vld [vmem:[%s151 + $0x290] sm:$0xff]
                %234 = vst [vmem:[%s152 + $0x158] sm:$0xff] %v233
                %v235 = vld [vmem:[%s151 + $0x298] sm:$0xff]
                %236 = vst [vmem:[%s152 + $0x160] sm:$0xff] %v235
                %v237 = vld [vmem:[%s151 + $0x2a4] sm:$0xff]
                %238 = vst [vmem:[%s152 + $0x16c] sm:$0xff] %v237
                %v239 = vld [vmem:[%s151 + $0x2ac] sm:$0xff]
                %240 = vst [vmem:[%s152 + $0x174] sm:$0xff] %v239
                %v241 = vld [vmem:[%s151 + $0x2b4] sm:$0xff]
                %242 = vst [vmem:[%s152 + $0x17c] sm:$0xff] %v241
                %v243 = vld [vmem:[%s151 + $0x2bc] sm:$0xff]
                %244 = vst [vmem:[%s152 + $0x184] sm:$0xff] %v243
                %v245 = vld [vmem:[%s151 + $0x2c4] sm:$0xff]
                %246 = vst [vmem:[%s152 + $0x18c] sm:$0xff] %v245
                %v247 = vld [vmem:[%s151 + $0x2cc] sm:$0xff]
                %248 = vst [vmem:[%s152 + $0x194] sm:$0xff] %v247
              $region41: #{model_forward.4} parent=35 // loop_footer
                %s150 = sadd.s32 1, %s146
              $region42: #{model_forward.4} parent=35 // loop_footer_branch
                %145 = sbr.rel target = $region38
              $region43: #{model_forward.4} parent=35 // loop_exit
                _
              %s250 = ssub.s32 16, 1
              loop: start=0, step=1, limit=1
              $region44: #{model_forward.4} parent=35 // loop_pre_header
                _
              $region45: #{model_forward.4} parent=35 // loop_header
                %s252 = sphi 0, %s256
                %p253 = scmp.ge.s32.totalorder %s252, 1
                %s257 = sphi %s143, %s143
                %s258 = sphi %s144, %s144
              $region46: #{model_forward.4} parent=35 // loop_header_branch
                %255 = sbr.rel (%p253) target = $region50
              $region47: #{model_forward.4} parent=35 // loop_body
                %v259 = vld [vmem:[%s257] sm:%s250]
                %260 = vst [vmem:[%s258] sm:%s250] %v259
                %v261 = vld [vmem:[%s257 + $0x34] sm:%s250]
                %262 = vst [vmem:[%s258 + $0x34] sm:%s250] %v261
                %v263 = vld [vmem:[%s257 + $0xd0] sm:%s250]
                %264 = vst [vmem:[%s258 + $0x68] sm:%s250] %v263
                %v265 = vld [vmem:[%s257 + $0x104] sm:%s250]
                %266 = vst [vmem:[%s258 + $0x9c] sm:%s250] %v265
                %v267 = vld [vmem:[%s257 + $0x1a0] sm:%s250]
                %268 = vst [vmem:[%s258 + $0xd0] sm:%s250] %v267
                %v269 = vld [vmem:[%s257 + $0x1d4] sm:%s250]
                %270 = vst [vmem:[%s258 + $0x104] sm:%s250] %v269
                %v271 = vld [vmem:[%s257 + $0x270] sm:%s250]
                %272 = vst [vmem:[%s258 + $0x138] sm:%s250] %v271
                %v273 = vld [vmem:[%s257 + $0x2a4] sm:%s250]
                %274 = vst [vmem:[%s258 + $0x16c] sm:%s250] %v273
              $region48: #{model_forward.4} parent=35 // loop_footer
                %s256 = sadd.s32 1, %s252
              $region49: #{model_forward.4} parent=35 // loop_footer_branch
                %251 = sbr.rel target = $region45
              $region50: #{model_forward.4} parent=35 // loop_exit
                _
            $region36: #{model_forward.4} parent=31 // pred_fallthru
              _
          $region32: #{model_forward.4} parent=27 // pred_fallthru
            _
          %275 = vnop
        $region28: #{model_forward.4} parent=23 // pred_fallthru
          _
      $region24: #{model_forward.4} parent=5 // pred_fallthru
        _
      %p276 = scmp.le.s32.totalorder 1, %s9
      %p277 = scmp.lt.s32.totalorder %s9, 3
      %p278 = pnand %p276, %p277
      %p279 = pneg %p278
      // Predicated region
      $region51: #{model_forward.4} parent=5 // pred_check
        _
      $region52: #{model_forward.4} parent=5 // pred_check_branch
        %281 = sbr.rel (%p278) target = $region54
      $region53: #{model_forward.4} parent=5 // pred_region
        %s282 = ssub.s32 %s9, 1
        %s283 = sand.u32 %s22, 1
        %s284 = sand.u32 %s22, 1
        %s285 = smul.addr %s284, 416
        %s286 = scalar_lea.vmem [#allocation2], %s285
        // Predicated region
        $region55: #{model_forward.4} parent=53 // pred_check
          %p287 = pneg %p35
        $region56: #{model_forward.4} parent=53 // pred_check_branch
          %289 = sbr.rel (%p287) target = $region58
        $region57: #{model_forward.4} parent=53 // pred_region
          _
        $region58: #{model_forward.4} parent=53 // pred_fallthru
          _
        %s290 = sand.u32 %s22, 1
        %s291 = sand.u32 %s22, 1
        %s292 = smul.addr %s291, 416
        %s293 = scalar_lea.vmem [#allocation2], %s292
        %p294 = pneg %p35
        %p295 = pneg %p32
        %p296 = pneg %p56
        %p297 = pneg %p53
        %p298 = pneg %p77
        %p299 = pneg %p74
        %p300 = pneg %p103
        %p301 = pneg %p100
        %s302 = smul.u32 2, %s14
        %p303 = scmp.lt.s32.totalorder %s302, 3
        %s304 = scalar_select %p303, %s302, 3
        %s305 = smul.addr %s304, 4
        %s306 = scalar_lea.vmem %s3, %s305
        %s307 = smul.u32 2, %s14
        %s308 = smul.u32 2, %s14
        %p309 = scmp.lt.s32.totalorder %s308, 3
        %s310 = scalar_select %p309, %s308, 3
        %s311 = smul.addr %s310, 4
        %s312 = scalar_lea.vmem %s3, %s311
        %s313 = smul.u32 2, %s14
        %v315 = vld [vmem:[%s1] sm:$0xf]
        %v316 = vld [vmem:[%s1 + $0x4] sm:$0xf]
        %v317 = vld [vmem:[%s1 + $0x8] sm:$0xf]
        %v318 = vld [vmem:[%s1 + $0xc] sm:$0xf]
        %v319 = vld [vmem:[%s1 + $0x10] sm:$0xf]
        %v320 = vld [vmem:[%s1 + $0x14] sm:$0xf]
        %v321 = vld [vmem:[%s1 + $0x18] sm:$0xf]
        %v322 = vld [vmem:[%s1 + $0x1c] sm:$0xf]
        %v323 = vld [vmem:[%s1 + $0x20] sm:$0xf]
        %v324 = vld [vmem:[%s1 + $0x24] sm:$0xf]
        %v325 = vld [vmem:[%s1 + $0x28] sm:$0xf]
        %v326 = vld [vmem:[%s1 + $0x2c] sm:$0xf]
        %v327 = vld [vmem:[%s1 + $0x30] sm:$0xf]
        %v328 = vld [vmem:[%s1 + $0x34] sm:$0xf]
        %v329 = vld [vmem:[%s1 + $0x38] sm:$0xf]
        %v330 = vld [vmem:[%s1 + $0x3c] sm:$0xf]
        %v331 = vld [vmem:[%s1 + $0x40] sm:$0xf]
        %v332 = vld [vmem:[%s1 + $0x44] sm:$0xf]
        %v333 = vld [vmem:[%s1 + $0x48] sm:$0xf]
        %v334 = vld [vmem:[%s1 + $0x4c] sm:$0xf]
        %v335 = vld [vmem:[%s1 + $0x50] sm:$0xf]
        %v336 = vld [vmem:[%s1 + $0x54] sm:$0xf]
        %v337 = vld [vmem:[%s1 + $0x58] sm:$0xf]
        %v338 = vld [vmem:[%s1 + $0x5c] sm:$0xf]
        %v339 = vld [vmem:[%s1 + $0x60] sm:$0xf]
        %v340 = vld [vmem:[%s1 + $0x64] sm:$0xf]
        %v341 = vld [vmem:[%s1 + $0x68] sm:$0xf]
        %v342 = vld [vmem:[%s1 + $0x6c] sm:$0xf]
        %v343 = vld [vmem:[%s1 + $0x70] sm:$0xf]
        %v344 = vld [vmem:[%s1 + $0x74] sm:$0xf]
        %v345 = vld [vmem:[%s1 + $0x78] sm:$0xf]
        %v346 = vld [vmem:[%s1 + $0x7c] sm:$0xf]
        %v347 = vld [vmem:[%s1 + $0x80] sm:$0xf]
        %v348 = vld [vmem:[%s1 + $0x84] sm:$0xf]
        %v349 = vld [vmem:[%s1 + $0x88] sm:$0xf]
        %v350 = vld [vmem:[%s1 + $0x8c] sm:$0xf]
        %v351 = vld [vmem:[%s1 + $0x90] sm:$0xf]
        %v352 = vld [vmem:[%s1 + $0x94] sm:$0xf]
        %v353 = vld [vmem:[%s1 + $0x98] sm:$0xf]
        %v354 = vld [vmem:[%s1 + $0x9c] sm:$0xf]
        %v355 = vld [vmem:[%s1 + $0xa0] sm:$0xf]
        %v356 = vld [vmem:[%s1 + $0xa4] sm:$0xf]
        %v357 = vld [vmem:[%s1 + $0xa8] sm:$0xf]
        %v358 = vld [vmem:[%s1 + $0xac] sm:$0xf]
        %v359 = vld [vmem:[%s1 + $0xb0] sm:$0xf]
        %v360 = vld [vmem:[%s1 + $0xb4] sm:$0xf]
        %v361 = vld [vmem:[%s1 + $0xb8] sm:$0xf]
        %v362 = vld [vmem:[%s1 + $0xbc] sm:$0xf]
        %v363 = vld [vmem:[%s1 + $0xc0] sm:$0xf]
        %v364 = vld [vmem:[%s1 + $0xc4] sm:$0xf]
        %v365 = vld [vmem:[%s1 + $0xc8] sm:$0xf]
        %v366 = vld [vmem:[%s1 + $0xcc] sm:$0xf]
        %v367 = vld [vmem:[%s1 + $0xd0] sm:$0xf]
        %v368 = vld [vmem:[%s1 + $0xd4] sm:$0xf]
        %v369 = vld [vmem:[%s1 + $0xd8] sm:$0xf]
        %v370 = vld [vmem:[%s1 + $0xdc] sm:$0xf]
        %v371 = vld [vmem:[%s1 + $0xe0] sm:$0xf]
        %v372 = vld [vmem:[%s1 + $0xe4] sm:$0xf]
        %v373 = vld [vmem:[%s1 + $0xe8] sm:$0xf]
        %v374 = vld [vmem:[%s1 + $0xec] sm:$0xf]
        %v375 = vld [vmem:[%s1 + $0xf0] sm:$0xf]
        %v376 = vld [vmem:[%s1 + $0xf4] sm:$0xf]
        %v377 = vld [vmem:[%s1 + $0xf8] sm:$0xf]
        %v378 = vld [vmem:[%s1 + $0xfc] sm:$0xf]
        %v379 = vld [vmem:[%s1 + $0x100] sm:$0xf]
        %v380 = vld [vmem:[%s1 + $0x104] sm:$0xf]
        %v381 = vld [vmem:[%s1 + $0x108] sm:$0xf]
        %v382 = vld [vmem:[%s1 + $0x10c] sm:$0xf]
        %v383 = vld [vmem:[%s1 + $0x110] sm:$0xf]
        %v384 = vld [vmem:[%s1 + $0x114] sm:$0xf]
        %v385 = vld [vmem:[%s1 + $0x118] sm:$0xf]
        %v386 = vld [vmem:[%s1 + $0x11c] sm:$0xf]
        %v387 = vld [vmem:[%s1 + $0x120] sm:$0xf]
        %v388 = vld [vmem:[%s1 + $0x124] sm:$0xf]
        %v389 = vld [vmem:[%s1 + $0x128] sm:$0xf]
        %v390 = vld [vmem:[%s1 + $0x12c] sm:$0xf]
        %v391 = vld [vmem:[%s1 + $0x130] sm:$0xf]
        %v392 = vld [vmem:[%s1 + $0x134] sm:$0xf]
        %v393 = vld [vmem:[%s1 + $0x138] sm:$0xf]
        %v394 = vld [vmem:[%s1 + $0x13c] sm:$0xf]
        %v395 = vld [vmem:[%s1 + $0x140] sm:$0xf]
        %v396 = vld [vmem:[%s1 + $0x144] sm:$0xf]
        %v397 = vld [vmem:[%s1 + $0x148] sm:$0xf]
        %v398 = vld [vmem:[%s1 + $0x14c] sm:$0xf]
        %v399 = vld [vmem:[%s1 + $0x150] sm:$0xf]
        %v400 = vld [vmem:[%s1 + $0x154] sm:$0xf]
        %v401 = vld [vmem:[%s1 + $0x158] sm:$0xf]
        %v402 = vld [vmem:[%s1 + $0x15c] sm:$0xf]
        %v403 = vld [vmem:[%s1 + $0x160] sm:$0xf]
        %v404 = vld [vmem:[%s1 + $0x164] sm:$0xf]
        %v405 = vld [vmem:[%s1 + $0x168] sm:$0xf]
        %v406 = vld [vmem:[%s1 + $0x16c] sm:$0xf]
        %v407 = vld [vmem:[%s1 + $0x170] sm:$0xf]
        %v408 = vld [vmem:[%s1 + $0x174] sm:$0xf]
        %v409 = vld [vmem:[%s1 + $0x178] sm:$0xf]
        %v410 = vld [vmem:[%s1 + $0x17c] sm:$0xf]
        %v411 = vld [vmem:[%s1 + $0x180] sm:$0xf]
        %v412 = vld [vmem:[%s1 + $0x184] sm:$0xf]
        %v413 = vld [vmem:[%s1 + $0x188] sm:$0xf]
        %v414 = vld [vmem:[%s1 + $0x18c] sm:$0xf]
        %v415 = vld [vmem:[%s1 + $0x190] sm:$0xf]
        %v416 = vld [vmem:[%s1 + $0x194] sm:$0xf]
        %v417 = vld [vmem:[%s1 + $0x198] sm:$0xf]
        %v418 = vld [vmem:[%s1 + $0x19c] sm:$0xf]
        %v419 = vld [vmem:[%s1 + $0x1a0] sm:$0xf]
        %v420 = vld [vmem:[%s1 + $0x1a4] sm:$0xf]
        %v421 = vld [vmem:[%s1 + $0x1a8] sm:$0xf]
        %v422 = vld [vmem:[%s1 + $0x1ac] sm:$0xf]
        %v423 = vld [vmem:[%s1 + $0x1b0] sm:$0xf]
        %v424 = vld [vmem:[%s1 + $0x1b4] sm:$0xf]
        %v425 = vld [vmem:[%s1 + $0x1b8] sm:$0xf]
        %v426 = vld [vmem:[%s1 + $0x1bc] sm:$0xf]
        %v427 = vld [vmem:[%s1 + $0x1c0] sm:$0xf]
        %v428 = vld [vmem:[%s1 + $0x1c4] sm:$0xf]
        %v429 = vld [vmem:[%s1 + $0x1c8] sm:$0xf]
        %v430 = vld [vmem:[%s1 + $0x1cc] sm:$0xf]
        %v431 = vld [vmem:[%s1 + $0x1d0] sm:$0xf]
        %v432 = vld [vmem:[%s1 + $0x1d4] sm:$0xf]
        %v433 = vld [vmem:[%s1 + $0x1d8] sm:$0xf]
        %v434 = vld [vmem:[%s1 + $0x1dc] sm:$0xf]
        %v435 = vld [vmem:[%s1 + $0x1e0] sm:$0xf]
        %v436 = vld [vmem:[%s1 + $0x1e4] sm:$0xf]
        %v437 = vld [vmem:[%s1 + $0x1e8] sm:$0xf]
        %v438 = vld [vmem:[%s1 + $0x1ec] sm:$0xf]
        %v439 = vld [vmem:[%s1 + $0x1f0] sm:$0xf]
        %v440 = vld [vmem:[%s1 + $0x1f4] sm:$0xf]
        %v441 = vld [vmem:[%s1 + $0x1f8] sm:$0xf]
        %v442 = vld [vmem:[%s1 + $0x1fc] sm:$0xf]
        %v443 = vld [vmem:[%s1 + $0x200] sm:$0xf]
        %v444 = vld [vmem:[%s1 + $0x204] sm:$0xf]
        %v445 = vld [vmem:[%s1 + $0x208] sm:$0xf]
        %v446 = vld [vmem:[%s1 + $0x20c] sm:$0xf]
        %v447 = vld [vmem:[%s1 + $0x210] sm:$0xf]
        %v448 = vld [vmem:[%s1 + $0x214] sm:$0xf]
        %v449 = vld [vmem:[%s1 + $0x218] sm:$0xf]
        %v450 = vld [vmem:[%s1 + $0x21c] sm:$0xf]
        %v451 = vld [vmem:[%s1 + $0x220] sm:$0xf]
        %v452 = vld [vmem:[%s1 + $0x224] sm:$0xf]
        %v453 = vld [vmem:[%s1 + $0x228] sm:$0xf]
        %v454 = vld [vmem:[%s1 + $0x22c] sm:$0xf]
        %v455 = vld [vmem:[%s1 + $0x230] sm:$0xf]
        %v456 = vld [vmem:[%s1 + $0x234] sm:$0xf]
        %v457 = vld [vmem:[%s1 + $0x238] sm:$0xf]
        %v458 = vld [vmem:[%s1 + $0x23c] sm:$0xf]
        %v459 = vld [vmem:[%s1 + $0x240] sm:$0xf]
        %v460 = vld [vmem:[%s1 + $0x244] sm:$0xf]
        %v461 = vld [vmem:[%s1 + $0x248] sm:$0xf]
        %v462 = vld [vmem:[%s1 + $0x24c] sm:$0xf]
        %v463 = vld [vmem:[%s1 + $0x250] sm:$0xf]
        %v464 = vld [vmem:[%s1 + $0x254] sm:$0xf]
        %v465 = vld [vmem:[%s1 + $0x258] sm:$0xf]
        %v466 = vld [vmem:[%s1 + $0x25c] sm:$0xf]
        %v467 = vld [vmem:[%s1 + $0x260] sm:$0xf]
        %v468 = vld [vmem:[%s1 + $0x264] sm:$0xf]
        %v469 = vld [vmem:[%s1 + $0x268] sm:$0xf]
        %v470 = vld [vmem:[%s1 + $0x26c] sm:$0xf]
        %v471 = vld [vmem:[%s1 + $0x270] sm:$0xf]
        %v472 = vld [vmem:[%s1 + $0x274] sm:$0xf]
        %v473 = vld [vmem:[%s1 + $0x278] sm:$0xf]
        %v474 = vld [vmem:[%s1 + $0x27c] sm:$0xf]
        %v475 = vld [vmem:[%s1 + $0x280] sm:$0xf]
        %v476 = vld [vmem:[%s1 + $0x284] sm:$0xf]
        %v477 = vld [vmem:[%s1 + $0x288] sm:$0xf]
        %v478 = vld [vmem:[%s1 + $0x28c] sm:$0xf]
        %v479 = vld [vmem:[%s1 + $0x290] sm:$0xf]
        %v480 = vld [vmem:[%s1 + $0x294] sm:$0xf]
        %v481 = vld [vmem:[%s1 + $0x298] sm:$0xf]
        %v482 = vld [vmem:[%s1 + $0x29c] sm:$0xf]
        %v483 = vld [vmem:[%s1 + $0x2a0] sm:$0xf]
        %v484 = vld [vmem:[%s1 + $0x2a4] sm:$0xf]
        %v485 = vld [vmem:[%s1 + $0x2a8] sm:$0xf]
        %v486 = vld [vmem:[%s1 + $0x2ac] sm:$0xf]
        %v487 = vld [vmem:[%s1 + $0x2b0] sm:$0xf]
        %v488 = vld [vmem:[%s1 + $0x2b4] sm:$0xf]
        %v489 = vld [vmem:[%s1 + $0x2b8] sm:$0xf]
        %v490 = vld [vmem:[%s1 + $0x2bc] sm:$0xf]
        %v491 = vld [vmem:[%s1 + $0x2c0] sm:$0xf]
        %v492 = vld [vmem:[%s1 + $0x2c4] sm:$0xf]
        %v493 = vld [vmem:[%s1 + $0x2c8] sm:$0xf]
        %v494 = vld [vmem:[%s1 + $0x2cc] sm:$0xf]
        %v495 = vld [vmem:[%s1 + $0x2d0] sm:$0xf]
        %v496 = vld [vmem:[%s1 + $0x2d4] sm:$0xf]
        %v497 = vld [vmem:[%s1 + $0x2d8] sm:$0xf]
        %v498 = vld [vmem:[%s1 + $0x2dc] sm:$0xf]
        %v499 = vld [vmem:[%s1 + $0x2e0] sm:$0xf]
        %v500 = vld [vmem:[%s1 + $0x2e4] sm:$0xf]
        %v501 = vld [vmem:[%s1 + $0x2e8] sm:$0xf]
        %v502 = vld [vmem:[%s1 + $0x2ec] sm:$0xf]
        %v503 = vld [vmem:[%s1 + $0x2f0] sm:$0xf]
        %v504 = vld [vmem:[%s1 + $0x2f4] sm:$0xf]
        %v505 = vld [vmem:[%s1 + $0x2f8] sm:$0xf]
        %v506 = vld [vmem:[%s1 + $0x2fc] sm:$0xf]
        %v507 = vld [vmem:[%s1 + $0x300] sm:$0xf]
        %v508 = vld [vmem:[%s1 + $0x304] sm:$0xf]
        %v509 = vld [vmem:[%s1 + $0x308] sm:$0xf]
        %v510 = vld [vmem:[%s1 + $0x30c] sm:$0xf]
        %v511 = vld [vmem:[%s1 + $0x310] sm:$0xf]
        %v512 = vld [vmem:[%s1 + $0x314] sm:$0xf]
        %v513 = vld [vmem:[%s1 + $0x318] sm:$0xf]
        %v514 = vld [vmem:[%s1 + $0x31c] sm:$0xf]
        %v515 = vld [vmem:[%s286] sm:$0xff]
        %v516 = vld [vmem:[%s286 + $0x8] sm:$0xff]
        %v517 = vld [vmem:[%s286 + $0x10] sm:$0xff]
        %v518 = vld [vmem:[%s286 + $0x18] sm:$0xff]
        %v519 = vld [vmem:[%s286 + $0x20] sm:$0xff]
        %v520 = vld [vmem:[%s286 + $0x28] sm:$0xff]
        %v521 = vld [vmem:[%s286 + $0x30] sm:$0xf]
        %v522 = vld [vmem:[%s286 + $0x34] sm:$0xff]
        %v523 = vld [vmem:[%s286 + $0x3c] sm:$0xff]
        %v524 = vld [vmem:[%s286 + $0x44] sm:$0xff]
        %v525 = vld [vmem:[%s286 + $0x4c] sm:$0xff]
        %v526 = vld [vmem:[%s286 + $0x54] sm:$0xff]
        %v527 = vld [vmem:[%s286 + $0x5c] sm:$0xff]
        %v528 = vld [vmem:[%s286 + $0x64] sm:$0xf]
        %v543 = vunpack.c.l.b16 %v515
        %v544 = vunpack.c.h.b16 %v515
        %v545 = vunpack.c.l.b16 %v516
        %v546 = vunpack.c.h.b16 %v516
        %v547 = vunpack.c.l.b16 %v517
        %v548 = vunpack.c.h.b16 %v517
        %v549 = vunpack.c.l.b16 %v518
        %v550 = vunpack.c.h.b16 %v518
        %v551 = vunpack.c.l.b16 %v519
        %v552 = vunpack.c.h.b16 %v519
        %v553 = vunpack.c.l.b16 %v520
        %v554 = vunpack.c.h.b16 %v520
        %v555 = vunpack.c.l.b16 %v521
        %v556 = vunpack.c.l.b16 %v522
        %v557 = vunpack.c.h.b16 %v522
        %v558 = vunpack.c.l.b16 %v523
        %v559 = vunpack.c.h.b16 %v523
        %v560 = vunpack.c.l.b16 %v524
        %v561 = vunpack.c.h.b16 %v524
        %v562 = vunpack.c.l.b16 %v525
        %v563 = vunpack.c.h.b16 %v525
        %v564 = vunpack.c.l.b16 %v526
        %v565 = vunpack.c.h.b16 %v526
        %v566 = vunpack.c.l.b16 %v527
        %v567 = vunpack.c.h.b16 %v527
        %v568 = vunpack.c.l.b16 %v528
        %v569 = vpack.c.b16 %v556, %v543
        %v570 = vpack.c.b16 %v557, %v544
        %v571 = vpack.c.b16 %v558, %v545
        %v572 = vpack.c.b16 %v559, %v546
        %v573 = vpack.c.b16 %v560, %v547
        %v574 = vpack.c.b16 %v561, %v548
        %v575 = vpack.c.b16 %v562, %v549
        %v576 = vpack.c.b16 %v563, %v550
        %v577 = vpack.c.b16 %v564, %v551
        %v578 = vpack.c.b16 %v565, %v552
        %v579 = vpack.c.b16 %v566, %v553
        %v580 = vpack.c.b16 %v567, %v554
        %v581 = vpack.c.b16 %v568, %v555
        %v794 = vunpack.c.l.b16 %v315
        %v795 = vunpack.c.l.b16 %v316
        %v796 = vunpack.c.l.b16 %v317
        %v797 = vunpack.c.l.b16 %v318
        %v798 = vunpack.c.l.b16 %v319
        %v799 = vunpack.c.l.b16 %v320
        %v800 = vunpack.c.l.b16 %v321
        %v801 = vunpack.c.l.b16 %v322
        %v802 = vunpack.c.l.b16 %v323
        %v803 = vunpack.c.l.b16 %v324
        %v804 = vunpack.c.l.b16 %v325
        %v805 = vunpack.c.l.b16 %v326
        %v806 = vunpack.c.l.b16 %v327
        %v807 = vunpack.c.l.b16 %v328
        %v808 = vunpack.c.l.b16 %v329
        %v809 = vunpack.c.l.b16 %v330
        %v810 = vunpack.c.l.b16 %v331
        %v811 = vunpack.c.l.b16 %v332
        %v812 = vunpack.c.l.b16 %v333
        %v813 = vunpack.c.l.b16 %v334
        %v814 = vunpack.c.l.b16 %v335
        %v815 = vunpack.c.l.b16 %v336
        %v816 = vunpack.c.l.b16 %v337
        %v817 = vunpack.c.l.b16 %v338
        %v818 = vunpack.c.l.b16 %v339
        %v819 = vunpack.c.l.b16 %v340
        %v820 = vunpack.c.l.b16 %v341
        %v821 = vunpack.c.l.b16 %v342
        %v822 = vunpack.c.l.b16 %v343
        %v823 = vunpack.c.l.b16 %v344
        %v824 = vunpack.c.l.b16 %v345
        %v825 = vunpack.c.l.b16 %v346
        %v826 = vunpack.c.l.b16 %v347
        %v827 = vunpack.c.l.b16 %v348
        %v828 = vunpack.c.l.b16 %v349
        %v829 = vunpack.c.l.b16 %v350
        %v830 = vunpack.c.l.b16 %v351
        %v831 = vunpack.c.l.b16 %v352
        %v832 = vunpack.c.l.b16 %v353
        %v833 = vunpack.c.l.b16 %v354
        %v834 = vunpack.c.l.b16 %v355
        %v835 = vunpack.c.l.b16 %v356
        %v836 = vunpack.c.l.b16 %v357
        %v837 = vunpack.c.l.b16 %v358
        %v838 = vunpack.c.l.b16 %v359
        %v839 = vunpack.c.l.b16 %v360
        %v840 = vunpack.c.l.b16 %v361
        %v841 = vunpack.c.l.b16 %v362
        %v842 = vunpack.c.l.b16 %v363
        %v843 = vunpack.c.l.b16 %v364
        %v844 = vunpack.c.l.b16 %v365
        %v845 = vunpack.c.l.b16 %v366
        %v846 = vunpack.c.l.b16 %v367
        %v847 = vunpack.c.l.b16 %v368
        %v848 = vunpack.c.l.b16 %v369
        %v849 = vunpack.c.l.b16 %v370
        %v850 = vunpack.c.l.b16 %v371
        %v851 = vunpack.c.l.b16 %v372
        %v852 = vunpack.c.l.b16 %v373
        %v853 = vunpack.c.l.b16 %v374
        %v854 = vunpack.c.l.b16 %v375
        %v855 = vunpack.c.l.b16 %v376
        %v856 = vunpack.c.l.b16 %v377
        %v857 = vunpack.c.l.b16 %v378
        %v858 = vunpack.c.l.b16 %v379
        %v859 = vunpack.c.l.b16 %v380
        %v860 = vunpack.c.l.b16 %v381
        %v861 = vunpack.c.l.b16 %v382
        %v862 = vunpack.c.l.b16 %v383
        %v863 = vunpack.c.l.b16 %v384
        %v864 = vunpack.c.l.b16 %v385
        %v865 = vunpack.c.l.b16 %v386
        %v866 = vunpack.c.l.b16 %v387
        %v867 = vunpack.c.l.b16 %v388
        %v868 = vunpack.c.l.b16 %v389
        %v869 = vunpack.c.l.b16 %v390
        %v870 = vunpack.c.l.b16 %v391
        %v871 = vunpack.c.l.b16 %v392
        %v872 = vunpack.c.l.b16 %v393
        %v873 = vunpack.c.l.b16 %v394
        %v874 = vunpack.c.l.b16 %v395
        %v875 = vunpack.c.l.b16 %v396
        %v876 = vunpack.c.l.b16 %v397
        %v877 = vunpack.c.l.b16 %v398
        %v878 = vunpack.c.l.b16 %v399
        %v879 = vunpack.c.l.b16 %v400
        %v880 = vunpack.c.l.b16 %v401
        %v881 = vunpack.c.l.b16 %v402
        %v882 = vunpack.c.l.b16 %v403
        %v883 = vunpack.c.l.b16 %v404
        %v884 = vunpack.c.l.b16 %v405
        %v885 = vunpack.c.l.b16 %v406
        %v886 = vunpack.c.l.b16 %v407
        %v887 = vunpack.c.l.b16 %v408
        %v888 = vunpack.c.l.b16 %v409
        %v889 = vunpack.c.l.b16 %v410
        %v890 = vunpack.c.l.b16 %v411
        %v891 = vunpack.c.l.b16 %v412
        %v892 = vunpack.c.l.b16 %v413
        %v893 = vunpack.c.l.b16 %v414
        %v894 = vunpack.c.l.b16 %v415
        %v895 = vunpack.c.l.b16 %v416
        %v896 = vunpack.c.l.b16 %v417
        %v897 = vunpack.c.l.b16 %v418
        %v898 = vunpack.c.l.b16 %v419
        %v899 = vunpack.c.l.b16 %v420
        %v900 = vunpack.c.l.b16 %v421
        %v901 = vunpack.c.l.b16 %v422
        %v902 = vunpack.c.l.b16 %v423
        %v903 = vunpack.c.l.b16 %v424
        %v904 = vunpack.c.l.b16 %v425
        %v905 = vunpack.c.l.b16 %v426
        %v906 = vunpack.c.l.b16 %v427
        %v907 = vunpack.c.l.b16 %v428
        %v908 = vunpack.c.l.b16 %v429
        %v909 = vunpack.c.l.b16 %v430
        %v910 = vunpack.c.l.b16 %v431
        %v911 = vunpack.c.l.b16 %v432
        %v912 = vunpack.c.l.b16 %v433
        %v913 = vunpack.c.l.b16 %v434
        %v914 = vunpack.c.l.b16 %v435
        %v915 = vunpack.c.l.b16 %v436
        %v916 = vunpack.c.l.b16 %v437
        %v917 = vunpack.c.l.b16 %v438
        %v918 = vunpack.c.l.b16 %v439
        %v919 = vunpack.c.l.b16 %v440
        %v920 = vunpack.c.l.b16 %v441
        %v921 = vunpack.c.l.b16 %v442
        %v922 = vunpack.c.l.b16 %v443
        %v923 = vunpack.c.l.b16 %v444
        %v924 = vunpack.c.l.b16 %v445
        %v925 = vunpack.c.l.b16 %v446
        %v926 = vunpack.c.l.b16 %v447
        %v927 = vunpack.c.l.b16 %v448
        %v928 = vunpack.c.l.b16 %v449
        %v929 = vunpack.c.l.b16 %v450
        %v930 = vunpack.c.l.b16 %v451
        %v931 = vunpack.c.l.b16 %v452
        %v932 = vunpack.c.l.b16 %v453
        %v933 = vunpack.c.l.b16 %v454
        %v934 = vunpack.c.l.b16 %v455
        %v935 = vunpack.c.l.b16 %v456
        %v936 = vunpack.c.l.b16 %v457
        %v937 = vunpack.c.l.b16 %v458
        %v938 = vunpack.c.l.b16 %v459
        %v939 = vunpack.c.l.b16 %v460
        %v940 = vunpack.c.l.b16 %v461
        %v941 = vunpack.c.l.b16 %v462
        %v942 = vunpack.c.l.b16 %v463
        %v943 = vunpack.c.l.b16 %v464
        %v944 = vunpack.c.l.b16 %v465
        %v945 = vunpack.c.l.b16 %v466
        %v946 = vunpack.c.l.b16 %v467
        %v947 = vunpack.c.l.b16 %v468
        %v948 = vunpack.c.l.b16 %v469
        %v949 = vunpack.c.l.b16 %v470
        %v950 = vunpack.c.l.b16 %v471
        %v951 = vunpack.c.l.b16 %v472
        %v952 = vunpack.c.l.b16 %v473
        %v953 = vunpack.c.l.b16 %v474
        %v954 = vunpack.c.l.b16 %v475
        %v955 = vunpack.c.l.b16 %v476
        %v956 = vunpack.c.l.b16 %v477
        %v957 = vunpack.c.l.b16 %v478
        %v958 = vunpack.c.l.b16 %v479
        %v959 = vunpack.c.l.b16 %v480
        %v960 = vunpack.c.l.b16 %v481
        %v961 = vunpack.c.l.b16 %v482
        %v962 = vunpack.c.l.b16 %v483
        %v963 = vunpack.c.l.b16 %v484
        %v964 = vunpack.c.l.b16 %v485
        %v965 = vunpack.c.l.b16 %v486
        %v966 = vunpack.c.l.b16 %v487
        %v967 = vunpack.c.l.b16 %v488
        %v968 = vunpack.c.l.b16 %v489
        %v969 = vunpack.c.l.b16 %v490
        %v970 = vunpack.c.l.b16 %v491
        %v971 = vunpack.c.l.b16 %v492
        %v972 = vunpack.c.l.b16 %v493
        %v973 = vunpack.c.l.b16 %v494
        %v974 = vunpack.c.l.b16 %v495
        %v975 = vunpack.c.l.b16 %v496
        %v976 = vunpack.c.l.b16 %v497
        %v977 = vunpack.c.l.b16 %v498
        %v978 = vunpack.c.l.b16 %v499
        %v979 = vunpack.c.l.b16 %v500
        %v980 = vunpack.c.l.b16 %v501
        %v981 = vunpack.c.l.b16 %v502
        %v982 = vunpack.c.l.b16 %v503
        %v983 = vunpack.c.l.b16 %v504
        %v984 = vunpack.c.l.b16 %v505
        %v985 = vunpack.c.l.b16 %v506
        %v986 = vunpack.c.l.b16 %v507
        %v987 = vunpack.c.l.b16 %v508
        %v988 = vunpack.c.l.b16 %v509
        %v989 = vunpack.c.l.b16 %v510
        %v990 = vunpack.c.l.b16 %v511
        %v991 = vunpack.c.l.b16 %v512
        %v992 = vunpack.c.l.b16 %v513
        %v993 = vunpack.c.l.b16 %v514
        %v994 = vpack.c.b16 %v795, %v794
        %v995 = vpack.c.b16 %v797, %v796
        %v996 = vpack.c.b16 %v799, %v798
        %v997 = vpack.c.b16 %v801, %v800
        %v998 = vpack.c.b16 %v803, %v802
        %v999 = vpack.c.b16 %v805, %v804
        %v1000 = vpack.c.b16 %v807, %v806
        %v1001 = vpack.c.b16 %v809, %v808
        %v1002 = vpack.c.b16 %v811, %v810
        %v1003 = vpack.c.b16 %v813, %v812
        %v1004 = vpack.c.b16 %v815, %v814
        %v1005 = vpack.c.b16 %v817, %v816
        %v1006 = vpack.c.b16 %v819, %v818
        %v1007 = vpack.c.b16 %v821, %v820
        %v1008 = vpack.c.b16 %v823, %v822
        %v1009 = vpack.c.b16 %v825, %v824
        %v1010 = vpack.c.b16 %v827, %v826
        %v1011 = vpack.c.b16 %v829, %v828
        %v1012 = vpack.c.b16 %v831, %v830
        %v1013 = vpack.c.b16 %v833, %v832
        %v1014 = vpack.c.b16 %v835, %v834
        %v1015 = vpack.c.b16 %v837, %v836
        %v1016 = vpack.c.b16 %v839, %v838
        %v1017 = vpack.c.b16 %v841, %v840
        %v1018 = vpack.c.b16 %v843, %v842
        %v1019 = vpack.c.b16 %v845, %v844
        %v1020 = vpack.c.b16 %v847, %v846
        %v1021 = vpack.c.b16 %v849, %v848
        %v1022 = vpack.c.b16 %v851, %v850
        %v1023 = vpack.c.b16 %v853, %v852
        %v1024 = vpack.c.b16 %v855, %v854
        %v1025 = vpack.c.b16 %v857, %v856
        %v1026 = vpack.c.b16 %v859, %v858
        %v1027 = vpack.c.b16 %v861, %v860
        %v1028 = vpack.c.b16 %v863, %v862
        %v1029 = vpack.c.b16 %v865, %v864
        %v1030 = vpack.c.b16 %v867, %v866
        %v1031 = vpack.c.b16 %v869, %v868
        %v1032 = vpack.c.b16 %v871, %v870
        %v1033 = vpack.c.b16 %v873, %v872
        %v1034 = vpack.c.b16 %v875, %v874
        %v1035 = vpack.c.b16 %v877, %v876
        %v1036 = vpack.c.b16 %v879, %v878
        %v1037 = vpack.c.b16 %v881, %v880
        %v1038 = vpack.c.b16 %v883, %v882
        %v1039 = vpack.c.b16 %v885, %v884
        %v1040 = vpack.c.b16 %v887, %v886
        %v1041 = vpack.c.b16 %v889, %v888
        %v1042 = vpack.c.b16 %v891, %v890
        %v1043 = vpack.c.b16 %v893, %v892
        %v1044 = vpack.c.b16 %v895, %v894
        %v1045 = vpack.c.b16 %v897, %v896
        %v1046 = vpack.c.b16 %v899, %v898
        %v1047 = vpack.c.b16 %v901, %v900
        %v1048 = vpack.c.b16 %v903, %v902
        %v1049 = vpack.c.b16 %v905, %v904
        %v1050 = vpack.c.b16 %v907, %v906
        %v1051 = vpack.c.b16 %v909, %v908
        %v1052 = vpack.c.b16 %v911, %v910
        %v1053 = vpack.c.b16 %v913, %v912
        %v1054 = vpack.c.b16 %v915, %v914
        %v1055 = vpack.c.b16 %v917, %v916
        %v1056 = vpack.c.b16 %v919, %v918
        %v1057 = vpack.c.b16 %v921, %v920
        %v1058 = vpack.c.b16 %v923, %v922
        %v1059 = vpack.c.b16 %v925, %v924
        %v1060 = vpack.c.b16 %v927, %v926
        %v1061 = vpack.c.b16 %v929, %v928
        %v1062 = vpack.c.b16 %v931, %v930
        %v1063 = vpack.c.b16 %v933, %v932
        %v1064 = vpack.c.b16 %v935, %v934
        %v1065 = vpack.c.b16 %v937, %v936
        %v1066 = vpack.c.b16 %v939, %v938
        %v1067 = vpack.c.b16 %v941, %v940
        %v1068 = vpack.c.b16 %v943, %v942
        %v1069 = vpack.c.b16 %v945, %v944
        %v1070 = vpack.c.b16 %v947, %v946
        %v1071 = vpack.c.b16 %v949, %v948
        %v1072 = vpack.c.b16 %v951, %v950
        %v1073 = vpack.c.b16 %v953, %v952
        %v1074 = vpack.c.b16 %v955, %v954
        %v1075 = vpack.c.b16 %v957, %v956
        %v1076 = vpack.c.b16 %v959, %v958
        %v1077 = vpack.c.b16 %v961, %v960
        %v1078 = vpack.c.b16 %v963, %v962
        %v1079 = vpack.c.b16 %v965, %v964
        %v1080 = vpack.c.b16 %v967, %v966
        %v1081 = vpack.c.b16 %v969, %v968
        %v1082 = vpack.c.b16 %v971, %v970
        %v1083 = vpack.c.b16 %v973, %v972
        %v1084 = vpack.c.b16 %v975, %v974
        %v1085 = vpack.c.b16 %v977, %v976
        %v1086 = vpack.c.b16 %v979, %v978
        %v1087 = vpack.c.b16 %v981, %v980
        %v1088 = vpack.c.b16 %v983, %v982
        %v1089 = vpack.c.b16 %v985, %v984
        %v1090 = vpack.c.b16 %v987, %v986
        %v1091 = vpack.c.b16 %v989, %v988
        %v1092 = vpack.c.b16 %v991, %v990
        %v1093 = vpack.c.b16 %v993, %v992
        %vm1194 = vcmask 523264
        %v1196 = vsel %vm1194, %v581, 0
        %1198 = vmatprep.subr.bf16.mxu0 0
        %1199 = vmatpush1.bf16.msra.mxu0 %v1001
        %1200 = vmatprep.subr.bf16.mxu0 0
        %1201 = vmatpush1.bf16.msra.mxu0 %v1000
        %1202 = vmatprep.subr.bf16.mxu0 0
        %1203 = vmatpush1.bf16.msra.mxu0 %v999
        %1204 = vmatprep.subr.bf16.mxu0 0
        %1205 = vmatpush1.bf16.msra.mxu0 %v998
        %1206 = vmatprep.subr.bf16.mxu0 0
        %1207 = vmatpush1.bf16.msra.mxu0 %v997
        %1208 = vmatprep.subr.bf16.mxu0 0
        %1209 = vmatpush1.bf16.msra.mxu0 %v996
        %1210 = vmatprep.subr.bf16.mxu0 0
        %1211 = vmatpush1.bf16.msra.mxu0 %v995
        %1212 = vmatprep.subr.bf16.mxu0 0
        %1213 = vmatpush1.bf16.msra.mxu0 %v994
        %1214 = vmatprep.subr.bf16.mxu0 0
        %1215 = vmatpush2.bf16.msra.mxu0 %v1009
        %1216 = vmatprep.subr.bf16.mxu0 0
        %1217 = vmatpush2.bf16.msra.mxu0 %v1008
        %1218 = vmatprep.subr.bf16.mxu0 0
        %1219 = vmatpush2.bf16.msra.mxu0 %v1007
        %1220 = vmatprep.subr.bf16.mxu0 0
        %1221 = vmatpush2.bf16.msra.mxu0 %v1006
        %1222 = vmatprep.subr.bf16.mxu0 0
        %1223 = vmatpush2.bf16.msra.mxu0 %v1005
        %1224 = vmatprep.subr.bf16.mxu0 0
        %1225 = vmatpush2.bf16.msra.mxu0 %v1004
        %1226 = vmatprep.subr.bf16.mxu0 0
        %1227 = vmatpush2.bf16.msra.mxu0 %v1003
        %1228 = vmatprep.subr.bf16.mxu0 0
        %1229 = vmatpush2.bf16.msra.mxu0 %v1002
        %1230 = vmatprep.mubr.bf16.mxu0 %v570
        %1231 = vmatmul.mubr.bf16.gmra.mxu0 %v569
        %v1232 = vpop.f32.mrf.mxu0
        %v1233 = vadd.f32 0.0, %v1232
        %v1234 = vpop.f32.mrf.mxu0
        %v1235 = vpop.f32.mrf.mxu0
        %v1236 = vadd.f32 0.0, %v1235
        %v1237 = vpop.f32.mrf.mxu0
        %1238 = vdwg.mxu0
        %1239 = vmatprep.subr.bf16.mxu0 0
        %1240 = vmatpush1.bf16.msra.mxu0 %v1017
        %1241 = vmatprep.subr.bf16.mxu0 0
        %1242 = vmatpush1.bf16.msra.mxu0 %v1016
        %1243 = vmatprep.subr.bf16.mxu0 0
        %1244 = vmatpush1.bf16.msra.mxu0 %v1015
        %1245 = vmatprep.subr.bf16.mxu0 0
        %1246 = vmatpush1.bf16.msra.mxu0 %v1014
        %1247 = vmatprep.subr.bf16.mxu0 0
        %1248 = vmatpush1.bf16.msra.mxu0 %v1013
        %1249 = vmatprep.subr.bf16.mxu0 0
        %1250 = vmatpush1.bf16.msra.mxu0 %v1012
        %1251 = vmatprep.subr.bf16.mxu0 0
        %1252 = vmatpush1.bf16.msra.mxu0 %v1011
        %1253 = vmatprep.subr.bf16.mxu0 0
        %1254 = vmatpush1.bf16.msra.mxu0 %v1010
        %1255 = vmatprep.subr.bf16.mxu0 0
        %1256 = vmatpush2.bf16.msra.mxu0 %v1025
        %1257 = vmatprep.subr.bf16.mxu0 0
        %1258 = vmatpush2.bf16.msra.mxu0 %v1024
        %1259 = vmatprep.subr.bf16.mxu0 0
        %1260 = vmatpush2.bf16.msra.mxu0 %v1023
        %1261 = vmatprep.subr.bf16.mxu0 0
        %1262 = vmatpush2.bf16.msra.mxu0 %v1022
        %1263 = vmatprep.subr.bf16.mxu0 0
        %1264 = vmatpush2.bf16.msra.mxu0 %v1021
        %1265 = vmatprep.subr.bf16.mxu0 0
        %1266 = vmatpush2.bf16.msra.mxu0 %v1020
        %1267 = vmatprep.subr.bf16.mxu0 0
        %1268 = vmatpush2.bf16.msra.mxu0 %v1019
        %1269 = vmatprep.subr.bf16.mxu0 0
        %1270 = vmatpush2.bf16.msra.mxu0 %v1018
        %1271 = vmatprep.mubr.bf16.mxu0 %v572
        %1272 = vmatmul.mubr.bf16.gmra.mxu0 %v571
        %v1273 = vpop.f32.mrf.mxu0
        %v1274 = vadd.f32 %v1233, %v1273
        %v1275 = vpop.f32.mrf.mxu0
        %v1276 = vpop.f32.mrf.mxu0
        %v1277 = vadd.f32 %v1236, %v1276
        %v1278 = vpop.f32.mrf.mxu0
        %1279 = vdwg.mxu0
        %1280 = vmatprep.subr.bf16.mxu0 0
        %1281 = vmatpush1.bf16.msra.mxu0 %v1033
        %1282 = vmatprep.subr.bf16.mxu0 0
        %1283 = vmatpush1.bf16.msra.mxu0 %v1032
        %1284 = vmatprep.subr.bf16.mxu0 0
        %1285 = vmatpush1.bf16.msra.mxu0 %v1031
        %1286 = vmatprep.subr.bf16.mxu0 0
        %1287 = vmatpush1.bf16.msra.mxu0 %v1030
        %1288 = vmatprep.subr.bf16.mxu0 0
        %1289 = vmatpush1.bf16.msra.mxu0 %v1029
        %1290 = vmatprep.subr.bf16.mxu0 0
        %1291 = vmatpush1.bf16.msra.mxu0 %v1028
        %1292 = vmatprep.subr.bf16.mxu0 0
        %1293 = vmatpush1.bf16.msra.mxu0 %v1027
        %1294 = vmatprep.subr.bf16.mxu0 0
        %1295 = vmatpush1.bf16.msra.mxu0 %v1026
        %1296 = vmatprep.subr.bf16.mxu0 0
        %1297 = vmatpush2.bf16.msra.mxu0 %v1041
        %1298 = vmatprep.subr.bf16.mxu0 0
        %1299 = vmatpush2.bf16.msra.mxu0 %v1040
        %1300 = vmatprep.subr.bf16.mxu0 0
        %1301 = vmatpush2.bf16.msra.mxu0 %v1039
        %1302 = vmatprep.subr.bf16.mxu0 0
        %1303 = vmatpush2.bf16.msra.mxu0 %v1038
        %1304 = vmatprep.subr.bf16.mxu0 0
        %1305 = vmatpush2.bf16.msra.mxu0 %v1037
        %1306 = vmatprep.subr.bf16.mxu0 0
        %1307 = vmatpush2.bf16.msra.mxu0 %v1036
        %1308 = vmatprep.subr.bf16.mxu0 0
        %1309 = vmatpush2.bf16.msra.mxu0 %v1035
        %1310 = vmatprep.subr.bf16.mxu0 0
        %1311 = vmatpush2.bf16.msra.mxu0 %v1034
        %1312 = vmatprep.mubr.bf16.mxu0 %v574
        %1313 = vmatmul.mubr.bf16.gmra.mxu0 %v573
        %v1314 = vpop.f32.mrf.mxu0
        %v1315 = vadd.f32 %v1274, %v1314
        %v1316 = vpop.f32.mrf.mxu0
        %v1317 = vpop.f32.mrf.mxu0
        %v1318 = vadd.f32 %v1277, %v1317
        %v1319 = vpop.f32.mrf.mxu0
        %1320 = vdwg.mxu0
        %1321 = vmatprep.subr.bf16.mxu0 0
        %1322 = vmatpush1.bf16.msra.mxu0 %v1049
        %1323 = vmatprep.subr.bf16.mxu0 0
        %1324 = vmatpush1.bf16.msra.mxu0 %v1048
        %1325 = vmatprep.subr.bf16.mxu0 0
        %1326 = vmatpush1.bf16.msra.mxu0 %v1047
        %1327 = vmatprep.subr.bf16.mxu0 0
        %1328 = vmatpush1.bf16.msra.mxu0 %v1046
        %1329 = vmatprep.subr.bf16.mxu0 0
        %1330 = vmatpush1.bf16.msra.mxu0 %v1045
        %1331 = vmatprep.subr.bf16.mxu0 0
        %1332 = vmatpush1.bf16.msra.mxu0 %v1044
        %1333 = vmatprep.subr.bf16.mxu0 0
        %1334 = vmatpush1.bf16.msra.mxu0 %v1043
        %1335 = vmatprep.subr.bf16.mxu0 0
        %1336 = vmatpush1.bf16.msra.mxu0 %v1042
        %1337 = vmatprep.subr.bf16.mxu0 0
        %1338 = vmatpush2.bf16.msra.mxu0 %v1057
        %1339 = vmatprep.subr.bf16.mxu0 0
        %1340 = vmatpush2.bf16.msra.mxu0 %v1056
        %1341 = vmatprep.subr.bf16.mxu0 0
        %1342 = vmatpush2.bf16.msra.mxu0 %v1055
        %1343 = vmatprep.subr.bf16.mxu0 0
        %1344 = vmatpush2.bf16.msra.mxu0 %v1054
        %1345 = vmatprep.subr.bf16.mxu0 0
        %1346 = vmatpush2.bf16.msra.mxu0 %v1053
        %1347 = vmatprep.subr.bf16.mxu0 0
        %1348 = vmatpush2.bf16.msra.mxu0 %v1052
        %1349 = vmatprep.subr.bf16.mxu0 0
        %1350 = vmatpush2.bf16.msra.mxu0 %v1051
        %1351 = vmatprep.subr.bf16.mxu0 0
        %1352 = vmatpush2.bf16.msra.mxu0 %v1050
        %1353 = vmatprep.mubr.bf16.mxu0 %v576
        %1354 = vmatmul.mubr.bf16.gmra.mxu0 %v575
        %v1355 = vpop.f32.mrf.mxu0
        %v1356 = vadd.f32 %v1315, %v1355
        %v1357 = vpop.f32.mrf.mxu0
        %v1358 = vpop.f32.mrf.mxu0
        %v1359 = vadd.f32 %v1318, %v1358
        %v1360 = vpop.f32.mrf.mxu0
        %1361 = vdwg.mxu0
        %1362 = vmatprep.subr.bf16.mxu0 0
        %1363 = vmatpush1.bf16.msra.mxu0 %v1065
        %1364 = vmatprep.subr.bf16.mxu0 0
        %1365 = vmatpush1.bf16.msra.mxu0 %v1064
        %1366 = vmatprep.subr.bf16.mxu0 0
        %1367 = vmatpush1.bf16.msra.mxu0 %v1063
        %1368 = vmatprep.subr.bf16.mxu0 0
        %1369 = vmatpush1.bf16.msra.mxu0 %v1062
        %1370 = vmatprep.subr.bf16.mxu0 0
        %1371 = vmatpush1.bf16.msra.mxu0 %v1061
        %1372 = vmatprep.subr.bf16.mxu0 0
        %1373 = vmatpush1.bf16.msra.mxu0 %v1060
        %1374 = vmatprep.subr.bf16.mxu0 0
        %1375 = vmatpush1.bf16.msra.mxu0 %v1059
        %1376 = vmatprep.subr.bf16.mxu0 0
        %1377 = vmatpush1.bf16.msra.mxu0 %v1058
        %1378 = vmatprep.subr.bf16.mxu0 0
        %1379 = vmatpush2.bf16.msra.mxu0 %v1073
        %1380 = vmatprep.subr.bf16.mxu0 0
        %1381 = vmatpush2.bf16.msra.mxu0 %v1072
        %1382 = vmatprep.subr.bf16.mxu0 0
        %1383 = vmatpush2.bf16.msra.mxu0 %v1071
        %1384 = vmatprep.subr.bf16.mxu0 0
        %1385 = vmatpush2.bf16.msra.mxu0 %v1070
        %1386 = vmatprep.subr.bf16.mxu0 0
        %1387 = vmatpush2.bf16.msra.mxu0 %v1069
        %1388 = vmatprep.subr.bf16.mxu0 0
        %1389 = vmatpush2.bf16.msra.mxu0 %v1068
        %1390 = vmatprep.subr.bf16.mxu0 0
        %1391 = vmatpush2.bf16.msra.mxu0 %v1067
        %1392 = vmatprep.subr.bf16.mxu0 0
        %1393 = vmatpush2.bf16.msra.mxu0 %v1066
        %1394 = vmatprep.mubr.bf16.mxu0 %v578
        %1395 = vmatmul.mubr.bf16.gmra.mxu0 %v577
        %v1396 = vpop.f32.mrf.mxu0
        %v1397 = vadd.f32 %v1356, %v1396
        %v1398 = vpop.f32.mrf.mxu0
        %v1399 = vpop.f32.mrf.mxu0
        %v1400 = vadd.f32 %v1359, %v1399
        %v1401 = vpop.f32.mrf.mxu0
        %1402 = vdwg.mxu0
        %1403 = vmatprep.subr.bf16.mxu0 0
        %1404 = vmatpush1.bf16.msra.mxu0 %v1081
        %1405 = vmatprep.subr.bf16.mxu0 0
        %1406 = vmatpush1.bf16.msra.mxu0 %v1080
        %1407 = vmatprep.subr.bf16.mxu0 0
        %1408 = vmatpush1.bf16.msra.mxu0 %v1079
        %1409 = vmatprep.subr.bf16.mxu0 0
        %1410 = vmatpush1.bf16.msra.mxu0 %v1078
        %1411 = vmatprep.subr.bf16.mxu0 0
        %1412 = vmatpush1.bf16.msra.mxu0 %v1077
        %1413 = vmatprep.subr.bf16.mxu0 0
        %1414 = vmatpush1.bf16.msra.mxu0 %v1076
        %1415 = vmatprep.subr.bf16.mxu0 0
        %1416 = vmatpush1.bf16.msra.mxu0 %v1075
        %1417 = vmatprep.subr.bf16.mxu0 0
        %1418 = vmatpush1.bf16.msra.mxu0 %v1074
        %1419 = vmatprep.subr.bf16.mxu0 0
        %1420 = vmatpush2.bf16.msra.mxu0 %v1089
        %1421 = vmatprep.subr.bf16.mxu0 0
        %1422 = vmatpush2.bf16.msra.mxu0 %v1088
        %1423 = vmatprep.subr.bf16.mxu0 0
        %1424 = vmatpush2.bf16.msra.mxu0 %v1087
        %1425 = vmatprep.subr.bf16.mxu0 0
        %1426 = vmatpush2.bf16.msra.mxu0 %v1086
        %1427 = vmatprep.subr.bf16.mxu0 0
        %1428 = vmatpush2.bf16.msra.mxu0 %v1085
        %1429 = vmatprep.subr.bf16.mxu0 0
        %1430 = vmatpush2.bf16.msra.mxu0 %v1084
        %1431 = vmatprep.subr.bf16.mxu0 0
        %1432 = vmatpush2.bf16.msra.mxu0 %v1083
        %1433 = vmatprep.subr.bf16.mxu0 0
        %1434 = vmatpush2.bf16.msra.mxu0 %v1082
        %1435 = vmatprep.mubr.bf16.mxu0 %v580
        %1436 = vmatmul.mubr.bf16.gmra.mxu0 %v579
        %v1437 = vpop.f32.mrf.mxu0
        %v1438 = vadd.f32 %v1397, %v1437
        %v1439 = vpop.f32.mrf.mxu0
        %v1440 = vpop.f32.mrf.mxu0
        %v1441 = vadd.f32 %v1400, %v1440
        %v1442 = vpop.f32.mrf.mxu0
        %1443 = vdwg.mxu0
        %1444 = vmatprep.subr.bf16.mxu0 0
        %1445 = vmatpush1.bf16.msra.mxu0 0
        %1446 = vmatprep.subr.bf16.mxu0 0
        %1447 = vmatpush1.bf16.msra.mxu0 0
        %1448 = vmatprep.subr.bf16.mxu0 0
        %1449 = vmatpush1.bf16.msra.mxu0 0
        %1450 = vmatprep.subr.bf16.mxu0 0
        %1451 = vmatpush1.bf16.msra.mxu0 0
        %1452 = vmatprep.subr.bf16.mxu0 0
        %1453 = vmatpush1.bf16.msra.mxu0 %v1093
        %1454 = vmatprep.subr.bf16.mxu0 0
        %1455 = vmatpush1.bf16.msra.mxu0 %v1092
        %1456 = vmatprep.subr.bf16.mxu0 0
        %1457 = vmatpush1.bf16.msra.mxu0 %v1091
        %1458 = vmatprep.subr.bf16.mxu0 0
        %1459 = vmatpush1.bf16.msra.mxu0 %v1090
        %1460 = vmatprep.subr.bf16.mxu0 0
        %1461 = vmatpush2.bf16.msra.mxu0 0
        %1462 = vmatprep.subr.bf16.mxu0 0
        %1463 = vmatpush2.bf16.msra.mxu0 0
        %1464 = vmatprep.subr.bf16.mxu0 0
        %1465 = vmatpush2.bf16.msra.mxu0 0
        %1466 = vmatprep.subr.bf16.mxu0 0
        %1467 = vmatpush2.bf16.msra.mxu0 0
        %1468 = vmatprep.subr.bf16.mxu0 0
        %1469 = vmatpush2.bf16.msra.mxu0 0
        %1470 = vmatprep.subr.bf16.mxu0 0
        %1471 = vmatpush2.bf16.msra.mxu0 0
        %1472 = vmatprep.subr.bf16.mxu0 0
        %1473 = vmatpush2.bf16.msra.mxu0 0
        %1474 = vmatprep.subr.bf16.mxu0 0
        %1475 = vmatpush2.bf16.msra.mxu0 0
        %1476 = vmatprep.mubr.bf16.mxu0 0
        %1477 = vmatmul.mubr.bf16.gmra.mxu0 %v1196
        %v1478 = vpop.f32.mrf.mxu0
        %v1479 = vadd.f32 %v1438, %v1478
        %v1480 = vpop.f32.mrf.mxu0
        %v1481 = vpop.f32.mrf.mxu0
        %v1482 = vadd.f32 %v1441, %v1481
        %v1483 = vpop.f32.mrf.mxu0
        %1484 = vdwg.mxu0
        %s1485 = scalar_lea.vmem %s286, 104 [#allocation2]
        %v1486 = vld [vmem:[%s1485] sm:$0xff]
        %v1487 = vld [vmem:[%s1485 + $0x8] sm:$0xff]
        %v1488 = vld [vmem:[%s1485 + $0x10] sm:$0xff]
        %v1489 = vld [vmem:[%s1485 + $0x18] sm:$0xff]
        %v1490 = vld [vmem:[%s1485 + $0x20] sm:$0xff]
        %v1491 = vld [vmem:[%s1485 + $0x28] sm:$0xff]
        %v1492 = vld [vmem:[%s1485 + $0x30] sm:$0xf]
        %v1493 = vld [vmem:[%s1485 + $0x34] sm:$0xff]
        %v1494 = vld [vmem:[%s1485 + $0x3c] sm:$0xff]
        %v1495 = vld [vmem:[%s1485 + $0x44] sm:$0xff]
        %v1496 = vld [vmem:[%s1485 + $0x4c] sm:$0xff]
        %v1497 = vld [vmem:[%s1485 + $0x54] sm:$0xff]
        %v1498 = vld [vmem:[%s1485 + $0x5c] sm:$0xff]
        %v1499 = vld [vmem:[%s1485 + $0x64] sm:$0xf]
        %v1514 = vunpack.c.l.b16 %v1486
        %v1515 = vunpack.c.h.b16 %v1486
        %v1516 = vunpack.c.l.b16 %v1487
        %v1517 = vunpack.c.h.b16 %v1487
        %v1518 = vunpack.c.l.b16 %v1488
        %v1519 = vunpack.c.h.b16 %v1488
        %v1520 = vunpack.c.l.b16 %v1489
        %v1521 = vunpack.c.h.b16 %v1489
        %v1522 = vunpack.c.l.b16 %v1490
        %v1523 = vunpack.c.h.b16 %v1490
        %v1524 = vunpack.c.l.b16 %v1491
        %v1525 = vunpack.c.h.b16 %v1491
        %v1526 = vunpack.c.l.b16 %v1492
        %v1527 = vunpack.c.l.b16 %v1493
        %v1528 = vunpack.c.h.b16 %v1493
        %v1529 = vunpack.c.l.b16 %v1494
        %v1530 = vunpack.c.h.b16 %v1494
        %v1531 = vunpack.c.l.b16 %v1495
        %v1532 = vunpack.c.h.b16 %v1495
        %v1533 = vunpack.c.l.b16 %v1496
        %v1534 = vunpack.c.h.b16 %v1496
        %v1535 = vunpack.c.l.b16 %v1497
        %v1536 = vunpack.c.h.b16 %v1497
        %v1537 = vunpack.c.l.b16 %v1498
        %v1538 = vunpack.c.h.b16 %v1498
        %v1539 = vunpack.c.l.b16 %v1499
        %v1540 = vpack.c.b16 %v1527, %v1514
        %v1541 = vpack.c.b16 %v1528, %v1515
        %v1542 = vpack.c.b16 %v1529, %v1516
        %v1543 = vpack.c.b16 %v1530, %v1517
        %v1544 = vpack.c.b16 %v1531, %v1518
        %v1545 = vpack.c.b16 %v1532, %v1519
        %v1546 = vpack.c.b16 %v1533, %v1520
        %v1547 = vpack.c.b16 %v1534, %v1521
        %v1548 = vpack.c.b16 %v1535, %v1522
        %v1549 = vpack.c.b16 %v1536, %v1523
        %v1550 = vpack.c.b16 %v1537, %v1524
        %v1551 = vpack.c.b16 %v1538, %v1525
        %v1552 = vpack.c.b16 %v1539, %v1526
        %v1566 = vsel %vm1194, %v1552, 0
        %1568 = vmatprep.subr.bf16.mxu0 0
        %1569 = vmatpush1.bf16.msra.mxu0 %v1001
        %1570 = vmatprep.subr.bf16.mxu0 0
        %1571 = vmatpush1.bf16.msra.mxu0 %v1000
        %1572 = vmatprep.subr.bf16.mxu0 0
        %1573 = vmatpush1.bf16.msra.mxu0 %v999
        %1574 = vmatprep.subr.bf16.mxu0 0
        %1575 = vmatpush1.bf16.msra.mxu0 %v998
        %1576 = vmatprep.subr.bf16.mxu0 0
        %1577 = vmatpush1.bf16.msra.mxu0 %v997
        %1578 = vmatprep.subr.bf16.mxu0 0
        %1579 = vmatpush1.bf16.msra.mxu0 %v996
        %1580 = vmatprep.subr.bf16.mxu0 0
        %1581 = vmatpush1.bf16.msra.mxu0 %v995
        %1582 = vmatprep.subr.bf16.mxu0 0
        %1583 = vmatpush1.bf16.msra.mxu0 %v994
        %1584 = vmatprep.subr.bf16.mxu0 0
        %1585 = vmatpush2.bf16.msra.mxu0 %v1009
        %1586 = vmatprep.subr.bf16.mxu0 0
        %1587 = vmatpush2.bf16.msra.mxu0 %v1008
        %1588 = vmatprep.subr.bf16.mxu0 0
        %1589 = vmatpush2.bf16.msra.mxu0 %v1007
        %1590 = vmatprep.subr.bf16.mxu0 0
        %1591 = vmatpush2.bf16.msra.mxu0 %v1006
        %1592 = vmatprep.subr.bf16.mxu0 0
        %1593 = vmatpush2.bf16.msra.mxu0 %v1005
        %1594 = vmatprep.subr.bf16.mxu0 0
        %1595 = vmatpush2.bf16.msra.mxu0 %v1004
        %1596 = vmatprep.subr.bf16.mxu0 0
        %1597 = vmatpush2.bf16.msra.mxu0 %v1003
        %1598 = vmatprep.subr.bf16.mxu0 0
        %1599 = vmatpush2.bf16.msra.mxu0 %v1002
        %1600 = vmatprep.mubr.bf16.mxu0 %v1541
        %1601 = vmatmul.mubr.bf16.gmra.mxu0 %v1540
        %v1602 = vpop.f32.mrf.mxu0
        %v1603 = vadd.f32 0.0, %v1602
        %v1604 = vpop.f32.mrf.mxu0
        %v1605 = vpop.f32.mrf.mxu0
        %v1606 = vadd.f32 0.0, %v1605
        %v1607 = vpop.f32.mrf.mxu0
        %1608 = vdwg.mxu0
        %1609 = vmatprep.subr.bf16.mxu0 0
        %1610 = vmatpush1.bf16.msra.mxu0 %v1017
        %1611 = vmatprep.subr.bf16.mxu0 0
        %1612 = vmatpush1.bf16.msra.mxu0 %v1016
        %1613 = vmatprep.subr.bf16.mxu0 0
        %1614 = vmatpush1.bf16.msra.mxu0 %v1015
        %1615 = vmatprep.subr.bf16.mxu0 0
        %1616 = vmatpush1.bf16.msra.mxu0 %v1014
        %1617 = vmatprep.subr.bf16.mxu0 0
        %1618 = vmatpush1.bf16.msra.mxu0 %v1013
        %1619 = vmatprep.subr.bf16.mxu0 0
        %1620 = vmatpush1.bf16.msra.mxu0 %v1012
        %1621 = vmatprep.subr.bf16.mxu0 0
        %1622 = vmatpush1.bf16.msra.mxu0 %v1011
        %1623 = vmatprep.subr.bf16.mxu0 0
        %1624 = vmatpush1.bf16.msra.mxu0 %v1010
        %1625 = vmatprep.subr.bf16.mxu0 0
        %1626 = vmatpush2.bf16.msra.mxu0 %v1025
        %1627 = vmatprep.subr.bf16.mxu0 0
        %1628 = vmatpush2.bf16.msra.mxu0 %v1024
        %1629 = vmatprep.subr.bf16.mxu0 0
        %1630 = vmatpush2.bf16.msra.mxu0 %v1023
        %1631 = vmatprep.subr.bf16.mxu0 0
        %1632 = vmatpush2.bf16.msra.mxu0 %v1022
        %1633 = vmatprep.subr.bf16.mxu0 0
        %1634 = vmatpush2.bf16.msra.mxu0 %v1021
        %1635 = vmatprep.subr.bf16.mxu0 0
        %1636 = vmatpush2.bf16.msra.mxu0 %v1020
        %1637 = vmatprep.subr.bf16.mxu0 0
        %1638 = vmatpush2.bf16.msra.mxu0 %v1019
        %1639 = vmatprep.subr.bf16.mxu0 0
        %1640 = vmatpush2.bf16.msra.mxu0 %v1018
        %1641 = vmatprep.mubr.bf16.mxu0 %v1543
        %1642 = vmatmul.mubr.bf16.gmra.mxu0 %v1542
        %v1643 = vpop.f32.mrf.mxu0
        %v1644 = vadd.f32 %v1603, %v1643
        %v1645 = vpop.f32.mrf.mxu0
        %v1646 = vpop.f32.mrf.mxu0
        %v1647 = vadd.f32 %v1606, %v1646
        %v1648 = vpop.f32.mrf.mxu0
        %1649 = vdwg.mxu0
        %1650 = vmatprep.subr.bf16.mxu0 0
        %1651 = vmatpush1.bf16.msra.mxu0 %v1033
        %1652 = vmatprep.subr.bf16.mxu0 0
        %1653 = vmatpush1.bf16.msra.mxu0 %v1032
        %1654 = vmatprep.subr.bf16.mxu0 0
        %1655 = vmatpush1.bf16.msra.mxu0 %v1031
        %1656 = vmatprep.subr.bf16.mxu0 0
        %1657 = vmatpush1.bf16.msra.mxu0 %v1030
        %1658 = vmatprep.subr.bf16.mxu0 0
        %1659 = vmatpush1.bf16.msra.mxu0 %v1029
        %1660 = vmatprep.subr.bf16.mxu0 0
        %1661 = vmatpush1.bf16.msra.mxu0 %v1028
        %1662 = vmatprep.subr.bf16.mxu0 0
        %1663 = vmatpush1.bf16.msra.mxu0 %v1027
        %1664 = vmatprep.subr.bf16.mxu0 0
        %1665 = vmatpush1.bf16.msra.mxu0 %v1026
        %1666 = vmatprep.subr.bf16.mxu0 0
        %1667 = vmatpush2.bf16.msra.mxu0 %v1041
        %1668 = vmatprep.subr.bf16.mxu0 0
        %1669 = vmatpush2.bf16.msra.mxu0 %v1040
        %1670 = vmatprep.subr.bf16.mxu0 0
        %1671 = vmatpush2.bf16.msra.mxu0 %v1039
        %1672 = vmatprep.subr.bf16.mxu0 0
        %1673 = vmatpush2.bf16.msra.mxu0 %v1038
        %1674 = vmatprep.subr.bf16.mxu0 0
        %1675 = vmatpush2.bf16.msra.mxu0 %v1037
        %1676 = vmatprep.subr.bf16.mxu0 0
        %1677 = vmatpush2.bf16.msra.mxu0 %v1036
        %1678 = vmatprep.subr.bf16.mxu0 0
        %1679 = vmatpush2.bf16.msra.mxu0 %v1035
        %1680 = vmatprep.subr.bf16.mxu0 0
        %1681 = vmatpush2.bf16.msra.mxu0 %v1034
        %1682 = vmatprep.mubr.bf16.mxu0 %v1545
        %1683 = vmatmul.mubr.bf16.gmra.mxu0 %v1544
        %v1684 = vpop.f32.mrf.mxu0
        %v1685 = vadd.f32 %v1644, %v1684
        %v1686 = vpop.f32.mrf.mxu0
        %v1687 = vpop.f32.mrf.mxu0
        %v1688 = vadd.f32 %v1647, %v1687
        %v1689 = vpop.f32.mrf.mxu0
        %1690 = vdwg.mxu0
        %1691 = vmatprep.subr.bf16.mxu0 0
        %1692 = vmatpush1.bf16.msra.mxu0 %v1049
        %1693 = vmatprep.subr.bf16.mxu0 0
        %1694 = vmatpush1.bf16.msra.mxu0 %v1048
        %1695 = vmatprep.subr.bf16.mxu0 0
        %1696 = vmatpush1.bf16.msra.mxu0 %v1047
        %1697 = vmatprep.subr.bf16.mxu0 0
        %1698 = vmatpush1.bf16.msra.mxu0 %v1046
        %1699 = vmatprep.subr.bf16.mxu0 0
        %1700 = vmatpush1.bf16.msra.mxu0 %v1045
        %1701 = vmatprep.subr.bf16.mxu0 0
        %1702 = vmatpush1.bf16.msra.mxu0 %v1044
        %1703 = vmatprep.subr.bf16.mxu0 0
        %1704 = vmatpush1.bf16.msra.mxu0 %v1043
        %1705 = vmatprep.subr.bf16.mxu0 0
        %1706 = vmatpush1.bf16.msra.mxu0 %v1042
        %1707 = vmatprep.subr.bf16.mxu0 0
        %1708 = vmatpush2.bf16.msra.mxu0 %v1057
        %1709 = vmatprep.subr.bf16.mxu0 0
        %1710 = vmatpush2.bf16.msra.mxu0 %v1056
        %1711 = vmatprep.subr.bf16.mxu0 0
        %1712 = vmatpush2.bf16.msra.mxu0 %v1055
        %1713 = vmatprep.subr.bf16.mxu0 0
        %1714 = vmatpush2.bf16.msra.mxu0 %v1054
        %1715 = vmatprep.subr.bf16.mxu0 0
        %1716 = vmatpush2.bf16.msra.mxu0 %v1053
        %1717 = vmatprep.subr.bf16.mxu0 0
        %1718 = vmatpush2.bf16.msra.mxu0 %v1052
        %1719 = vmatprep.subr.bf16.mxu0 0
        %1720 = vmatpush2.bf16.msra.mxu0 %v1051
        %1721 = vmatprep.subr.bf16.mxu0 0
        %1722 = vmatpush2.bf16.msra.mxu0 %v1050
        %1723 = vmatprep.mubr.bf16.mxu0 %v1547
        %1724 = vmatmul.mubr.bf16.gmra.mxu0 %v1546
        %v1725 = vpop.f32.mrf.mxu0
        %v1726 = vadd.f32 %v1685, %v1725
        %v1727 = vpop.f32.mrf.mxu0
        %v1728 = vpop.f32.mrf.mxu0
        %v1729 = vadd.f32 %v1688, %v1728
        %v1730 = vpop.f32.mrf.mxu0
        %1731 = vdwg.mxu0
        %1732 = vmatprep.subr.bf16.mxu0 0
        %1733 = vmatpush1.bf16.msra.mxu0 %v1065
        %1734 = vmatprep.subr.bf16.mxu0 0
        %1735 = vmatpush1.bf16.msra.mxu0 %v1064
        %1736 = vmatprep.subr.bf16.mxu0 0
        %1737 = vmatpush1.bf16.msra.mxu0 %v1063
        %1738 = vmatprep.subr.bf16.mxu0 0
        %1739 = vmatpush1.bf16.msra.mxu0 %v1062
        %1740 = vmatprep.subr.bf16.mxu0 0
        %1741 = vmatpush1.bf16.msra.mxu0 %v1061
        %1742 = vmatprep.subr.bf16.mxu0 0
        %1743 = vmatpush1.bf16.msra.mxu0 %v1060
        %1744 = vmatprep.subr.bf16.mxu0 0
        %1745 = vmatpush1.bf16.msra.mxu0 %v1059
        %1746 = vmatprep.subr.bf16.mxu0 0
        %1747 = vmatpush1.bf16.msra.mxu0 %v1058
        %1748 = vmatprep.subr.bf16.mxu0 0
        %1749 = vmatpush2.bf16.msra.mxu0 %v1073
        %1750 = vmatprep.subr.bf16.mxu0 0
        %1751 = vmatpush2.bf16.msra.mxu0 %v1072
        %1752 = vmatprep.subr.bf16.mxu0 0
        %1753 = vmatpush2.bf16.msra.mxu0 %v1071
        %1754 = vmatprep.subr.bf16.mxu0 0
        %1755 = vmatpush2.bf16.msra.mxu0 %v1070
        %1756 = vmatprep.subr.bf16.mxu0 0
        %1757 = vmatpush2.bf16.msra.mxu0 %v1069
        %1758 = vmatprep.subr.bf16.mxu0 0
        %1759 = vmatpush2.bf16.msra.mxu0 %v1068
        %1760 = vmatprep.subr.bf16.mxu0 0
        %1761 = vmatpush2.bf16.msra.mxu0 %v1067
        %1762 = vmatprep.subr.bf16.mxu0 0
        %1763 = vmatpush2.bf16.msra.mxu0 %v1066
        %1764 = vmatprep.mubr.bf16.mxu0 %v1549
        %1765 = vmatmul.mubr.bf16.gmra.mxu0 %v1548
        %v1766 = vpop.f32.mrf.mxu0
        %v1767 = vadd.f32 %v1726, %v1766
        %v1768 = vpop.f32.mrf.mxu0
        %v1769 = vpop.f32.mrf.mxu0
        %v1770 = vadd.f32 %v1729, %v1769
        %v1771 = vpop.f32.mrf.mxu0
        %1772 = vdwg.mxu0
        %1773 = vmatprep.subr.bf16.mxu0 0
        %1774 = vmatpush1.bf16.msra.mxu0 %v1081
        %1775 = vmatprep.subr.bf16.mxu0 0
        %1776 = vmatpush1.bf16.msra.mxu0 %v1080
        %1777 = vmatprep.subr.bf16.mxu0 0
        %1778 = vmatpush1.bf16.msra.mxu0 %v1079
        %1779 = vmatprep.subr.bf16.mxu0 0
        %1780 = vmatpush1.bf16.msra.mxu0 %v1078
        %1781 = vmatprep.subr.bf16.mxu0 0
        %1782 = vmatpush1.bf16.msra.mxu0 %v1077
        %1783 = vmatprep.subr.bf16.mxu0 0
        %1784 = vmatpush1.bf16.msra.mxu0 %v1076
        %1785 = vmatprep.subr.bf16.mxu0 0
        %1786 = vmatpush1.bf16.msra.mxu0 %v1075
        %1787 = vmatprep.subr.bf16.mxu0 0
        %1788 = vmatpush1.bf16.msra.mxu0 %v1074
        %1789 = vmatprep.subr.bf16.mxu0 0
        %1790 = vmatpush2.bf16.msra.mxu0 %v1089
        %1791 = vmatprep.subr.bf16.mxu0 0
        %1792 = vmatpush2.bf16.msra.mxu0 %v1088
        %1793 = vmatprep.subr.bf16.mxu0 0
        %1794 = vmatpush2.bf16.msra.mxu0 %v1087
        %1795 = vmatprep.subr.bf16.mxu0 0
        %1796 = vmatpush2.bf16.msra.mxu0 %v1086
        %1797 = vmatprep.subr.bf16.mxu0 0
        %1798 = vmatpush2.bf16.msra.mxu0 %v1085
        %1799 = vmatprep.subr.bf16.mxu0 0
        %1800 = vmatpush2.bf16.msra.mxu0 %v1084
        %1801 = vmatprep.subr.bf16.mxu0 0
        %1802 = vmatpush2.bf16.msra.mxu0 %v1083
        %1803 = vmatprep.subr.bf16.mxu0 0
        %1804 = vmatpush2.bf16.msra.mxu0 %v1082
        %1805 = vmatprep.mubr.bf16.mxu0 %v1551
        %1806 = vmatmul.mubr.bf16.gmra.mxu0 %v1550
        %v1807 = vpop.f32.mrf.mxu0
        %v1808 = vadd.f32 %v1767, %v1807
        %v1809 = vpop.f32.mrf.mxu0
        %v1810 = vpop.f32.mrf.mxu0
        %v1811 = vadd.f32 %v1770, %v1810
        %v1812 = vpop.f32.mrf.mxu0
        %1813 = vdwg.mxu0
        %1814 = vmatprep.subr.bf16.mxu0 0
        %1815 = vmatpush1.bf16.msra.mxu0 0
        %1816 = vmatprep.subr.bf16.mxu0 0
        %1817 = vmatpush1.bf16.msra.mxu0 0
        %1818 = vmatprep.subr.bf16.mxu0 0
        %1819 = vmatpush1.bf16.msra.mxu0 0
        %1820 = vmatprep.subr.bf16.mxu0 0
        %1821 = vmatpush1.bf16.msra.mxu0 0
        %1822 = vmatprep.subr.bf16.mxu0 0
        %1823 = vmatpush1.bf16.msra.mxu0 %v1093
        %1824 = vmatprep.subr.bf16.mxu0 0
        %1825 = vmatpush1.bf16.msra.mxu0 %v1092
        %1826 = vmatprep.subr.bf16.mxu0 0
        %1827 = vmatpush1.bf16.msra.mxu0 %v1091
        %1828 = vmatprep.subr.bf16.mxu0 0
        %1829 = vmatpush1.bf16.msra.mxu0 %v1090
        %1830 = vmatprep.subr.bf16.mxu0 0
        %1831 = vmatpush2.bf16.msra.mxu0 0
        %1832 = vmatprep.subr.bf16.mxu0 0
        %1833 = vmatpush2.bf16.msra.mxu0 0
        %1834 = vmatprep.subr.bf16.mxu0 0
        %1835 = vmatpush2.bf16.msra.mxu0 0
        %1836 = vmatprep.subr.bf16.mxu0 0
        %1837 = vmatpush2.bf16.msra.mxu0 0
        %1838 = vmatprep.subr.bf16.mxu0 0
        %1839 = vmatpush2.bf16.msra.mxu0 0
        %1840 = vmatprep.subr.bf16.mxu0 0
        %1841 = vmatpush2.bf16.msra.mxu0 0
        %1842 = vmatprep.subr.bf16.mxu0 0
        %1843 = vmatpush2.bf16.msra.mxu0 0
        %1844 = vmatprep.subr.bf16.mxu0 0
        %1845 = vmatpush2.bf16.msra.mxu0 0
        %1846 = vmatprep.mubr.bf16.mxu0 0
        %1847 = vmatmul.mubr.bf16.gmra.mxu0 %v1566
        %v1848 = vpop.f32.mrf.mxu0
        %v1849 = vadd.f32 %v1808, %v1848
        %v1850 = vpop.f32.mrf.mxu0
        %v1851 = vpop.f32.mrf.mxu0
        %v1852 = vadd.f32 %v1811, %v1851
        %v1853 = vpop.f32.mrf.mxu0
        %1854 = vdwg.mxu0
        %v1855 = vmax.f32 %v1479, %v1849
        %v1856 = vmax.f32 %v1482, %v1852
        %s1857 = scalar_lea.vmem %s286, 208 [#allocation2]
        %v1858 = vld [vmem:[%s1857] sm:$0xff]
        %v1859 = vld [vmem:[%s1857 + $0x8] sm:$0xff]
        %v1860 = vld [vmem:[%s1857 + $0x10] sm:$0xff]
        %v1861 = vld [vmem:[%s1857 + $0x18] sm:$0xff]
        %v1862 = vld [vmem:[%s1857 + $0x20] sm:$0xff]
        %v1863 = vld [vmem:[%s1857 + $0x28] sm:$0xff]
        %v1864 = vld [vmem:[%s1857 + $0x30] sm:$0xf]
        %v1865 = vld [vmem:[%s1857 + $0x34] sm:$0xff]
        %v1866 = vld [vmem:[%s1857 + $0x3c] sm:$0xff]
        %v1867 = vld [vmem:[%s1857 + $0x44] sm:$0xff]
        %v1868 = vld [vmem:[%s1857 + $0x4c] sm:$0xff]
        %v1869 = vld [vmem:[%s1857 + $0x54] sm:$0xff]
        %v1870 = vld [vmem:[%s1857 + $0x5c] sm:$0xff]
        %v1871 = vld [vmem:[%s1857 + $0x64] sm:$0xf]
        %v1886 = vunpack.c.l.b16 %v1858
        %v1887 = vunpack.c.h.b16 %v1858
        %v1888 = vunpack.c.l.b16 %v1859
        %v1889 = vunpack.c.h.b16 %v1859
        %v1890 = vunpack.c.l.b16 %v1860
        %v1891 = vunpack.c.h.b16 %v1860
        %v1892 = vunpack.c.l.b16 %v1861
        %v1893 = vunpack.c.h.b16 %v1861
        %v1894 = vunpack.c.l.b16 %v1862
        %v1895 = vunpack.c.h.b16 %v1862
        %v1896 = vunpack.c.l.b16 %v1863
        %v1897 = vunpack.c.h.b16 %v1863
        %v1898 = vunpack.c.l.b16 %v1864
        %v1899 = vunpack.c.l.b16 %v1865
        %v1900 = vunpack.c.h.b16 %v1865
        %v1901 = vunpack.c.l.b16 %v1866
        %v1902 = vunpack.c.h.b16 %v1866
        %v1903 = vunpack.c.l.b16 %v1867
        %v1904 = vunpack.c.h.b16 %v1867
        %v1905 = vunpack.c.l.b16 %v1868
        %v1906 = vunpack.c.h.b16 %v1868
        %v1907 = vunpack.c.l.b16 %v1869
        %v1908 = vunpack.c.h.b16 %v1869
        %v1909 = vunpack.c.l.b16 %v1870
        %v1910 = vunpack.c.h.b16 %v1870
        %v1911 = vunpack.c.l.b16 %v1871
        %v1912 = vpack.c.b16 %v1899, %v1886
        %v1913 = vpack.c.b16 %v1900, %v1887
        %v1914 = vpack.c.b16 %v1901, %v1888
        %v1915 = vpack.c.b16 %v1902, %v1889
        %v1916 = vpack.c.b16 %v1903, %v1890
        %v1917 = vpack.c.b16 %v1904, %v1891
        %v1918 = vpack.c.b16 %v1905, %v1892
        %v1919 = vpack.c.b16 %v1906, %v1893
        %v1920 = vpack.c.b16 %v1907, %v1894
        %v1921 = vpack.c.b16 %v1908, %v1895
        %v1922 = vpack.c.b16 %v1909, %v1896
        %v1923 = vpack.c.b16 %v1910, %v1897
        %v1924 = vpack.c.b16 %v1911, %v1898
        %v1938 = vsel %vm1194, %v1924, 0
        %1940 = vmatprep.subr.bf16.mxu0 0
        %1941 = vmatpush1.bf16.msra.mxu0 %v1001
        %1942 = vmatprep.subr.bf16.mxu0 0
        %1943 = vmatpush1.bf16.msra.mxu0 %v1000
        %1944 = vmatprep.subr.bf16.mxu0 0
        %1945 = vmatpush1.bf16.msra.mxu0 %v999
        %1946 = vmatprep.subr.bf16.mxu0 0
        %1947 = vmatpush1.bf16.msra.mxu0 %v998
        %1948 = vmatprep.subr.bf16.mxu0 0
        %1949 = vmatpush1.bf16.msra.mxu0 %v997
        %1950 = vmatprep.subr.bf16.mxu0 0
        %1951 = vmatpush1.bf16.msra.mxu0 %v996
        %1952 = vmatprep.subr.bf16.mxu0 0
        %1953 = vmatpush1.bf16.msra.mxu0 %v995
        %1954 = vmatprep.subr.bf16.mxu0 0
        %1955 = vmatpush1.bf16.msra.mxu0 %v994
        %1956 = vmatprep.subr.bf16.mxu0 0
        %1957 = vmatpush2.bf16.msra.mxu0 %v1009
        %1958 = vmatprep.subr.bf16.mxu0 0
        %1959 = vmatpush2.bf16.msra.mxu0 %v1008
        %1960 = vmatprep.subr.bf16.mxu0 0
        %1961 = vmatpush2.bf16.msra.mxu0 %v1007
        %1962 = vmatprep.subr.bf16.mxu0 0
        %1963 = vmatpush2.bf16.msra.mxu0 %v1006
        %1964 = vmatprep.subr.bf16.mxu0 0
        %1965 = vmatpush2.bf16.msra.mxu0 %v1005
        %1966 = vmatprep.subr.bf16.mxu0 0
        %1967 = vmatpush2.bf16.msra.mxu0 %v1004
        %1968 = vmatprep.subr.bf16.mxu0 0
        %1969 = vmatpush2.bf16.msra.mxu0 %v1003
        %1970 = vmatprep.subr.bf16.mxu0 0
        %1971 = vmatpush2.bf16.msra.mxu0 %v1002
        %1972 = vmatprep.mubr.bf16.mxu0 %v1913
        %1973 = vmatmul.mubr.bf16.gmra.mxu0 %v1912
        %v1974 = vpop.f32.mrf.mxu0
        %v1975 = vadd.f32 0.0, %v1974
        %v1976 = vpop.f32.mrf.mxu0
        %v1977 = vpop.f32.mrf.mxu0
        %v1978 = vadd.f32 0.0, %v1977
        %v1979 = vpop.f32.mrf.mxu0
        %1980 = vdwg.mxu0
        %1981 = vmatprep.subr.bf16.mxu0 0
        %1982 = vmatpush1.bf16.msra.mxu0 %v1017
        %1983 = vmatprep.subr.bf16.mxu0 0
        %1984 = vmatpush1.bf16.msra.mxu0 %v1016
        %1985 = vmatprep.subr.bf16.mxu0 0
        %1986 = vmatpush1.bf16.msra.mxu0 %v1015
        %1987 = vmatprep.subr.bf16.mxu0 0
        %1988 = vmatpush1.bf16.msra.mxu0 %v1014
        %1989 = vmatprep.subr.bf16.mxu0 0
        %1990 = vmatpush1.bf16.msra.mxu0 %v1013
        %1991 = vmatprep.subr.bf16.mxu0 0
        %1992 = vmatpush1.bf16.msra.mxu0 %v1012
        %1993 = vmatprep.subr.bf16.mxu0 0
        %1994 = vmatpush1.bf16.msra.mxu0 %v1011
        %1995 = vmatprep.subr.bf16.mxu0 0
        %1996 = vmatpush1.bf16.msra.mxu0 %v1010
        %1997 = vmatprep.subr.bf16.mxu0 0
        %1998 = vmatpush2.bf16.msra.mxu0 %v1025
        %1999 = vmatprep.subr.bf16.mxu0 0
        %2000 = vmatpush2.bf16.msra.mxu0 %v1024
        %2001 = vmatprep.subr.bf16.mxu0 0
        %2002 = vmatpush2.bf16.msra.mxu0 %v1023
        %2003 = vmatprep.subr.bf16.mxu0 0
        %2004 = vmatpush2.bf16.msra.mxu0 %v1022
        %2005 = vmatprep.subr.bf16.mxu0 0
        %2006 = vmatpush2.bf16.msra.mxu0 %v1021
        %2007 = vmatprep.subr.bf16.mxu0 0
        %2008 = vmatpush2.bf16.msra.mxu0 %v1020
        %2009 = vmatprep.subr.bf16.mxu0 0
        %2010 = vmatpush2.bf16.msra.mxu0 %v1019
        %2011 = vmatprep.subr.bf16.mxu0 0
        %2012 = vmatpush2.bf16.msra.mxu0 %v1018
        %2013 = vmatprep.mubr.bf16.mxu0 %v1915
        %2014 = vmatmul.mubr.bf16.gmra.mxu0 %v1914
        %v2015 = vpop.f32.mrf.mxu0
        %v2016 = vadd.f32 %v1975, %v2015
        %v2017 = vpop.f32.mrf.mxu0
        %v2018 = vpop.f32.mrf.mxu0
        %v2019 = vadd.f32 %v1978, %v2018
        %v2020 = vpop.f32.mrf.mxu0
        %2021 = vdwg.mxu0
        %2022 = vmatprep.subr.bf16.mxu0 0
        %2023 = vmatpush1.bf16.msra.mxu0 %v1033
        %2024 = vmatprep.subr.bf16.mxu0 0
        %2025 = vmatpush1.bf16.msra.mxu0 %v1032
        %2026 = vmatprep.subr.bf16.mxu0 0
        %2027 = vmatpush1.bf16.msra.mxu0 %v1031
        %2028 = vmatprep.subr.bf16.mxu0 0
        %2029 = vmatpush1.bf16.msra.mxu0 %v1030
        %2030 = vmatprep.subr.bf16.mxu0 0
        %2031 = vmatpush1.bf16.msra.mxu0 %v1029
        %2032 = vmatprep.subr.bf16.mxu0 0
        %2033 = vmatpush1.bf16.msra.mxu0 %v1028
        %2034 = vmatprep.subr.bf16.mxu0 0
        %2035 = vmatpush1.bf16.msra.mxu0 %v1027
        %2036 = vmatprep.subr.bf16.mxu0 0
        %2037 = vmatpush1.bf16.msra.mxu0 %v1026
        %2038 = vmatprep.subr.bf16.mxu0 0
        %2039 = vmatpush2.bf16.msra.mxu0 %v1041
        %2040 = vmatprep.subr.bf16.mxu0 0
        %2041 = vmatpush2.bf16.msra.mxu0 %v1040
        %2042 = vmatprep.subr.bf16.mxu0 0
        %2043 = vmatpush2.bf16.msra.mxu0 %v1039
        %2044 = vmatprep.subr.bf16.mxu0 0
        %2045 = vmatpush2.bf16.msra.mxu0 %v1038
        %2046 = vmatprep.subr.bf16.mxu0 0
        %2047 = vmatpush2.bf16.msra.mxu0 %v1037
        %2048 = vmatprep.subr.bf16.mxu0 0
        %2049 = vmatpush2.bf16.msra.mxu0 %v1036
        %2050 = vmatprep.subr.bf16.mxu0 0
        %2051 = vmatpush2.bf16.msra.mxu0 %v1035
        %2052 = vmatprep.subr.bf16.mxu0 0
        %2053 = vmatpush2.bf16.msra.mxu0 %v1034
        %2054 = vmatprep.mubr.bf16.mxu0 %v1917
        %2055 = vmatmul.mubr.bf16.gmra.mxu0 %v1916
        %v2056 = vpop.f32.mrf.mxu0
        %v2057 = vadd.f32 %v2016, %v2056
        %v2058 = vpop.f32.mrf.mxu0
        %v2059 = vpop.f32.mrf.mxu0
        %v2060 = vadd.f32 %v2019, %v2059
        %v2061 = vpop.f32.mrf.mxu0
        %2062 = vdwg.mxu0
        %2063 = vmatprep.subr.bf16.mxu0 0
        %2064 = vmatpush1.bf16.msra.mxu0 %v1049
        %2065 = vmatprep.subr.bf16.mxu0 0
        %2066 = vmatpush1.bf16.msra.mxu0 %v1048
        %2067 = vmatprep.subr.bf16.mxu0 0
        %2068 = vmatpush1.bf16.msra.mxu0 %v1047
        %2069 = vmatprep.subr.bf16.mxu0 0
        %2070 = vmatpush1.bf16.msra.mxu0 %v1046
        %2071 = vmatprep.subr.bf16.mxu0 0
        %2072 = vmatpush1.bf16.msra.mxu0 %v1045
        %2073 = vmatprep.subr.bf16.mxu0 0
        %2074 = vmatpush1.bf16.msra.mxu0 %v1044
        %2075 = vmatprep.subr.bf16.mxu0 0
        %2076 = vmatpush1.bf16.msra.mxu0 %v1043
        %2077 = vmatprep.subr.bf16.mxu0 0
        %2078 = vmatpush1.bf16.msra.mxu0 %v1042
        %2079 = vmatprep.subr.bf16.mxu0 0
        %2080 = vmatpush2.bf16.msra.mxu0 %v1057
        %2081 = vmatprep.subr.bf16.mxu0 0
        %2082 = vmatpush2.bf16.msra.mxu0 %v1056
        %2083 = vmatprep.subr.bf16.mxu0 0
        %2084 = vmatpush2.bf16.msra.mxu0 %v1055
        %2085 = vmatprep.subr.bf16.mxu0 0
        %2086 = vmatpush2.bf16.msra.mxu0 %v1054
        %2087 = vmatprep.subr.bf16.mxu0 0
        %2088 = vmatpush2.bf16.msra.mxu0 %v1053
        %2089 = vmatprep.subr.bf16.mxu0 0
        %2090 = vmatpush2.bf16.msra.mxu0 %v1052
        %2091 = vmatprep.subr.bf16.mxu0 0
        %2092 = vmatpush2.bf16.msra.mxu0 %v1051
        %2093 = vmatprep.subr.bf16.mxu0 0
        %2094 = vmatpush2.bf16.msra.mxu0 %v1050
        %2095 = vmatprep.mubr.bf16.mxu0 %v1919
        %2096 = vmatmul.mubr.bf16.gmra.mxu0 %v1918
        %v2097 = vpop.f32.mrf.mxu0
        %v2098 = vadd.f32 %v2057, %v2097
        %v2099 = vpop.f32.mrf.mxu0
        %v2100 = vpop.f32.mrf.mxu0
        %v2101 = vadd.f32 %v2060, %v2100
        %v2102 = vpop.f32.mrf.mxu0
        %2103 = vdwg.mxu0
        %2104 = vmatprep.subr.bf16.mxu0 0
        %2105 = vmatpush1.bf16.msra.mxu0 %v1065
        %2106 = vmatprep.subr.bf16.mxu0 0
        %2107 = vmatpush1.bf16.msra.mxu0 %v1064
        %2108 = vmatprep.subr.bf16.mxu0 0
        %2109 = vmatpush1.bf16.msra.mxu0 %v1063
        %2110 = vmatprep.subr.bf16.mxu0 0
        %2111 = vmatpush1.bf16.msra.mxu0 %v1062
        %2112 = vmatprep.subr.bf16.mxu0 0
        %2113 = vmatpush1.bf16.msra.mxu0 %v1061
        %2114 = vmatprep.subr.bf16.mxu0 0
        %2115 = vmatpush1.bf16.msra.mxu0 %v1060
        %2116 = vmatprep.subr.bf16.mxu0 0
        %2117 = vmatpush1.bf16.msra.mxu0 %v1059
        %2118 = vmatprep.subr.bf16.mxu0 0
        %2119 = vmatpush1.bf16.msra.mxu0 %v1058
        %2120 = vmatprep.subr.bf16.mxu0 0
        %2121 = vmatpush2.bf16.msra.mxu0 %v1073
        %2122 = vmatprep.subr.bf16.mxu0 0
        %2123 = vmatpush2.bf16.msra.mxu0 %v1072
        %2124 = vmatprep.subr.bf16.mxu0 0
        %2125 = vmatpush2.bf16.msra.mxu0 %v1071
        %2126 = vmatprep.subr.bf16.mxu0 0
        %2127 = vmatpush2.bf16.msra.mxu0 %v1070
        %2128 = vmatprep.subr.bf16.mxu0 0
        %2129 = vmatpush2.bf16.msra.mxu0 %v1069
        %2130 = vmatprep.subr.bf16.mxu0 0
        %2131 = vmatpush2.bf16.msra.mxu0 %v1068
        %2132 = vmatprep.subr.bf16.mxu0 0
        %2133 = vmatpush2.bf16.msra.mxu0 %v1067
        %2134 = vmatprep.subr.bf16.mxu0 0
        %2135 = vmatpush2.bf16.msra.mxu0 %v1066
        %2136 = vmatprep.mubr.bf16.mxu0 %v1921
        %2137 = vmatmul.mubr.bf16.gmra.mxu0 %v1920
        %v2138 = vpop.f32.mrf.mxu0
        %v2139 = vadd.f32 %v2098, %v2138
        %v2140 = vpop.f32.mrf.mxu0
        %v2141 = vpop.f32.mrf.mxu0
        %v2142 = vadd.f32 %v2101, %v2141
        %v2143 = vpop.f32.mrf.mxu0
        %2144 = vdwg.mxu0
        %2145 = vmatprep.subr.bf16.mxu0 0
        %2146 = vmatpush1.bf16.msra.mxu0 %v1081
        %2147 = vmatprep.subr.bf16.mxu0 0
        %2148 = vmatpush1.bf16.msra.mxu0 %v1080
        %2149 = vmatprep.subr.bf16.mxu0 0
        %2150 = vmatpush1.bf16.msra.mxu0 %v1079
        %2151 = vmatprep.subr.bf16.mxu0 0
        %2152 = vmatpush1.bf16.msra.mxu0 %v1078
        %2153 = vmatprep.subr.bf16.mxu0 0
        %2154 = vmatpush1.bf16.msra.mxu0 %v1077
        %2155 = vmatprep.subr.bf16.mxu0 0
        %2156 = vmatpush1.bf16.msra.mxu0 %v1076
        %2157 = vmatprep.subr.bf16.mxu0 0
        %2158 = vmatpush1.bf16.msra.mxu0 %v1075
        %2159 = vmatprep.subr.bf16.mxu0 0
        %2160 = vmatpush1.bf16.msra.mxu0 %v1074
        %2161 = vmatprep.subr.bf16.mxu0 0
        %2162 = vmatpush2.bf16.msra.mxu0 %v1089
        %2163 = vmatprep.subr.bf16.mxu0 0
        %2164 = vmatpush2.bf16.msra.mxu0 %v1088
        %2165 = vmatprep.subr.bf16.mxu0 0
        %2166 = vmatpush2.bf16.msra.mxu0 %v1087
        %2167 = vmatprep.subr.bf16.mxu0 0
        %2168 = vmatpush2.bf16.msra.mxu0 %v1086
        %2169 = vmatprep.subr.bf16.mxu0 0
        %2170 = vmatpush2.bf16.msra.mxu0 %v1085
        %2171 = vmatprep.subr.bf16.mxu0 0
        %2172 = vmatpush2.bf16.msra.mxu0 %v1084
        %2173 = vmatprep.subr.bf16.mxu0 0
        %2174 = vmatpush2.bf16.msra.mxu0 %v1083
        %2175 = vmatprep.subr.bf16.mxu0 0
        %2176 = vmatpush2.bf16.msra.mxu0 %v1082
        %2177 = vmatprep.mubr.bf16.mxu0 %v1923
        %2178 = vmatmul.mubr.bf16.gmra.mxu0 %v1922
        %v2179 = vpop.f32.mrf.mxu0
        %v2180 = vadd.f32 %v2139, %v2179
        %v2181 = vpop.f32.mrf.mxu0
        %v2182 = vpop.f32.mrf.mxu0
        %v2183 = vadd.f32 %v2142, %v2182
        %v2184 = vpop.f32.mrf.mxu0
        %2185 = vdwg.mxu0
        %2186 = vmatprep.subr.bf16.mxu0 0
        %2187 = vmatpush1.bf16.msra.mxu0 0
        %2188 = vmatprep.subr.bf16.mxu0 0
        %2189 = vmatpush1.bf16.msra.mxu0 0
        %2190 = vmatprep.subr.bf16.mxu0 0
        %2191 = vmatpush1.bf16.msra.mxu0 0
        %2192 = vmatprep.subr.bf16.mxu0 0
        %2193 = vmatpush1.bf16.msra.mxu0 0
        %2194 = vmatprep.subr.bf16.mxu0 0
        %2195 = vmatpush1.bf16.msra.mxu0 %v1093
        %2196 = vmatprep.subr.bf16.mxu0 0
        %2197 = vmatpush1.bf16.msra.mxu0 %v1092
        %2198 = vmatprep.subr.bf16.mxu0 0
        %2199 = vmatpush1.bf16.msra.mxu0 %v1091
        %2200 = vmatprep.subr.bf16.mxu0 0
        %2201 = vmatpush1.bf16.msra.mxu0 %v1090
        %2202 = vmatprep.subr.bf16.mxu0 0
        %2203 = vmatpush2.bf16.msra.mxu0 0
        %2204 = vmatprep.subr.bf16.mxu0 0
        %2205 = vmatpush2.bf16.msra.mxu0 0
        %2206 = vmatprep.subr.bf16.mxu0 0
        %2207 = vmatpush2.bf16.msra.mxu0 0
        %2208 = vmatprep.subr.bf16.mxu0 0
        %2209 = vmatpush2.bf16.msra.mxu0 0
        %2210 = vmatprep.subr.bf16.mxu0 0
        %2211 = vmatpush2.bf16.msra.mxu0 0
        %2212 = vmatprep.subr.bf16.mxu0 0
        %2213 = vmatpush2.bf16.msra.mxu0 0
        %2214 = vmatprep.subr.bf16.mxu0 0
        %2215 = vmatpush2.bf16.msra.mxu0 0
        %2216 = vmatprep.subr.bf16.mxu0 0
        %2217 = vmatpush2.bf16.msra.mxu0 0
        %2218 = vmatprep.mubr.bf16.mxu0 0
        %2219 = vmatmul.mubr.bf16.gmra.mxu0 %v1938
        %v2220 = vpop.f32.mrf.mxu0
        %v2221 = vadd.f32 %v2180, %v2220
        %v2222 = vpop.f32.mrf.mxu0
        %v2223 = vpop.f32.mrf.mxu0
        %v2224 = vadd.f32 %v2183, %v2223
        %v2225 = vpop.f32.mrf.mxu0
        %2226 = vdwg.mxu0
        %v2227 = vmax.f32 %v1855, %v2221
        %v2228 = vmax.f32 %v1856, %v2224
        %s2229 = scalar_lea.vmem %s286, 312 [#allocation2]
        %v2230 = vld [vmem:[%s2229] sm:$0xff]
        %v2231 = vld [vmem:[%s2229 + $0x8] sm:$0xff]
        %v2232 = vld [vmem:[%s2229 + $0x10] sm:$0xff]
        %v2233 = vld [vmem:[%s2229 + $0x18] sm:$0xff]
        %v2234 = vld [vmem:[%s2229 + $0x20] sm:$0xff]
        %v2235 = vld [vmem:[%s2229 + $0x28] sm:$0xff]
        %v2236 = vld [vmem:[%s2229 + $0x30] sm:$0xf]
        %v2237 = vld [vmem:[%s2229 + $0x34] sm:$0xff]
        %v2238 = vld [vmem:[%s2229 + $0x3c] sm:$0xff]
        %v2239 = vld [vmem:[%s2229 + $0x44] sm:$0xff]
        %v2240 = vld [vmem:[%s2229 + $0x4c] sm:$0xff]
        %v2241 = vld [vmem:[%s2229 + $0x54] sm:$0xff]
        %v2242 = vld [vmem:[%s2229 + $0x5c] sm:$0xff]
        %v2243 = vld [vmem:[%s2229 + $0x64] sm:$0xf]
        %v2258 = vunpack.c.l.b16 %v2230
        %v2259 = vunpack.c.h.b16 %v2230
        %v2260 = vunpack.c.l.b16 %v2231
        %v2261 = vunpack.c.h.b16 %v2231
        %v2262 = vunpack.c.l.b16 %v2232
        %v2263 = vunpack.c.h.b16 %v2232
        %v2264 = vunpack.c.l.b16 %v2233
        %v2265 = vunpack.c.h.b16 %v2233
        %v2266 = vunpack.c.l.b16 %v2234
        %v2267 = vunpack.c.h.b16 %v2234
        %v2268 = vunpack.c.l.b16 %v2235
        %v2269 = vunpack.c.h.b16 %v2235
        %v2270 = vunpack.c.l.b16 %v2236
        %v2271 = vunpack.c.l.b16 %v2237
        %v2272 = vunpack.c.h.b16 %v2237
        %v2273 = vunpack.c.l.b16 %v2238
        %v2274 = vunpack.c.h.b16 %v2238
        %v2275 = vunpack.c.l.b16 %v2239
        %v2276 = vunpack.c.h.b16 %v2239
        %v2277 = vunpack.c.l.b16 %v2240
        %v2278 = vunpack.c.h.b16 %v2240
        %v2279 = vunpack.c.l.b16 %v2241
        %v2280 = vunpack.c.h.b16 %v2241
        %v2281 = vunpack.c.l.b16 %v2242
        %v2282 = vunpack.c.h.b16 %v2242
        %v2283 = vunpack.c.l.b16 %v2243
        %v2284 = vpack.c.b16 %v2271, %v2258
        %v2285 = vpack.c.b16 %v2272, %v2259
        %v2286 = vpack.c.b16 %v2273, %v2260
        %v2287 = vpack.c.b16 %v2274, %v2261
        %v2288 = vpack.c.b16 %v2275, %v2262
        %v2289 = vpack.c.b16 %v2276, %v2263
        %v2290 = vpack.c.b16 %v2277, %v2264
        %v2291 = vpack.c.b16 %v2278, %v2265
        %v2292 = vpack.c.b16 %v2279, %v2266
        %v2293 = vpack.c.b16 %v2280, %v2267
        %v2294 = vpack.c.b16 %v2281, %v2268
        %v2295 = vpack.c.b16 %v2282, %v2269
        %v2296 = vpack.c.b16 %v2283, %v2270
        %v2310 = vsel %vm1194, %v2296, 0
        %2312 = vmatprep.subr.bf16.mxu0 0
        %2313 = vmatpush1.bf16.msra.mxu0 %v1001
        %2314 = vmatprep.subr.bf16.mxu0 0
        %2315 = vmatpush1.bf16.msra.mxu0 %v1000
        %2316 = vmatprep.subr.bf16.mxu0 0
        %2317 = vmatpush1.bf16.msra.mxu0 %v999
        %2318 = vmatprep.subr.bf16.mxu0 0
        %2319 = vmatpush1.bf16.msra.mxu0 %v998
        %2320 = vmatprep.subr.bf16.mxu0 0
        %2321 = vmatpush1.bf16.msra.mxu0 %v997
        %2322 = vmatprep.subr.bf16.mxu0 0
        %2323 = vmatpush1.bf16.msra.mxu0 %v996
        %2324 = vmatprep.subr.bf16.mxu0 0
        %2325 = vmatpush1.bf16.msra.mxu0 %v995
        %2326 = vmatprep.subr.bf16.mxu0 0
        %2327 = vmatpush1.bf16.msra.mxu0 %v994
        %2328 = vmatprep.subr.bf16.mxu0 0
        %2329 = vmatpush2.bf16.msra.mxu0 %v1009
        %2330 = vmatprep.subr.bf16.mxu0 0
        %2331 = vmatpush2.bf16.msra.mxu0 %v1008
        %2332 = vmatprep.subr.bf16.mxu0 0
        %2333 = vmatpush2.bf16.msra.mxu0 %v1007
        %2334 = vmatprep.subr.bf16.mxu0 0
        %2335 = vmatpush2.bf16.msra.mxu0 %v1006
        %2336 = vmatprep.subr.bf16.mxu0 0
        %2337 = vmatpush2.bf16.msra.mxu0 %v1005
        %2338 = vmatprep.subr.bf16.mxu0 0
        %2339 = vmatpush2.bf16.msra.mxu0 %v1004
        %2340 = vmatprep.subr.bf16.mxu0 0
        %2341 = vmatpush2.bf16.msra.mxu0 %v1003
        %2342 = vmatprep.subr.bf16.mxu0 0
        %2343 = vmatpush2.bf16.msra.mxu0 %v1002
        %2344 = vmatprep.mubr.bf16.mxu0 %v2285
        %2345 = vmatmul.mubr.bf16.gmra.mxu0 %v2284
        %v2346 = vpop.f32.mrf.mxu0
        %v2347 = vadd.f32 0.0, %v2346
        %v2348 = vpop.f32.mrf.mxu0
        %v2349 = vpop.f32.mrf.mxu0
        %v2350 = vadd.f32 0.0, %v2349
        %v2351 = vpop.f32.mrf.mxu0
        %2352 = vdwg.mxu0
        %2353 = vmatprep.subr.bf16.mxu0 0
        %2354 = vmatpush1.bf16.msra.mxu0 %v1017
        %2355 = vmatprep.subr.bf16.mxu0 0
        %2356 = vmatpush1.bf16.msra.mxu0 %v1016
        %2357 = vmatprep.subr.bf16.mxu0 0
        %2358 = vmatpush1.bf16.msra.mxu0 %v1015
        %2359 = vmatprep.subr.bf16.mxu0 0
        %2360 = vmatpush1.bf16.msra.mxu0 %v1014
        %2361 = vmatprep.subr.bf16.mxu0 0
        %2362 = vmatpush1.bf16.msra.mxu0 %v1013
        %2363 = vmatprep.subr.bf16.mxu0 0
        %2364 = vmatpush1.bf16.msra.mxu0 %v1012
        %2365 = vmatprep.subr.bf16.mxu0 0
        %2366 = vmatpush1.bf16.msra.mxu0 %v1011
        %2367 = vmatprep.subr.bf16.mxu0 0
        %2368 = vmatpush1.bf16.msra.mxu0 %v1010
        %2369 = vmatprep.subr.bf16.mxu0 0
        %2370 = vmatpush2.bf16.msra.mxu0 %v1025
        %2371 = vmatprep.subr.bf16.mxu0 0
        %2372 = vmatpush2.bf16.msra.mxu0 %v1024
        %2373 = vmatprep.subr.bf16.mxu0 0
        %2374 = vmatpush2.bf16.msra.mxu0 %v1023
        %2375 = vmatprep.subr.bf16.mxu0 0
        %2376 = vmatpush2.bf16.msra.mxu0 %v1022
        %2377 = vmatprep.subr.bf16.mxu0 0
        %2378 = vmatpush2.bf16.msra.mxu0 %v1021
        %2379 = vmatprep.subr.bf16.mxu0 0
        %2380 = vmatpush2.bf16.msra.mxu0 %v1020
        %2381 = vmatprep.subr.bf16.mxu0 0
        %2382 = vmatpush2.bf16.msra.mxu0 %v1019
        %2383 = vmatprep.subr.bf16.mxu0 0
        %2384 = vmatpush2.bf16.msra.mxu0 %v1018
        %2385 = vmatprep.mubr.bf16.mxu0 %v2287
        %2386 = vmatmul.mubr.bf16.gmra.mxu0 %v2286
        %v2387 = vpop.f32.mrf.mxu0
        %v2388 = vadd.f32 %v2347, %v2387
        %v2389 = vpop.f32.mrf.mxu0
        %v2390 = vpop.f32.mrf.mxu0
        %v2391 = vadd.f32 %v2350, %v2390
        %v2392 = vpop.f32.mrf.mxu0
        %2393 = vdwg.mxu0
        %2394 = vmatprep.subr.bf16.mxu0 0
        %2395 = vmatpush1.bf16.msra.mxu0 %v1033
        %2396 = vmatprep.subr.bf16.mxu0 0
        %2397 = vmatpush1.bf16.msra.mxu0 %v1032
        %2398 = vmatprep.subr.bf16.mxu0 0
        %2399 = vmatpush1.bf16.msra.mxu0 %v1031
        %2400 = vmatprep.subr.bf16.mxu0 0
        %2401 = vmatpush1.bf16.msra.mxu0 %v1030
        %2402 = vmatprep.subr.bf16.mxu0 0
        %2403 = vmatpush1.bf16.msra.mxu0 %v1029
        %2404 = vmatprep.subr.bf16.mxu0 0
        %2405 = vmatpush1.bf16.msra.mxu0 %v1028
        %2406 = vmatprep.subr.bf16.mxu0 0
        %2407 = vmatpush1.bf16.msra.mxu0 %v1027
        %2408 = vmatprep.subr.bf16.mxu0 0
        %2409 = vmatpush1.bf16.msra.mxu0 %v1026
        %2410 = vmatprep.subr.bf16.mxu0 0
        %2411 = vmatpush2.bf16.msra.mxu0 %v1041
        %2412 = vmatprep.subr.bf16.mxu0 0
        %2413 = vmatpush2.bf16.msra.mxu0 %v1040
        %2414 = vmatprep.subr.bf16.mxu0 0
        %2415 = vmatpush2.bf16.msra.mxu0 %v1039
        %2416 = vmatprep.subr.bf16.mxu0 0
        %2417 = vmatpush2.bf16.msra.mxu0 %v1038
        %2418 = vmatprep.subr.bf16.mxu0 0
        %2419 = vmatpush2.bf16.msra.mxu0 %v1037
        %2420 = vmatprep.subr.bf16.mxu0 0
        %2421 = vmatpush2.bf16.msra.mxu0 %v1036
        %2422 = vmatprep.subr.bf16.mxu0 0
        %2423 = vmatpush2.bf16.msra.mxu0 %v1035
        %2424 = vmatprep.subr.bf16.mxu0 0
        %2425 = vmatpush2.bf16.msra.mxu0 %v1034
        %2426 = vmatprep.mubr.bf16.mxu0 %v2289
        %2427 = vmatmul.mubr.bf16.gmra.mxu0 %v2288
        %v2428 = vpop.f32.mrf.mxu0
        %v2429 = vadd.f32 %v2388, %v2428
        %v2430 = vpop.f32.mrf.mxu0
        %v2431 = vpop.f32.mrf.mxu0
        %v2432 = vadd.f32 %v2391, %v2431
        %v2433 = vpop.f32.mrf.mxu0
        %2434 = vdwg.mxu0
        %2435 = vmatprep.subr.bf16.mxu0 0
        %2436 = vmatpush1.bf16.msra.mxu0 %v1049
        %2437 = vmatprep.subr.bf16.mxu0 0
        %2438 = vmatpush1.bf16.msra.mxu0 %v1048
        %2439 = vmatprep.subr.bf16.mxu0 0
        %2440 = vmatpush1.bf16.msra.mxu0 %v1047
        %2441 = vmatprep.subr.bf16.mxu0 0
        %2442 = vmatpush1.bf16.msra.mxu0 %v1046
        %2443 = vmatprep.subr.bf16.mxu0 0
        %2444 = vmatpush1.bf16.msra.mxu0 %v1045
        %2445 = vmatprep.subr.bf16.mxu0 0
        %2446 = vmatpush1.bf16.msra.mxu0 %v1044
        %2447 = vmatprep.subr.bf16.mxu0 0
        %2448 = vmatpush1.bf16.msra.mxu0 %v1043
        %2449 = vmatprep.subr.bf16.mxu0 0
        %2450 = vmatpush1.bf16.msra.mxu0 %v1042
        %2451 = vmatprep.subr.bf16.mxu0 0
        %2452 = vmatpush2.bf16.msra.mxu0 %v1057
        %2453 = vmatprep.subr.bf16.mxu0 0
        %2454 = vmatpush2.bf16.msra.mxu0 %v1056
        %2455 = vmatprep.subr.bf16.mxu0 0
        %2456 = vmatpush2.bf16.msra.mxu0 %v1055
        %2457 = vmatprep.subr.bf16.mxu0 0
        %2458 = vmatpush2.bf16.msra.mxu0 %v1054
        %2459 = vmatprep.subr.bf16.mxu0 0
        %2460 = vmatpush2.bf16.msra.mxu0 %v1053
        %2461 = vmatprep.subr.bf16.mxu0 0
        %2462 = vmatpush2.bf16.msra.mxu0 %v1052
        %2463 = vmatprep.subr.bf16.mxu0 0
        %2464 = vmatpush2.bf16.msra.mxu0 %v1051
        %2465 = vmatprep.subr.bf16.mxu0 0
        %2466 = vmatpush2.bf16.msra.mxu0 %v1050
        %2467 = vmatprep.mubr.bf16.mxu0 %v2291
        %2468 = vmatmul.mubr.bf16.gmra.mxu0 %v2290
        %v2469 = vpop.f32.mrf.mxu0
        %v2470 = vadd.f32 %v2429, %v2469
        %v2471 = vpop.f32.mrf.mxu0
        %v2472 = vpop.f32.mrf.mxu0
        %v2473 = vadd.f32 %v2432, %v2472
        %v2474 = vpop.f32.mrf.mxu0
        %2475 = vdwg.mxu0
        %2476 = vmatprep.subr.bf16.mxu0 0
        %2477 = vmatpush1.bf16.msra.mxu0 %v1065
        %2478 = vmatprep.subr.bf16.mxu0 0
        %2479 = vmatpush1.bf16.msra.mxu0 %v1064
        %2480 = vmatprep.subr.bf16.mxu0 0
        %2481 = vmatpush1.bf16.msra.mxu0 %v1063
        %2482 = vmatprep.subr.bf16.mxu0 0
        %2483 = vmatpush1.bf16.msra.mxu0 %v1062
        %2484 = vmatprep.subr.bf16.mxu0 0
        %2485 = vmatpush1.bf16.msra.mxu0 %v1061
        %2486 = vmatprep.subr.bf16.mxu0 0
        %2487 = vmatpush1.bf16.msra.mxu0 %v1060
        %2488 = vmatprep.subr.bf16.mxu0 0
        %2489 = vmatpush1.bf16.msra.mxu0 %v1059
        %2490 = vmatprep.subr.bf16.mxu0 0
        %2491 = vmatpush1.bf16.msra.mxu0 %v1058
        %2492 = vmatprep.subr.bf16.mxu0 0
        %2493 = vmatpush2.bf16.msra.mxu0 %v1073
        %2494 = vmatprep.subr.bf16.mxu0 0
        %2495 = vmatpush2.bf16.msra.mxu0 %v1072
        %2496 = vmatprep.subr.bf16.mxu0 0
        %2497 = vmatpush2.bf16.msra.mxu0 %v1071
        %2498 = vmatprep.subr.bf16.mxu0 0
        %2499 = vmatpush2.bf16.msra.mxu0 %v1070
        %2500 = vmatprep.subr.bf16.mxu0 0
        %2501 = vmatpush2.bf16.msra.mxu0 %v1069
        %2502 = vmatprep.subr.bf16.mxu0 0
        %2503 = vmatpush2.bf16.msra.mxu0 %v1068
        %2504 = vmatprep.subr.bf16.mxu0 0
        %2505 = vmatpush2.bf16.msra.mxu0 %v1067
        %2506 = vmatprep.subr.bf16.mxu0 0
        %2507 = vmatpush2.bf16.msra.mxu0 %v1066
        %2508 = vmatprep.mubr.bf16.mxu0 %v2293
        %2509 = vmatmul.mubr.bf16.gmra.mxu0 %v2292
        %v2510 = vpop.f32.mrf.mxu0
        %v2511 = vadd.f32 %v2470, %v2510
        %v2512 = vpop.f32.mrf.mxu0
        %v2513 = vpop.f32.mrf.mxu0
        %v2514 = vadd.f32 %v2473, %v2513
        %v2515 = vpop.f32.mrf.mxu0
        %2516 = vdwg.mxu0
        %2517 = vmatprep.subr.bf16.mxu0 0
        %2518 = vmatpush1.bf16.msra.mxu0 %v1081
        %2519 = vmatprep.subr.bf16.mxu0 0
        %2520 = vmatpush1.bf16.msra.mxu0 %v1080
        %2521 = vmatprep.subr.bf16.mxu0 0
        %2522 = vmatpush1.bf16.msra.mxu0 %v1079
        %2523 = vmatprep.subr.bf16.mxu0 0
        %2524 = vmatpush1.bf16.msra.mxu0 %v1078
        %2525 = vmatprep.subr.bf16.mxu0 0
        %2526 = vmatpush1.bf16.msra.mxu0 %v1077
        %2527 = vmatprep.subr.bf16.mxu0 0
        %2528 = vmatpush1.bf16.msra.mxu0 %v1076
        %2529 = vmatprep.subr.bf16.mxu0 0
        %2530 = vmatpush1.bf16.msra.mxu0 %v1075
        %2531 = vmatprep.subr.bf16.mxu0 0
        %2532 = vmatpush1.bf16.msra.mxu0 %v1074
        %2533 = vmatprep.subr.bf16.mxu0 0
        %2534 = vmatpush2.bf16.msra.mxu0 %v1089
        %2535 = vmatprep.subr.bf16.mxu0 0
        %2536 = vmatpush2.bf16.msra.mxu0 %v1088
        %2537 = vmatprep.subr.bf16.mxu0 0
        %2538 = vmatpush2.bf16.msra.mxu0 %v1087
        %2539 = vmatprep.subr.bf16.mxu0 0
        %2540 = vmatpush2.bf16.msra.mxu0 %v1086
        %2541 = vmatprep.subr.bf16.mxu0 0
        %2542 = vmatpush2.bf16.msra.mxu0 %v1085
        %2543 = vmatprep.subr.bf16.mxu0 0
        %2544 = vmatpush2.bf16.msra.mxu0 %v1084
        %2545 = vmatprep.subr.bf16.mxu0 0
        %2546 = vmatpush2.bf16.msra.mxu0 %v1083
        %2547 = vmatprep.subr.bf16.mxu0 0
        %2548 = vmatpush2.bf16.msra.mxu0 %v1082
        %2549 = vmatprep.mubr.bf16.mxu0 %v2295
        %2550 = vmatmul.mubr.bf16.gmra.mxu0 %v2294
        %v2551 = vpop.f32.mrf.mxu0
        %v2552 = vadd.f32 %v2511, %v2551
        %v2553 = vpop.f32.mrf.mxu0
        %v2554 = vpop.f32.mrf.mxu0
        %v2555 = vadd.f32 %v2514, %v2554
        %v2556 = vpop.f32.mrf.mxu0
        %2557 = vdwg.mxu0
        %2558 = vmatprep.subr.bf16.mxu0 0
        %2559 = vmatpush1.bf16.msra.mxu0 0
        %2560 = vmatprep.subr.bf16.mxu0 0
        %2561 = vmatpush1.bf16.msra.mxu0 0
        %2562 = vmatprep.subr.bf16.mxu0 0
        %2563 = vmatpush1.bf16.msra.mxu0 0
        %2564 = vmatprep.subr.bf16.mxu0 0
        %2565 = vmatpush1.bf16.msra.mxu0 0
        %2566 = vmatprep.subr.bf16.mxu0 0
        %2567 = vmatpush1.bf16.msra.mxu0 %v1093
        %2568 = vmatprep.subr.bf16.mxu0 0
        %2569 = vmatpush1.bf16.msra.mxu0 %v1092
        %2570 = vmatprep.subr.bf16.mxu0 0
        %2571 = vmatpush1.bf16.msra.mxu0 %v1091
        %2572 = vmatprep.subr.bf16.mxu0 0
        %2573 = vmatpush1.bf16.msra.mxu0 %v1090
        %2574 = vmatprep.subr.bf16.mxu0 0
        %2575 = vmatpush2.bf16.msra.mxu0 0
        %2576 = vmatprep.subr.bf16.mxu0 0
        %2577 = vmatpush2.bf16.msra.mxu0 0
        %2578 = vmatprep.subr.bf16.mxu0 0
        %2579 = vmatpush2.bf16.msra.mxu0 0
        %2580 = vmatprep.subr.bf16.mxu0 0
        %2581 = vmatpush2.bf16.msra.mxu0 0
        %2582 = vmatprep.subr.bf16.mxu0 0
        %2583 = vmatpush2.bf16.msra.mxu0 0
        %2584 = vmatprep.subr.bf16.mxu0 0
        %2585 = vmatpush2.bf16.msra.mxu0 0
        %2586 = vmatprep.subr.bf16.mxu0 0
        %2587 = vmatpush2.bf16.msra.mxu0 0
        %2588 = vmatprep.subr.bf16.mxu0 0
        %2589 = vmatpush2.bf16.msra.mxu0 0
        %2590 = vmatprep.mubr.bf16.mxu0 0
        %2591 = vmatmul.mubr.bf16.gmra.mxu0 %v2310
        %v2592 = vpop.f32.mrf.mxu0
        %v2593 = vadd.f32 %v2552, %v2592
        %v2594 = vpop.f32.mrf.mxu0
        %v2595 = vpop.f32.mrf.mxu0
        %v2596 = vadd.f32 %v2555, %v2595
        %v2597 = vpop.f32.mrf.mxu0
        %2598 = vdwg.mxu0
        %v2599 = vmax.f32 %v2227, %v2593
        %v2600 = vmax.f32 %v2228, %v2596
        %v2601 = vld [vmem:[%s2] sm:$0x1]
        %v2603 = vlaneseq
        %v2604 = vshrl.u32 %v2603, 7
        %v2605 = vsub.s32 0, %v2604
        %v2606 = vrot.slane %v2601, %v2605
        %v2608 = vadd.f32 %v2599, %v2606
        %v2609 = vadd.f32 %v2600, %v2606
        %v2610 = vmax.f32 %v2608, 0.0
        %v2611 = vmax.f32 %v2609, 0.0
        %v2612 = vpack.c.bf16 %v2611, %v2610
        %v2614 = vunpack.c.l.b16 %v2612
        %v2615 = vunpack.c.h.b16 %v2612
        %v2616 = vpack.c.b16 %v2614, %v2614
        %v2617 = vpack.c.b16 %v2615, %v2615
        %vm2620 = vcmask 519168
        %2621 = vst.msk [vmem:[%s312] sm:$0xf] %vm2620, %v2616
        %2622 = vst.msk [vmem:[%s312 + $0x4] sm:$0xf] %vm2620, %v2617
        %s2623 = smul.u32 2, %s14
        %p2624 = scmp.lt.s32.totalorder %s2623, 3
        %s2625 = scalar_select %p2624, %s2623, 3
        %s2626 = smul.addr %s2625, 4
        %s2627 = scalar_lea.vmem %s3, %s2626
        // Predicated region
        $region59: #{model_forward.4} parent=53 // pred_check
          %p2628 = pneg %p100
        $region60: #{model_forward.4} parent=53 // pred_check_branch
          %2630 = sbr.rel (%p2628) target = $region62
        $region61: #{model_forward.4} parent=53 // pred_region
          %s2631 = smul.u32 2, %s14
        $region62: #{model_forward.4} parent=53 // pred_fallthru
          _
      $region54: #{model_forward.4} parent=5 // pred_fallthru
        _
      %p2632 = scmp.le.s32.totalorder 2, %s9
      // Predicated region
      $region63: #{model_forward.4} parent=5 // pred_check
        %p2633 = pneg %p2632
      $region64: #{model_forward.4} parent=5 // pred_check_branch
        %2635 = sbr.rel (%p2633) target = $region66
      $region65: #{model_forward.4} parent=5 // pred_region
        %s2636 = ssub.s32 %s9, 2
        // Predicated region
        $region67: #{model_forward.4} parent=65 // pred_check
          %p2637 = pneg %p106
        $region68: #{model_forward.4} parent=65 // pred_check_branch
          %2639 = sbr.rel (%p2637) target = $region70
        $region69: #{model_forward.4} parent=65 // pred_region
          %s2640 = smul.u32 2, %s15
          %p2641 = scmp.lt.s32.totalorder %s2640, 3
          %s2642 = scalar_select %p2641, %s2640, 3
          %s2643 = smul.addr %s2642, 4
          %s2644 = scalar_lea.vmem %s3, %s2643
        $region70: #{model_forward.4} parent=65 // pred_fallthru
          _
      $region66: #{model_forward.4} parent=5 // pred_fallthru
        _
    $region6: #{model_forward.4} parent=1 // loop_footer
      %s13 = sadd.s32 1, %s9
    $region7: #{model_forward.4} parent=1 // loop_footer_branch
      %8 = sbr.rel target = $region3
    $region8: #{model_forward.4} parent=1 // loop_exit
      _

</llo_original>
